<compile_context>
chip_gen: v7x
topology: tpu7x:2x2x1
jax: 0.10.0
libtpu: 0.0.40
codegen_flags: <defaults>
</compile_context>

<pallas_src>
import functools
import math

import jax
import jax.numpy as jnp
from jax.experimental import pallas as pl
from jax.experimental.pallas import tpu as pltpu

NUM_HEADS = 4


def _layer_norm(x, gamma, beta, eps=1e-5):
    mu = jnp.mean(x, axis=-1, keepdims=True)
    var = jnp.mean((x - mu) ** 2, axis=-1, keepdims=True)
    return (x - mu) * jax.lax.rsqrt(var + eps) * gamma + beta


def _attention_heads(q, k, v, wo_bf16, mask, num_heads):
    """q: (Bt,S,H) f32, k/v: (Bt,T,H) f32, wo: (H,H) bf16, mask: bool broadcastable
    to (Bt,S,T), True = keep.  Returns (Bt*S, H) f32.
    The per-head context is contracted directly into the output projection
    (accumulated), so there is no head concatenation."""
    Bt, S, H = q.shape
    dh = H // num_heads
    M = Bt * S
    qb = q.astype(jnp.bfloat16)
    kb = k.astype(jnp.bfloat16)
    vb = v.astype(jnp.bfloat16)
    out = jnp.zeros((M, H), jnp.float32)
    for h in range(num_heads):              # short static unrolled loop over heads
        sl = slice(h * dh, (h + 1) * dh)
        # (Bt, S, T) scores; 1/sqrt(dh) already folded into the query weights.
        s = jnp.einsum('bqd,bkd->bqk', qb[:, :, sl], kb[:, :, sl],
                       preferred_element_type=jnp.float32)
        s = jnp.where(mask, s, -1e6)        # D2L masked_softmax convention (f32)
        s = s - jnp.max(s, axis=-1, keepdims=True)
        p = jnp.exp(s)
        p = p * pl.reciprocal(jnp.sum(p, axis=-1, keepdims=True), approx=True)
        ctx = jnp.einsum('bqk,bkd->bqd', p.astype(jnp.bfloat16), vb[:, :, sl],
                         preferred_element_type=jnp.float32)        # (Bt, S, dh)
        out = out + jnp.dot(ctx.reshape(M, dh).astype(jnp.bfloat16),
                            wo_bf16[sl, :], preferred_element_type=jnp.float32)
    return out


def _decoder_block_kernel(
    num_heads,
    x_ref, enc_ref, ev_ref,                        # (Bt,S,H) f32, (Bt,T,H) f32, (Bt,1,1) i32
    wqkv1_ref, wo1_ref,                            # (H,3H) bf16, (H,H) bf16
    wq2_ref, wkv2_ref, wo2_ref,                    # (H,H) bf16, (H,2H) bf16, (H,H) bf16
    g1_ref, b1_ref, g2_ref, b2_ref, g3_ref, b3_ref,  # (1,H) f32 each
    wf1_ref, bf1_ref, wf2_ref, bf2_ref,            # (H,F) bf16, (1,F) f32, (F,H) bf16, (1,H) f32
    o_ref,                                         # (Bt,S,H) f32
):
    Bt, S, H = x_ref.shape
    T = enc_ref.shape[1]
    M = Bt * S

    x = x_ref[...]                                  # (Bt, S, H) f32
    xf = x.reshape(M, H)                            # leading-dim merge (no relayout)

    # --- attention1: masked self-attention (key_values = X; state[2][i] was None) ---
    qkv = jnp.dot(xf.astype(jnp.bfloat16), wqkv1_ref[...],
                  preferred_element_type=jnp.float32)               # (M, 3H) fused QKV
    q1 = qkv[:, :H].reshape(Bt, S, H)
    k1 = qkv[:, H:2 * H].reshape(Bt, S, H)
    v1 = qkv[:, 2 * H:].reshape(Bt, S, H)
    # dec_valid_lens = arange(1, S+1)  ->  key j is valid for query i iff j <= i
    q_idx = jax.lax.broadcasted_iota(jnp.int32, (S, S), 0)
    k_idx = jax.lax.broadcasted_iota(jnp.int32, (S, S), 1)
    causal_mask = (k_idx <= q_idx)[None]                            # (1, S, S)
    x2 = _attention_heads(q1, k1, v1, wo1_ref[...], causal_mask, num_heads)
    # TODO(synk): nn.Dropout modeled as identity (p=0 / eval); stochastic training
    # dropout masks are not reproduced.
    y = _layer_norm(x2 + xf, g1_ref[...], b1_ref[...])              # (M, H) f32

    # --- attention2: encoder-decoder cross attention with enc_valid_lens ---
    q2 = jnp.dot(y.astype(jnp.bfloat16), wq2_ref[...],
                 preferred_element_type=jnp.float32).reshape(Bt, S, H)
    encf = enc_ref[...].reshape(Bt * T, H)
    kv2 = jnp.dot(encf.astype(jnp.bfloat16), wkv2_ref[...],
                  preferred_element_type=jnp.float32)               # (Bt*T, 2H) fused KV
    k2 = kv2[:, :H].reshape(Bt, T, H)
    v2 = kv2[:, H:].reshape(Bt, T, H)
    ek_idx = jax.lax.broadcasted_iota(jnp.int32, (Bt, S, T), 2)
    enc_mask = ek_idx < ev_ref[...]                                 # (Bt,1,1) broadcast
    y2 = _attention_heads(q2, k2, v2, wo2_ref[...], enc_mask, num_heads)
    z = _layer_norm(y2 + y, g2_ref[...], b2_ref[...])               # (M, H) f32

    # --- position-wise FFN + AddNorm ---
    h1 = jnp.dot(z.astype(jnp.bfloat16), wf1_ref[...],
                 preferred_element_type=jnp.float32) + bf1_ref[...]
    h1 = jnp.maximum(h1, 0.0)
    ffn = jnp.dot(h1.astype(jnp.bfloat16), wf2_ref[...],
                  preferred_element_type=jnp.float32) + bf2_ref[...]
    out = _layer_norm(ffn + z, g3_ref[...], b3_ref[...])            # (M, H) f32
    # NOTE: for H >= 128 this store is already lane-dense; for H < 128 one could
    # present the output as (Bt, S*H) to avoid masked partial stores.
    o_ref[...] = out.reshape(Bt, S, H)              # leading-dim split (no relayout)


def _prepare_kernel_params(params, num_heads):
    """Fuse QKV weights, fold the 1/sqrt(dh) score scale into the query projections,
    and cast matmul weights to bf16 (biases / LayerNorm params stay f32)."""
    H = params["wq1"].shape[0]
    dh = H // num_heads
    scale = jnp.float32(1.0 / math.sqrt(dh))
    bf16 = lambda a: a.astype(jnp.bfloat16)
    wqkv1 = jnp.concatenate([params["wq1"] * scale, params["wk1"], params["wv1"]], axis=1)
    wkv2 = jnp.concatenate([params["wk2"], params["wv2"]], axis=1)
    return dict(
        wqkv1=bf16(wqkv1), wo1=bf16(params["wo1"]),
        wq2=bf16(params["wq2"] * scale), wkv2=bf16(wkv2), wo2=bf16(params["wo2"]),
        g1=params["g1"], be1=params["be1"],
        g2=params["g2"], be2=params["be2"],
        g3=params["g3"], be3=params["be3"],
        wf1=bf16(params["w_ffn1"]), bf1=params["b_ffn1"],
        wf2=bf16(params["w_ffn2"]), bf2=params["b_ffn2"],
    )


def _pick_batch_tile(B, S, target_rows=128):
    """Largest divisor of B such that Bt*S ~ target_rows (amortize per-step overhead)."""
    bt = max(1, min(B, max(1, target_rows // max(S, 1))))
    while B % bt != 0:
        bt -= 1
    return bt


def decoder_block(x, enc_outputs, enc_valid_lens, params, num_heads=NUM_HEADS):
    """Returns (output, new_state); new_state mirrors the PyTorch state update."""
    B, S, H = x.shape
    T = enc_outputs.shape[1]
    assert H % num_heads == 0

    kp = _prepare_kernel_params(params, num_heads)
    F = kp["wf1"].shape[1]

    Bt = _pick_batch_tile(B, S)
    grid = (B // Bt,)

    ev = enc_valid_lens.astype(jnp.int32).reshape(B, 1, 1)

    def _full(shape):
        return pl.BlockSpec(shape, lambda b, _n=len(shape): (0,) * _n)

    in_specs = [
        pl.BlockSpec((Bt, S, H), lambda b: (b, 0, 0)),   # x
        pl.BlockSpec((Bt, T, H), lambda b: (b, 0, 0)),   # enc_outputs
        pl.BlockSpec((Bt, 1, 1), lambda b: (b, 0, 0)),   # enc_valid_lens
        _full((H, 3 * H)),                               # wqkv1 (fused, scale folded)
        _full((H, H)),                                   # wo1
        _full((H, H)),                                   # wq2 (scale folded)
        _full((H, 2 * H)),                               # wkv2 (fused)
        _full((H, H)),                                   # wo2
        _full((1, H)), _full((1, H)),                    # g1, be1
        _full((1, H)), _full((1, H)),                    # g2, be2
        _full((1, H)), _full((1, H)),                    # g3, be3
        _full((H, F)),                                   # w_ffn1
        _full((1, F)),                                   # b_ffn1
        _full((F, H)),                                   # w_ffn2
        _full((1, H)),                                   # b_ffn2
    ]
    out_specs = pl.BlockSpec((Bt, S, H), lambda b: (b, 0, 0))

    out = pl.pallas_call(
        functools.partial(_decoder_block_kernel, num_heads),
        out_shape=jax.ShapeDtypeStruct((B, S, H), jnp.float32),
        grid=grid,
        in_specs=in_specs,
        out_specs=out_specs,
        compiler_params=pltpu.CompilerParams(
            # batch tiles are fully independent -> shard across TensorCores on v7x
            dimension_semantics=("parallel",),
            vmem_limit_bytes=32 * 1024 * 1024,
        ),
    )(x, enc_outputs, ev,
      kp["wqkv1"], kp["wo1"],
      kp["wq2"], kp["wkv2"], kp["wo2"],
      kp["g1"], kp["be1"], kp["g2"], kp["be2"], kp["g3"], kp["be3"],
      kp["wf1"], kp["bf1"], kp["wf2"], kp["bf2"])

    # state update done in plain JAX (list mutation has no kernel equivalent):
    # state[2][i] was None -> key_values = X
    new_state = (enc_outputs, enc_valid_lens, [x])
    return out, new_state


def make_params(key, hidden, ffn_hidden):
    ks = jax.random.split(key, 12)
    n = lambda k, s: (0.1 * jax.random.normal(k, s)).astype(jnp.float32)
    return {
        # attention1 projections (W_q/W_k/W_v/W_o, bias=False as in D2L), stored (in,out)
        "wq1": n(ks[0], (hidden, hidden)), "wk1": n(ks[1], (hidden, hidden)),
        "wv1": n(ks[2], (hidden, hidden)), "wo1": n(ks[3], (hidden, hidden)),
        # attention2 projections
        "wq2": n(ks[4], (hidden, hidden)), "wk2": n(ks[5], (hidden, hidden)),
        "wv2": n(ks[6], (hidden, hidden)), "wo2": n(ks[7], (hidden, hidden)),
        # LayerNorm affine params (PyTorch init: gamma=1, beta=0)
        "g1": jnp.ones((1, hidden), jnp.float32), "be1": jnp.zeros((1, hidden), jnp.float32),
        "g2": jnp.ones((1, hidden), jnp.float32), "be2": jnp.zeros((1, hidden), jnp.float32),
        "g3": jnp.ones((1, hidden), jnp.float32), "be3": jnp.zeros((1, hidden), jnp.float32),
        # PositionWiseFFN
        "w_ffn1": n(ks[8], (hidden, ffn_hidden)), "b_ffn1": n(ks[9], (1, ffn_hidden)),
        "w_ffn2": n(ks[10], (ffn_hidden, hidden)), "b_ffn2": n(ks[11], (1, hidden)),
    }


if __name__ == "__main__":
    B, S, T, H, F = 2, 8, 8, 32, 64   # batch, dec seq, enc seq, num_hiddens, ffn hiddens
    key = jax.random.PRNGKey(0)
    kx, kenc, kp = jax.random.split(key, 3)

    x = jax.random.normal(kx, (B, S, H), dtype=jnp.float32)
    enc_outputs = jax.random.normal(kenc, (B, T, H), dtype=jnp.float32)
    enc_valid_lens = jnp.array([8, 5], dtype=jnp.int32)
    params = make_params(kp, H, F)

    out, state = decoder_block(x, enc_outputs, enc_valid_lens, params)
    out = jax.block_until_ready(out)
    assert out.shape == (B, S, H) and bool(jnp.all(jnp.isfinite(out)))
    print("KERNEL_OK")
</pallas_src>

<mosaic_0001>
module attributes {stable_mosaic.version = 11 : i64} {
  func.func @_decoder_block_kernel(%arg0: i32, %arg1: memref<2x8x32xf32, #tpu.memory_space<vmem>>, %arg2: memref<2x8x32xf32, #tpu.memory_space<vmem>>, %arg3: memref<2x1x1xi32, #tpu.memory_space<vmem>>, %arg4: memref<32x96xbf16, #tpu.memory_space<vmem>>, %arg5: memref<32x32xbf16, #tpu.memory_space<vmem>>, %arg6: memref<32x32xbf16, #tpu.memory_space<vmem>>, %arg7: memref<32x64xbf16, #tpu.memory_space<vmem>>, %arg8: memref<32x32xbf16, #tpu.memory_space<vmem>>, %arg9: memref<1x32xf32, #tpu.memory_space<vmem>>, %arg10: memref<1x32xf32, #tpu.memory_space<vmem>>, %arg11: memref<1x32xf32, #tpu.memory_space<vmem>>, %arg12: memref<1x32xf32, #tpu.memory_space<vmem>>, %arg13: memref<1x32xf32, #tpu.memory_space<vmem>>, %arg14: memref<1x32xf32, #tpu.memory_space<vmem>>, %arg15: memref<32x64xbf16, #tpu.memory_space<vmem>>, %arg16: memref<1x64xf32, #tpu.memory_space<vmem>>, %arg17: memref<64x32xbf16, #tpu.memory_space<vmem>>, %arg18: memref<1x32xf32, #tpu.memory_space<vmem>>, %arg19: memref<2x8x32xf32, #tpu.memory_space<vmem>>) attributes {dimension_semantics = [#tpu.dimension_semantics<parallel>], iteration_bounds = array<i64: 1>, scalar_prefetch = 0 : i64, scratch_operands = 0 : i64, tpu.core_type = #tpu.core_type<tc>, window_params = [{transform_indices = @transform_0, window_bounds = array<i64: 2, 8, 32>}, {transform_indices = @transform_1, window_bounds = array<i64: 2, 8, 32>}, {transform_indices = @transform_2, window_bounds = array<i64: 2, 1, 1>}, {pipeline_mode = #tpu.pipeline_mode<synchronous>, transform_indices = @transform_3, window_bounds = array<i64: 32, 96>}, {pipeline_mode = #tpu.pipeline_mode<synchronous>, transform_indices = @transform_4, window_bounds = array<i64: 32, 32>}, {pipeline_mode = #tpu.pipeline_mode<synchronous>, transform_indices = @transform_5, window_bounds = array<i64: 32, 32>}, {pipeline_mode = #tpu.pipeline_mode<synchronous>, transform_indices = @transform_6, window_bounds = array<i64: 32, 64>}, {pipeline_mode = #tpu.pipeline_mode<synchronous>, transform_indices = @transform_7, window_bounds = array<i64: 32, 32>}, {pipeline_mode = #tpu.pipeline_mode<synchronous>, transform_indices = @transform_8, window_bounds = array<i64: 1, 32>}, {pipeline_mode = #tpu.pipeline_mode<synchronous>, transform_indices = @transform_9, window_bounds = array<i64: 1, 32>}, {pipeline_mode = #tpu.pipeline_mode<synchronous>, transform_indices = @transform_10, window_bounds = array<i64: 1, 32>}, {pipeline_mode = #tpu.pipeline_mode<synchronous>, transform_indices = @transform_11, window_bounds = array<i64: 1, 32>}, {pipeline_mode = #tpu.pipeline_mode<synchronous>, transform_indices = @transform_12, window_bounds = array<i64: 1, 32>}, {pipeline_mode = #tpu.pipeline_mode<synchronous>, transform_indices = @transform_13, window_bounds = array<i64: 1, 32>}, {pipeline_mode = #tpu.pipeline_mode<synchronous>, transform_indices = @transform_14, window_bounds = array<i64: 32, 64>}, {pipeline_mode = #tpu.pipeline_mode<synchronous>, transform_indices = @transform_15, window_bounds = array<i64: 1, 64>}, {pipeline_mode = #tpu.pipeline_mode<synchronous>, transform_indices = @transform_16, window_bounds = array<i64: 64, 32>}, {pipeline_mode = #tpu.pipeline_mode<synchronous>, transform_indices = @transform_17, window_bounds = array<i64: 1, 32>}, {transform_indices = @transform_18, window_bounds = array<i64: 2, 8, 32>}]} {
    %c0 = arith.constant 0 : index
    %c0_0 = arith.constant 0 : index
    %c0_1 = arith.constant 0 : index
    %0 = vector.load %arg1[%c0, %c0_0, %c0_1] : memref<2x8x32xf32, #tpu.memory_space<vmem>>, vector<2x8x32xf32>
    %1 = vector.shape_cast %0 : vector<2x8x32xf32> to vector<16x32xf32>
    %2 = arith.truncf %1 : vector<16x32xf32> to vector<16x32xbf16>
    %c0_2 = arith.constant 0 : index
    %c0_3 = arith.constant 0 : index
    %3 = vector.load %arg4[%c0_2, %c0_3] : memref<32x96xbf16, #tpu.memory_space<vmem>>, vector<32x96xbf16>
    %cst = arith.constant dense<0.000000e+00> : vector<16x96xf32>
    %4 = tpu.matmul %2, %3, %cst {dimension_numbers = #tpu.dot_dimension_numbers<[1], [0], [0], [1], [0, 0, 1, 1], [], []>} : vector<16x32xbf16>, vector<32x96xbf16>, vector<16x96xf32> -> vector<16x96xf32>
    %5 = vector.extract_strided_slice %4 {offsets = [0, 0], sizes = [16, 32], strides = [1, 1]} : vector<16x96xf32> to vector<16x32xf32>
    %6 = vector.shape_cast %5 : vector<16x32xf32> to vector<2x8x32xf32>
    %7 = vector.extract_strided_slice %4 {offsets = [0, 32], sizes = [16, 32], strides = [1, 1]} : vector<16x96xf32> to vector<16x32xf32>
    %8 = vector.shape_cast %7 : vector<16x32xf32> to vector<2x8x32xf32>
    %9 = vector.extract_strided_slice %4 {offsets = [0, 64], sizes = [16, 32], strides = [1, 1]} : vector<16x96xf32> to vector<16x32xf32>
    %10 = vector.shape_cast %9 : vector<16x32xf32> to vector<2x8x32xf32>
    %11 = tpu.iota {dimensions = array<i32: 0>} : vector<8x8xi32>
    %12 = tpu.iota {dimensions = array<i32: 1>} : vector<8x8xi32>
    %13 = arith.cmpi sle, %12, %11 : vector<8x8xi32>
    %14 = vector.shape_cast %13 : vector<8x8xi1> to vector<1x8x8xi1>
    %c0_4 = arith.constant 0 : index
    %c0_5 = arith.constant 0 : index
    %15 = vector.load %arg5[%c0_4, %c0_5] : memref<32x32xbf16, #tpu.memory_space<vmem>>, vector<32x32xbf16>
    %16 = arith.truncf %6 : vector<2x8x32xf32> to vector<2x8x32xbf16>
    %17 = arith.truncf %8 : vector<2x8x32xf32> to vector<2x8x32xbf16>
    %18 = arith.truncf %10 : vector<2x8x32xf32> to vector<2x8x32xbf16>
    %cst_6 = arith.constant 0.000000e+00 : f32
    %19 = vector.broadcast %cst_6 : f32 to vector<16x32xf32>
    %20 = vector.extract_strided_slice %16 {offsets = [0, 0, 0], sizes = [2, 8, 8], strides = [1, 1, 1]} : vector<2x8x32xbf16> to vector<2x8x8xbf16>
    %21 = vector.extract_strided_slice %17 {offsets = [0, 0, 0], sizes = [2, 8, 8], strides = [1, 1, 1]} : vector<2x8x32xbf16> to vector<2x8x8xbf16>
    "tpu.trace_start"() <{level = 10 : i32, message = "bqd,bkd->bqk"}> : () -> ()
    %cst_7 = arith.constant dense<0.000000e+00> : vector<2x8x8xf32>
    %22 = tpu.matmul %20, %21, %cst_7 {dimension_numbers = #tpu.dot_dimension_numbers<[2], [2], [1], [1], [0, 0, 0, 1, 1, 1], [0], [0]>} : vector<2x8x8xbf16>, vector<2x8x8xbf16>, vector<2x8x8xf32> -> vector<2x8x8xf32>
    %cst_8 = arith.constant -1.000000e+06 : f32
    "tpu.trace_stop"() : () -> ()
    %23 = vector.shape_cast %14 : vector<1x8x8xi1> to vector<1x8x8xi1>
    %24 = vector.broadcast %23 : vector<1x8x8xi1> to vector<2x8x8xi1>
    %25 = vector.broadcast %cst_8 : f32 to vector<2x8x8xf32>
    %26 = arith.select %24, %22, %25 : vector<2x8x8xi1>, vector<2x8x8xf32>
    %cst_9 = arith.constant dense<0xFF800000> : vector<2x8xf32>
    %27 = vector.multi_reduction <maximumf>, %26, %cst_9 [2] : vector<2x8x8xf32> to vector<2x8xf32>
    %28 = vector.shape_cast %27 : vector<2x8xf32> to vector<2x8x1xf32>
    %29 = vector.broadcast %28 : vector<2x8x1xf32> to vector<2x8x8xf32>
    %30 = arith.subf %26, %29 : vector<2x8x8xf32>
    %31 = math.exp %30 : vector<2x8x8xf32>
    %cst_10 = arith.constant dense<0.000000e+00> : vector<2x8xf32>
    %32 = vector.multi_reduction <add>, %31, %cst_10 [2] : vector<2x8x8xf32> to vector<2x8xf32>
    %33 = vector.shape_cast %32 : vector<2x8xf32> to vector<2x8x1xf32>
    %34 = tpu.reciprocal %33 {approx = true} : vector<2x8x1xf32> -> vector<2x8x1xf32>
    %35 = vector.broadcast %34 : vector<2x8x1xf32> to vector<2x8x8xf32>
    %36 = arith.mulf %31, %35 : vector<2x8x8xf32>
    %37 = arith.truncf %36 : vector<2x8x8xf32> to vector<2x8x8xbf16>
    %38 = vector.extract_strided_slice %18 {offsets = [0, 0, 0], sizes = [2, 8, 8], strides = [1, 1, 1]} : vector<2x8x32xbf16> to vector<2x8x8xbf16>
    "tpu.trace_start"() <{level = 10 : i32, message = "bqk,bkd->bqd"}> : () -> ()
    %cst_11 = arith.constant dense<0.000000e+00> : vector<2x8x8xf32>
    %39 = tpu.matmul %37, %38, %cst_11 {dimension_numbers = #tpu.dot_dimension_numbers<[2], [1], [1], [2], [0, 0, 0, 1, 1, 2], [0], [0]>} : vector<2x8x8xbf16>, vector<2x8x8xbf16>, vector<2x8x8xf32> -> vector<2x8x8xf32>
    "tpu.trace_stop"() : () -> ()
    %40 = vector.shape_cast %39 : vector<2x8x8xf32> to vector<16x8xf32>
    %41 = arith.truncf %40 : vector<16x8xf32> to vector<16x8xbf16>
    %42 = vector.extract_strided_slice %15 {offsets = [0, 0], sizes = [8, 32], strides = [1, 1]} : vector<32x32xbf16> to vector<8x32xbf16>
    %cst_12 = arith.constant dense<0.000000e+00> : vector<16x32xf32>
    %43 = tpu.matmul %41, %42, %cst_12 {dimension_numbers = #tpu.dot_dimension_numbers<[1], [0], [0], [1], [0, 0, 1, 1], [], []>} : vector<16x8xbf16>, vector<8x32xbf16>, vector<16x32xf32> -> vector<16x32xf32>
    %44 = arith.addf %19, %43 : vector<16x32xf32>
    %45 = vector.extract_strided_slice %16 {offsets = [0, 0, 8], sizes = [2, 8, 8], strides = [1, 1, 1]} : vector<2x8x32xbf16> to vector<2x8x8xbf16>
    %46 = vector.extract_strided_slice %17 {offsets = [0, 0, 8], sizes = [2, 8, 8], strides = [1, 1, 1]} : vector<2x8x32xbf16> to vector<2x8x8xbf16>
    "tpu.trace_start"() <{level = 10 : i32, message = "bqd,bkd->bqk"}> : () -> ()
    %cst_13 = arith.constant dense<0.000000e+00> : vector<2x8x8xf32>
    %47 = tpu.matmul %45, %46, %cst_13 {dimension_numbers = #tpu.dot_dimension_numbers<[2], [2], [1], [1], [0, 0, 0, 1, 1, 1], [0], [0]>} : vector<2x8x8xbf16>, vector<2x8x8xbf16>, vector<2x8x8xf32> -> vector<2x8x8xf32>
    %cst_14 = arith.constant -1.000000e+06 : f32
    "tpu.trace_stop"() : () -> ()
    %48 = vector.shape_cast %14 : vector<1x8x8xi1> to vector<1x8x8xi1>
    %49 = vector.broadcast %48 : vector<1x8x8xi1> to vector<2x8x8xi1>
    %50 = vector.broadcast %cst_14 : f32 to vector<2x8x8xf32>
    %51 = arith.select %49, %47, %50 : vector<2x8x8xi1>, vector<2x8x8xf32>
    %cst_15 = arith.constant dense<0xFF800000> : vector<2x8xf32>
    %52 = vector.multi_reduction <maximumf>, %51, %cst_15 [2] : vector<2x8x8xf32> to vector<2x8xf32>
    %53 = vector.shape_cast %52 : vector<2x8xf32> to vector<2x8x1xf32>
    %54 = vector.broadcast %53 : vector<2x8x1xf32> to vector<2x8x8xf32>
    %55 = arith.subf %51, %54 : vector<2x8x8xf32>
    %56 = math.exp %55 : vector<2x8x8xf32>
    %cst_16 = arith.constant dense<0.000000e+00> : vector<2x8xf32>
    %57 = vector.multi_reduction <add>, %56, %cst_16 [2] : vector<2x8x8xf32> to vector<2x8xf32>
    %58 = vector.shape_cast %57 : vector<2x8xf32> to vector<2x8x1xf32>
    %59 = tpu.reciprocal %58 {approx = true} : vector<2x8x1xf32> -> vector<2x8x1xf32>
    %60 = vector.broadcast %59 : vector<2x8x1xf32> to vector<2x8x8xf32>
    %61 = arith.mulf %56, %60 : vector<2x8x8xf32>
    %62 = arith.truncf %61 : vector<2x8x8xf32> to vector<2x8x8xbf16>
    %63 = vector.extract_strided_slice %18 {offsets = [0, 0, 8], sizes = [2, 8, 8], strides = [1, 1, 1]} : vector<2x8x32xbf16> to vector<2x8x8xbf16>
    "tpu.trace_start"() <{level = 10 : i32, message = "bqk,bkd->bqd"}> : () -> ()
    %cst_17 = arith.constant dense<0.000000e+00> : vector<2x8x8xf32>
    %64 = tpu.matmul %62, %63, %cst_17 {dimension_numbers = #tpu.dot_dimension_numbers<[2], [1], [1], [2], [0, 0, 0, 1, 1, 2], [0], [0]>} : vector<2x8x8xbf16>, vector<2x8x8xbf16>, vector<2x8x8xf32> -> vector<2x8x8xf32>
    "tpu.trace_stop"() : () -> ()
    %65 = vector.shape_cast %64 : vector<2x8x8xf32> to vector<16x8xf32>
    %66 = arith.truncf %65 : vector<16x8xf32> to vector<16x8xbf16>
    %67 = vector.extract_strided_slice %15 {offsets = [8, 0], sizes = [8, 32], strides = [1, 1]} : vector<32x32xbf16> to vector<8x32xbf16>
    %cst_18 = arith.constant dense<0.000000e+00> : vector<16x32xf32>
    %68 = tpu.matmul %66, %67, %cst_18 {dimension_numbers = #tpu.dot_dimension_numbers<[1], [0], [0], [1], [0, 0, 1, 1], [], []>} : vector<16x8xbf16>, vector<8x32xbf16>, vector<16x32xf32> -> vector<16x32xf32>
    %69 = arith.addf %44, %68 : vector<16x32xf32>
    %70 = vector.extract_strided_slice %16 {offsets = [0, 0, 16], sizes = [2, 8, 8], strides = [1, 1, 1]} : vector<2x8x32xbf16> to vector<2x8x8xbf16>
    %71 = vector.extract_strided_slice %17 {offsets = [0, 0, 16], sizes = [2, 8, 8], strides = [1, 1, 1]} : vector<2x8x32xbf16> to vector<2x8x8xbf16>
    "tpu.trace_start"() <{level = 10 : i32, message = "bqd,bkd->bqk"}> : () -> ()
    %cst_19 = arith.constant dense<0.000000e+00> : vector<2x8x8xf32>
    %72 = tpu.matmul %70, %71, %cst_19 {dimension_numbers = #tpu.dot_dimension_numbers<[2], [2], [1], [1], [0, 0, 0, 1, 1, 1], [0], [0]>} : vector<2x8x8xbf16>, vector<2x8x8xbf16>, vector<2x8x8xf32> -> vector<2x8x8xf32>
    %cst_20 = arith.constant -1.000000e+06 : f32
    "tpu.trace_stop"() : () -> ()
    %73 = vector.shape_cast %14 : vector<1x8x8xi1> to vector<1x8x8xi1>
    %74 = vector.broadcast %73 : vector<1x8x8xi1> to vector<2x8x8xi1>
    %75 = vector.broadcast %cst_20 : f32 to vector<2x8x8xf32>
    %76 = arith.select %74, %72, %75 : vector<2x8x8xi1>, vector<2x8x8xf32>
    %cst_21 = arith.constant dense<0xFF800000> : vector<2x8xf32>
    %77 = vector.multi_reduction <maximumf>, %76, %cst_21 [2] : vector<2x8x8xf32> to vector<2x8xf32>
    %78 = vector.shape_cast %77 : vector<2x8xf32> to vector<2x8x1xf32>
    %79 = vector.broadcast %78 : vector<2x8x1xf32> to vector<2x8x8xf32>
    %80 = arith.subf %76, %79 : vector<2x8x8xf32>
    %81 = math.exp %80 : vector<2x8x8xf32>
    %cst_22 = arith.constant dense<0.000000e+00> : vector<2x8xf32>
    %82 = vector.multi_reduction <add>, %81, %cst_22 [2] : vector<2x8x8xf32> to vector<2x8xf32>
    %83 = vector.shape_cast %82 : vector<2x8xf32> to vector<2x8x1xf32>
    %84 = tpu.reciprocal %83 {approx = true} : vector<2x8x1xf32> -> vector<2x8x1xf32>
    %85 = vector.broadcast %84 : vector<2x8x1xf32> to vector<2x8x8xf32>
    %86 = arith.mulf %81, %85 : vector<2x8x8xf32>
    %87 = arith.truncf %86 : vector<2x8x8xf32> to vector<2x8x8xbf16>
    %88 = vector.extract_strided_slice %18 {offsets = [0, 0, 16], sizes = [2, 8, 8], strides = [1, 1, 1]} : vector<2x8x32xbf16> to vector<2x8x8xbf16>
    "tpu.trace_start"() <{level = 10 : i32, message = "bqk,bkd->bqd"}> : () -> ()
    %cst_23 = arith.constant dense<0.000000e+00> : vector<2x8x8xf32>
    %89 = tpu.matmul %87, %88, %cst_23 {dimension_numbers = #tpu.dot_dimension_numbers<[2], [1], [1], [2], [0, 0, 0, 1, 1, 2], [0], [0]>} : vector<2x8x8xbf16>, vector<2x8x8xbf16>, vector<2x8x8xf32> -> vector<2x8x8xf32>
    "tpu.trace_stop"() : () -> ()
    %90 = vector.shape_cast %89 : vector<2x8x8xf32> to vector<16x8xf32>
    %91 = arith.truncf %90 : vector<16x8xf32> to vector<16x8xbf16>
    %92 = vector.extract_strided_slice %15 {offsets = [16, 0], sizes = [8, 32], strides = [1, 1]} : vector<32x32xbf16> to vector<8x32xbf16>
    %cst_24 = arith.constant dense<0.000000e+00> : vector<16x32xf32>
    %93 = tpu.matmul %91, %92, %cst_24 {dimension_numbers = #tpu.dot_dimension_numbers<[1], [0], [0], [1], [0, 0, 1, 1], [], []>} : vector<16x8xbf16>, vector<8x32xbf16>, vector<16x32xf32> -> vector<16x32xf32>
    %94 = arith.addf %69, %93 : vector<16x32xf32>
    %95 = vector.extract_strided_slice %16 {offsets = [0, 0, 24], sizes = [2, 8, 8], strides = [1, 1, 1]} : vector<2x8x32xbf16> to vector<2x8x8xbf16>
    %96 = vector.extract_strided_slice %17 {offsets = [0, 0, 24], sizes = [2, 8, 8], strides = [1, 1, 1]} : vector<2x8x32xbf16> to vector<2x8x8xbf16>
    "tpu.trace_start"() <{level = 10 : i32, message = "bqd,bkd->bqk"}> : () -> ()
    %cst_25 = arith.constant dense<0.000000e+00> : vector<2x8x8xf32>
    %97 = tpu.matmul %95, %96, %cst_25 {dimension_numbers = #tpu.dot_dimension_numbers<[2], [2], [1], [1], [0, 0, 0, 1, 1, 1], [0], [0]>} : vector<2x8x8xbf16>, vector<2x8x8xbf16>, vector<2x8x8xf32> -> vector<2x8x8xf32>
    %cst_26 = arith.constant -1.000000e+06 : f32
    "tpu.trace_stop"() : () -> ()
    %98 = vector.shape_cast %14 : vector<1x8x8xi1> to vector<1x8x8xi1>
    %99 = vector.broadcast %98 : vector<1x8x8xi1> to vector<2x8x8xi1>
    %100 = vector.broadcast %cst_26 : f32 to vector<2x8x8xf32>
    %101 = arith.select %99, %97, %100 : vector<2x8x8xi1>, vector<2x8x8xf32>
    %cst_27 = arith.constant dense<0xFF800000> : vector<2x8xf32>
    %102 = vector.multi_reduction <maximumf>, %101, %cst_27 [2] : vector<2x8x8xf32> to vector<2x8xf32>
    %103 = vector.shape_cast %102 : vector<2x8xf32> to vector<2x8x1xf32>
    %104 = vector.broadcast %103 : vector<2x8x1xf32> to vector<2x8x8xf32>
    %105 = arith.subf %101, %104 : vector<2x8x8xf32>
    %106 = math.exp %105 : vector<2x8x8xf32>
    %cst_28 = arith.constant dense<0.000000e+00> : vector<2x8xf32>
    %107 = vector.multi_reduction <add>, %106, %cst_28 [2] : vector<2x8x8xf32> to vector<2x8xf32>
    %108 = vector.shape_cast %107 : vector<2x8xf32> to vector<2x8x1xf32>
    %109 = tpu.reciprocal %108 {approx = true} : vector<2x8x1xf32> -> vector<2x8x1xf32>
    %110 = vector.broadcast %109 : vector<2x8x1xf32> to vector<2x8x8xf32>
    %111 = arith.mulf %106, %110 : vector<2x8x8xf32>
    %112 = arith.truncf %111 : vector<2x8x8xf32> to vector<2x8x8xbf16>
    %113 = vector.extract_strided_slice %18 {offsets = [0, 0, 24], sizes = [2, 8, 8], strides = [1, 1, 1]} : vector<2x8x32xbf16> to vector<2x8x8xbf16>
    "tpu.trace_start"() <{level = 10 : i32, message = "bqk,bkd->bqd"}> : () -> ()
    %cst_29 = arith.constant dense<0.000000e+00> : vector<2x8x8xf32>
    %114 = tpu.matmul %112, %113, %cst_29 {dimension_numbers = #tpu.dot_dimension_numbers<[2], [1], [1], [2], [0, 0, 0, 1, 1, 2], [0], [0]>} : vector<2x8x8xbf16>, vector<2x8x8xbf16>, vector<2x8x8xf32> -> vector<2x8x8xf32>
    "tpu.trace_stop"() : () -> ()
    %115 = vector.shape_cast %114 : vector<2x8x8xf32> to vector<16x8xf32>
    %116 = arith.truncf %115 : vector<16x8xf32> to vector<16x8xbf16>
    %117 = vector.extract_strided_slice %15 {offsets = [24, 0], sizes = [8, 32], strides = [1, 1]} : vector<32x32xbf16> to vector<8x32xbf16>
    %cst_30 = arith.constant dense<0.000000e+00> : vector<16x32xf32>
    %118 = tpu.matmul %116, %117, %cst_30 {dimension_numbers = #tpu.dot_dimension_numbers<[1], [0], [0], [1], [0, 0, 1, 1], [], []>} : vector<16x8xbf16>, vector<8x32xbf16>, vector<16x32xf32> -> vector<16x32xf32>
    %119 = arith.addf %94, %118 : vector<16x32xf32>
    %120 = arith.addf %119, %1 : vector<16x32xf32>
    %c0_31 = arith.constant 0 : index
    %c0_32 = arith.constant 0 : index
    %121 = vector.load %arg9[%c0_31, %c0_32] : memref<1x32xf32, #tpu.memory_space<vmem>>, vector<1x32xf32>
    %c0_33 = arith.constant 0 : index
    %c0_34 = arith.constant 0 : index
    %122 = vector.load %arg10[%c0_33, %c0_34] : memref<1x32xf32, #tpu.memory_space<vmem>>, vector<1x32xf32>
    %cst_35 = arith.constant dense<0.000000e+00> : vector<16xf32>
    %123 = vector.multi_reduction <add>, %120, %cst_35 [1] : vector<16x32xf32> to vector<16xf32>
    %124 = vector.shape_cast %123 : vector<16xf32> to vector<16x1xf32>
    %cst_36 = arith.constant 3.200000e+01 : f32
    %125 = vector.broadcast %cst_36 : f32 to vector<16x1xf32>
    %126 = arith.divf %124, %125 : vector<16x1xf32>
    %127 = vector.broadcast %126 : vector<16x1xf32> to vector<16x32xf32>
    %128 = arith.subf %120, %127 : vector<16x32xf32>
    %129 = arith.mulf %128, %128 : vector<16x32xf32>
    %cst_37 = arith.constant dense<0.000000e+00> : vector<16xf32>
    %130 = vector.multi_reduction <add>, %129, %cst_37 [1] : vector<16x32xf32> to vector<16xf32>
    %131 = vector.shape_cast %130 : vector<16xf32> to vector<16x1xf32>
    %cst_38 = arith.constant 3.200000e+01 : f32
    %132 = vector.broadcast %cst_38 : f32 to vector<16x1xf32>
    %133 = arith.divf %131, %132 : vector<16x1xf32>
    %134 = vector.broadcast %126 : vector<16x1xf32> to vector<16x32xf32>
    %135 = arith.subf %120, %134 : vector<16x32xf32>
    %cst_39 = arith.constant 9.99999974E-6 : f32
    %136 = vector.broadcast %cst_39 : f32 to vector<16x1xf32>
    %137 = arith.addf %133, %136 : vector<16x1xf32>
    %138 = math.rsqrt %137 : vector<16x1xf32>
    %139 = vector.broadcast %138 : vector<16x1xf32> to vector<16x32xf32>
    %140 = arith.mulf %135, %139 : vector<16x32xf32>
    %141 = vector.broadcast %121 : vector<1x32xf32> to vector<16x32xf32>
    %142 = arith.mulf %140, %141 : vector<16x32xf32>
    %143 = vector.broadcast %122 : vector<1x32xf32> to vector<16x32xf32>
    %144 = arith.addf %142, %143 : vector<16x32xf32>
    %145 = arith.truncf %144 : vector<16x32xf32> to vector<16x32xbf16>
    %c0_40 = arith.constant 0 : index
    %c0_41 = arith.constant 0 : index
    %146 = vector.load %arg6[%c0_40, %c0_41] : memref<32x32xbf16, #tpu.memory_space<vmem>>, vector<32x32xbf16>
    %cst_42 = arith.constant dense<0.000000e+00> : vector<16x32xf32>
    %147 = tpu.matmul %145, %146, %cst_42 {dimension_numbers = #tpu.dot_dimension_numbers<[1], [0], [0], [1], [0, 0, 1, 1], [], []>} : vector<16x32xbf16>, vector<32x32xbf16>, vector<16x32xf32> -> vector<16x32xf32>
    %148 = vector.shape_cast %147 : vector<16x32xf32> to vector<2x8x32xf32>
    %c0_43 = arith.constant 0 : index
    %c0_44 = arith.constant 0 : index
    %c0_45 = arith.constant 0 : index
    %149 = vector.load %arg2[%c0_43, %c0_44, %c0_45] : memref<2x8x32xf32, #tpu.memory_space<vmem>>, vector<2x8x32xf32>
    %150 = vector.shape_cast %149 : vector<2x8x32xf32> to vector<16x32xf32>
    %151 = arith.truncf %150 : vector<16x32xf32> to vector<16x32xbf16>
    %c0_46 = arith.constant 0 : index
    %c0_47 = arith.constant 0 : index
    %152 = vector.load %arg7[%c0_46, %c0_47] : memref<32x64xbf16, #tpu.memory_space<vmem>>, vector<32x64xbf16>
    %cst_48 = arith.constant dense<0.000000e+00> : vector<16x64xf32>
    %153 = tpu.matmul %151, %152, %cst_48 {dimension_numbers = #tpu.dot_dimension_numbers<[1], [0], [0], [1], [0, 0, 1, 1], [], []>} : vector<16x32xbf16>, vector<32x64xbf16>, vector<16x64xf32> -> vector<16x64xf32>
    %154 = vector.extract_strided_slice %153 {offsets = [0, 0], sizes = [16, 32], strides = [1, 1]} : vector<16x64xf32> to vector<16x32xf32>
    %155 = vector.shape_cast %154 : vector<16x32xf32> to vector<2x8x32xf32>
    %156 = vector.extract_strided_slice %153 {offsets = [0, 32], sizes = [16, 32], strides = [1, 1]} : vector<16x64xf32> to vector<16x32xf32>
    %157 = vector.shape_cast %156 : vector<16x32xf32> to vector<2x8x32xf32>
    %158 = tpu.iota {dimensions = array<i32: 2>} : vector<2x8x8xi32>
    %c0_49 = arith.constant 0 : index
    %c0_50 = arith.constant 0 : index
    %c0_51 = arith.constant 0 : index
    %159 = vector.load %arg3[%c0_49, %c0_50, %c0_51] : memref<2x1x1xi32, #tpu.memory_space<vmem>>, vector<2x1x1xi32>
    %160 = vector.broadcast %159 : vector<2x1x1xi32> to vector<2x8x8xi32>
    %161 = arith.cmpi slt, %158, %160 : vector<2x8x8xi32>
    %c0_52 = arith.constant 0 : index
    %c0_53 = arith.constant 0 : index
    %162 = vector.load %arg8[%c0_52, %c0_53] : memref<32x32xbf16, #tpu.memory_space<vmem>>, vector<32x32xbf16>
    %163 = arith.truncf %148 : vector<2x8x32xf32> to vector<2x8x32xbf16>
    %164 = arith.truncf %155 : vector<2x8x32xf32> to vector<2x8x32xbf16>
    %165 = arith.truncf %157 : vector<2x8x32xf32> to vector<2x8x32xbf16>
    %cst_54 = arith.constant 0.000000e+00 : f32
    %166 = vector.broadcast %cst_54 : f32 to vector<16x32xf32>
    %167 = vector.extract_strided_slice %163 {offsets = [0, 0, 0], sizes = [2, 8, 8], strides = [1, 1, 1]} : vector<2x8x32xbf16> to vector<2x8x8xbf16>
    %168 = vector.extract_strided_slice %164 {offsets = [0, 0, 0], sizes = [2, 8, 8], strides = [1, 1, 1]} : vector<2x8x32xbf16> to vector<2x8x8xbf16>
    "tpu.trace_start"() <{level = 10 : i32, message = "bqd,bkd->bqk"}> : () -> ()
    %cst_55 = arith.constant dense<0.000000e+00> : vector<2x8x8xf32>
    %169 = tpu.matmul %167, %168, %cst_55 {dimension_numbers = #tpu.dot_dimension_numbers<[2], [2], [1], [1], [0, 0, 0, 1, 1, 1], [0], [0]>} : vector<2x8x8xbf16>, vector<2x8x8xbf16>, vector<2x8x8xf32> -> vector<2x8x8xf32>
    %cst_56 = arith.constant -1.000000e+06 : f32
    "tpu.trace_stop"() : () -> ()
    %170 = vector.broadcast %cst_56 : f32 to vector<2x8x8xf32>
    %171 = arith.select %161, %169, %170 : vector<2x8x8xi1>, vector<2x8x8xf32>
    %cst_57 = arith.constant dense<0xFF800000> : vector<2x8xf32>
    %172 = vector.multi_reduction <maximumf>, %171, %cst_57 [2] : vector<2x8x8xf32> to vector<2x8xf32>
    %173 = vector.shape_cast %172 : vector<2x8xf32> to vector<2x8x1xf32>
    %174 = vector.broadcast %173 : vector<2x8x1xf32> to vector<2x8x8xf32>
    %175 = arith.subf %171, %174 : vector<2x8x8xf32>
    %176 = math.exp %175 : vector<2x8x8xf32>
    %cst_58 = arith.constant dense<0.000000e+00> : vector<2x8xf32>
    %177 = vector.multi_reduction <add>, %176, %cst_58 [2] : vector<2x8x8xf32> to vector<2x8xf32>
    %178 = vector.shape_cast %177 : vector<2x8xf32> to vector<2x8x1xf32>
    %179 = tpu.reciprocal %178 {approx = true} : vector<2x8x1xf32> -> vector<2x8x1xf32>
    %180 = vector.broadcast %179 : vector<2x8x1xf32> to vector<2x8x8xf32>
    %181 = arith.mulf %176, %180 : vector<2x8x8xf32>
    %182 = arith.truncf %181 : vector<2x8x8xf32> to vector<2x8x8xbf16>
    %183 = vector.extract_strided_slice %165 {offsets = [0, 0, 0], sizes = [2, 8, 8], strides = [1, 1, 1]} : vector<2x8x32xbf16> to vector<2x8x8xbf16>
    "tpu.trace_start"() <{level = 10 : i32, message = "bqk,bkd->bqd"}> : () -> ()
    %cst_59 = arith.constant dense<0.000000e+00> : vector<2x8x8xf32>
    %184 = tpu.matmul %182, %183, %cst_59 {dimension_numbers = #tpu.dot_dimension_numbers<[2], [1], [1], [2], [0, 0, 0, 1, 1, 2], [0], [0]>} : vector<2x8x8xbf16>, vector<2x8x8xbf16>, vector<2x8x8xf32> -> vector<2x8x8xf32>
    "tpu.trace_stop"() : () -> ()
    %185 = vector.shape_cast %184 : vector<2x8x8xf32> to vector<16x8xf32>
    %186 = arith.truncf %185 : vector<16x8xf32> to vector<16x8xbf16>
    %187 = vector.extract_strided_slice %162 {offsets = [0, 0], sizes = [8, 32], strides = [1, 1]} : vector<32x32xbf16> to vector<8x32xbf16>
    %cst_60 = arith.constant dense<0.000000e+00> : vector<16x32xf32>
    %188 = tpu.matmul %186, %187, %cst_60 {dimension_numbers = #tpu.dot_dimension_numbers<[1], [0], [0], [1], [0, 0, 1, 1], [], []>} : vector<16x8xbf16>, vector<8x32xbf16>, vector<16x32xf32> -> vector<16x32xf32>
    %189 = arith.addf %166, %188 : vector<16x32xf32>
    %190 = vector.extract_strided_slice %163 {offsets = [0, 0, 8], sizes = [2, 8, 8], strides = [1, 1, 1]} : vector<2x8x32xbf16> to vector<2x8x8xbf16>
    %191 = vector.extract_strided_slice %164 {offsets = [0, 0, 8], sizes = [2, 8, 8], strides = [1, 1, 1]} : vector<2x8x32xbf16> to vector<2x8x8xbf16>
    "tpu.trace_start"() <{level = 10 : i32, message = "bqd,bkd->bqk"}> : () -> ()
    %cst_61 = arith.constant dense<0.000000e+00> : vector<2x8x8xf32>
    %192 = tpu.matmul %190, %191, %cst_61 {dimension_numbers = #tpu.dot_dimension_numbers<[2], [2], [1], [1], [0, 0, 0, 1, 1, 1], [0], [0]>} : vector<2x8x8xbf16>, vector<2x8x8xbf16>, vector<2x8x8xf32> -> vector<2x8x8xf32>
    %cst_62 = arith.constant -1.000000e+06 : f32
    "tpu.trace_stop"() : () -> ()
    %193 = vector.broadcast %cst_62 : f32 to vector<2x8x8xf32>
    %194 = arith.select %161, %192, %193 : vector<2x8x8xi1>, vector<2x8x8xf32>
    %cst_63 = arith.constant dense<0xFF800000> : vector<2x8xf32>
    %195 = vector.multi_reduction <maximumf>, %194, %cst_63 [2] : vector<2x8x8xf32> to vector<2x8xf32>
    %196 = vector.shape_cast %195 : vector<2x8xf32> to vector<2x8x1xf32>
    %197 = vector.broadcast %196 : vector<2x8x1xf32> to vector<2x8x8xf32>
    %198 = arith.subf %194, %197 : vector<2x8x8xf32>
    %199 = math.exp %198 : vector<2x8x8xf32>
    %cst_64 = arith.constant dense<0.000000e+00> : vector<2x8xf32>
    %200 = vector.multi_reduction <add>, %199, %cst_64 [2] : vector<2x8x8xf32> to vector<2x8xf32>
    %201 = vector.shape_cast %200 : vector<2x8xf32> to vector<2x8x1xf32>
    %202 = tpu.reciprocal %201 {approx = true} : vector<2x8x1xf32> -> vector<2x8x1xf32>
    %203 = vector.broadcast %202 : vector<2x8x1xf32> to vector<2x8x8xf32>
    %204 = arith.mulf %199, %203 : vector<2x8x8xf32>
    %205 = arith.truncf %204 : vector<2x8x8xf32> to vector<2x8x8xbf16>
    %206 = vector.extract_strided_slice %165 {offsets = [0, 0, 8], sizes = [2, 8, 8], strides = [1, 1, 1]} : vector<2x8x32xbf16> to vector<2x8x8xbf16>
    "tpu.trace_start"() <{level = 10 : i32, message = "bqk,bkd->bqd"}> : () -> ()
    %cst_65 = arith.constant dense<0.000000e+00> : vector<2x8x8xf32>
    %207 = tpu.matmul %205, %206, %cst_65 {dimension_numbers = #tpu.dot_dimension_numbers<[2], [1], [1], [2], [0, 0, 0, 1, 1, 2], [0], [0]>} : vector<2x8x8xbf16>, vector<2x8x8xbf16>, vector<2x8x8xf32> -> vector<2x8x8xf32>
    "tpu.trace_stop"() : () -> ()
    %208 = vector.shape_cast %207 : vector<2x8x8xf32> to vector<16x8xf32>
    %209 = arith.truncf %208 : vector<16x8xf32> to vector<16x8xbf16>
    %210 = vector.extract_strided_slice %162 {offsets = [8, 0], sizes = [8, 32], strides = [1, 1]} : vector<32x32xbf16> to vector<8x32xbf16>
    %cst_66 = arith.constant dense<0.000000e+00> : vector<16x32xf32>
    %211 = tpu.matmul %209, %210, %cst_66 {dimension_numbers = #tpu.dot_dimension_numbers<[1], [0], [0], [1], [0, 0, 1, 1], [], []>} : vector<16x8xbf16>, vector<8x32xbf16>, vector<16x32xf32> -> vector<16x32xf32>
    %212 = arith.addf %189, %211 : vector<16x32xf32>
    %213 = vector.extract_strided_slice %163 {offsets = [0, 0, 16], sizes = [2, 8, 8], strides = [1, 1, 1]} : vector<2x8x32xbf16> to vector<2x8x8xbf16>
    %214 = vector.extract_strided_slice %164 {offsets = [0, 0, 16], sizes = [2, 8, 8], strides = [1, 1, 1]} : vector<2x8x32xbf16> to vector<2x8x8xbf16>
    "tpu.trace_start"() <{level = 10 : i32, message = "bqd,bkd->bqk"}> : () -> ()
    %cst_67 = arith.constant dense<0.000000e+00> : vector<2x8x8xf32>
    %215 = tpu.matmul %213, %214, %cst_67 {dimension_numbers = #tpu.dot_dimension_numbers<[2], [2], [1], [1], [0, 0, 0, 1, 1, 1], [0], [0]>} : vector<2x8x8xbf16>, vector<2x8x8xbf16>, vector<2x8x8xf32> -> vector<2x8x8xf32>
    %cst_68 = arith.constant -1.000000e+06 : f32
    "tpu.trace_stop"() : () -> ()
    %216 = vector.broadcast %cst_68 : f32 to vector<2x8x8xf32>
    %217 = arith.select %161, %215, %216 : vector<2x8x8xi1>, vector<2x8x8xf32>
    %cst_69 = arith.constant dense<0xFF800000> : vector<2x8xf32>
    %218 = vector.multi_reduction <maximumf>, %217, %cst_69 [2] : vector<2x8x8xf32> to vector<2x8xf32>
    %219 = vector.shape_cast %218 : vector<2x8xf32> to vector<2x8x1xf32>
    %220 = vector.broadcast %219 : vector<2x8x1xf32> to vector<2x8x8xf32>
    %221 = arith.subf %217, %220 : vector<2x8x8xf32>
    %222 = math.exp %221 : vector<2x8x8xf32>
    %cst_70 = arith.constant dense<0.000000e+00> : vector<2x8xf32>
    %223 = vector.multi_reduction <add>, %222, %cst_70 [2] : vector<2x8x8xf32> to vector<2x8xf32>
    %224 = vector.shape_cast %223 : vector<2x8xf32> to vector<2x8x1xf32>
    %225 = tpu.reciprocal %224 {approx = true} : vector<2x8x1xf32> -> vector<2x8x1xf32>
    %226 = vector.broadcast %225 : vector<2x8x1xf32> to vector<2x8x8xf32>
    %227 = arith.mulf %222, %226 : vector<2x8x8xf32>
    %228 = arith.truncf %227 : vector<2x8x8xf32> to vector<2x8x8xbf16>
    %229 = vector.extract_strided_slice %165 {offsets = [0, 0, 16], sizes = [2, 8, 8], strides = [1, 1, 1]} : vector<2x8x32xbf16> to vector<2x8x8xbf16>
    "tpu.trace_start"() <{level = 10 : i32, message = "bqk,bkd->bqd"}> : () -> ()
    %cst_71 = arith.constant dense<0.000000e+00> : vector<2x8x8xf32>
    %230 = tpu.matmul %228, %229, %cst_71 {dimension_numbers = #tpu.dot_dimension_numbers<[2], [1], [1], [2], [0, 0, 0, 1, 1, 2], [0], [0]>} : vector<2x8x8xbf16>, vector<2x8x8xbf16>, vector<2x8x8xf32> -> vector<2x8x8xf32>
    "tpu.trace_stop"() : () -> ()
    %231 = vector.shape_cast %230 : vector<2x8x8xf32> to vector<16x8xf32>
    %232 = arith.truncf %231 : vector<16x8xf32> to vector<16x8xbf16>
    %233 = vector.extract_strided_slice %162 {offsets = [16, 0], sizes = [8, 32], strides = [1, 1]} : vector<32x32xbf16> to vector<8x32xbf16>
    %cst_72 = arith.constant dense<0.000000e+00> : vector<16x32xf32>
    %234 = tpu.matmul %232, %233, %cst_72 {dimension_numbers = #tpu.dot_dimension_numbers<[1], [0], [0], [1], [0, 0, 1, 1], [], []>} : vector<16x8xbf16>, vector<8x32xbf16>, vector<16x32xf32> -> vector<16x32xf32>
    %235 = arith.addf %212, %234 : vector<16x32xf32>
    %236 = vector.extract_strided_slice %163 {offsets = [0, 0, 24], sizes = [2, 8, 8], strides = [1, 1, 1]} : vector<2x8x32xbf16> to vector<2x8x8xbf16>
    %237 = vector.extract_strided_slice %164 {offsets = [0, 0, 24], sizes = [2, 8, 8], strides = [1, 1, 1]} : vector<2x8x32xbf16> to vector<2x8x8xbf16>
    "tpu.trace_start"() <{level = 10 : i32, message = "bqd,bkd->bqk"}> : () -> ()
    %cst_73 = arith.constant dense<0.000000e+00> : vector<2x8x8xf32>
    %238 = tpu.matmul %236, %237, %cst_73 {dimension_numbers = #tpu.dot_dimension_numbers<[2], [2], [1], [1], [0, 0, 0, 1, 1, 1], [0], [0]>} : vector<2x8x8xbf16>, vector<2x8x8xbf16>, vector<2x8x8xf32> -> vector<2x8x8xf32>
    %cst_74 = arith.constant -1.000000e+06 : f32
    "tpu.trace_stop"() : () -> ()
    %239 = vector.broadcast %cst_74 : f32 to vector<2x8x8xf32>
    %240 = arith.select %161, %238, %239 : vector<2x8x8xi1>, vector<2x8x8xf32>
    %cst_75 = arith.constant dense<0xFF800000> : vector<2x8xf32>
    %241 = vector.multi_reduction <maximumf>, %240, %cst_75 [2] : vector<2x8x8xf32> to vector<2x8xf32>
    %242 = vector.shape_cast %241 : vector<2x8xf32> to vector<2x8x1xf32>
    %243 = vector.broadcast %242 : vector<2x8x1xf32> to vector<2x8x8xf32>
    %244 = arith.subf %240, %243 : vector<2x8x8xf32>
    %245 = math.exp %244 : vector<2x8x8xf32>
    %cst_76 = arith.constant dense<0.000000e+00> : vector<2x8xf32>
    %246 = vector.multi_reduction <add>, %245, %cst_76 [2] : vector<2x8x8xf32> to vector<2x8xf32>
    %247 = vector.shape_cast %246 : vector<2x8xf32> to vector<2x8x1xf32>
    %248 = tpu.reciprocal %247 {approx = true} : vector<2x8x1xf32> -> vector<2x8x1xf32>
    %249 = vector.broadcast %248 : vector<2x8x1xf32> to vector<2x8x8xf32>
    %250 = arith.mulf %245, %249 : vector<2x8x8xf32>
    %251 = arith.truncf %250 : vector<2x8x8xf32> to vector<2x8x8xbf16>
    %252 = vector.extract_strided_slice %165 {offsets = [0, 0, 24], sizes = [2, 8, 8], strides = [1, 1, 1]} : vector<2x8x32xbf16> to vector<2x8x8xbf16>
    "tpu.trace_start"() <{level = 10 : i32, message = "bqk,bkd->bqd"}> : () -> ()
    %cst_77 = arith.constant dense<0.000000e+00> : vector<2x8x8xf32>
    %253 = tpu.matmul %251, %252, %cst_77 {dimension_numbers = #tpu.dot_dimension_numbers<[2], [1], [1], [2], [0, 0, 0, 1, 1, 2], [0], [0]>} : vector<2x8x8xbf16>, vector<2x8x8xbf16>, vector<2x8x8xf32> -> vector<2x8x8xf32>
    "tpu.trace_stop"() : () -> ()
    %254 = vector.shape_cast %253 : vector<2x8x8xf32> to vector<16x8xf32>
    %255 = arith.truncf %254 : vector<16x8xf32> to vector<16x8xbf16>
    %256 = vector.extract_strided_slice %162 {offsets = [24, 0], sizes = [8, 32], strides = [1, 1]} : vector<32x32xbf16> to vector<8x32xbf16>
    %cst_78 = arith.constant dense<0.000000e+00> : vector<16x32xf32>
    %257 = tpu.matmul %255, %256, %cst_78 {dimension_numbers = #tpu.dot_dimension_numbers<[1], [0], [0], [1], [0, 0, 1, 1], [], []>} : vector<16x8xbf16>, vector<8x32xbf16>, vector<16x32xf32> -> vector<16x32xf32>
    %258 = arith.addf %235, %257 : vector<16x32xf32>
    %259 = arith.addf %258, %144 : vector<16x32xf32>
    %c0_79 = arith.constant 0 : index
    %c0_80 = arith.constant 0 : index
    %260 = vector.load %arg11[%c0_79, %c0_80] : memref<1x32xf32, #tpu.memory_space<vmem>>, vector<1x32xf32>
    %c0_81 = arith.constant 0 : index
    %c0_82 = arith.constant 0 : index
    %261 = vector.load %arg12[%c0_81, %c0_82] : memref<1x32xf32, #tpu.memory_space<vmem>>, vector<1x32xf32>
    %cst_83 = arith.constant dense<0.000000e+00> : vector<16xf32>
    %262 = vector.multi_reduction <add>, %259, %cst_83 [1] : vector<16x32xf32> to vector<16xf32>
    %263 = vector.shape_cast %262 : vector<16xf32> to vector<16x1xf32>
    %cst_84 = arith.constant 3.200000e+01 : f32
    %264 = vector.broadcast %cst_84 : f32 to vector<16x1xf32>
    %265 = arith.divf %263, %264 : vector<16x1xf32>
    %266 = vector.broadcast %265 : vector<16x1xf32> to vector<16x32xf32>
    %267 = arith.subf %259, %266 : vector<16x32xf32>
    %268 = arith.mulf %267, %267 : vector<16x32xf32>
    %cst_85 = arith.constant dense<0.000000e+00> : vector<16xf32>
    %269 = vector.multi_reduction <add>, %268, %cst_85 [1] : vector<16x32xf32> to vector<16xf32>
    %270 = vector.shape_cast %269 : vector<16xf32> to vector<16x1xf32>
    %cst_86 = arith.constant 3.200000e+01 : f32
    %271 = vector.broadcast %cst_86 : f32 to vector<16x1xf32>
    %272 = arith.divf %270, %271 : vector<16x1xf32>
    %273 = vector.broadcast %265 : vector<16x1xf32> to vector<16x32xf32>
    %274 = arith.subf %259, %273 : vector<16x32xf32>
    %cst_87 = arith.constant 9.99999974E-6 : f32
    %275 = vector.broadcast %cst_87 : f32 to vector<16x1xf32>
    %276 = arith.addf %272, %275 : vector<16x1xf32>
    %277 = math.rsqrt %276 : vector<16x1xf32>
    %278 = vector.broadcast %277 : vector<16x1xf32> to vector<16x32xf32>
    %279 = arith.mulf %274, %278 : vector<16x32xf32>
    %280 = vector.broadcast %260 : vector<1x32xf32> to vector<16x32xf32>
    %281 = arith.mulf %279, %280 : vector<16x32xf32>
    %282 = vector.broadcast %261 : vector<1x32xf32> to vector<16x32xf32>
    %283 = arith.addf %281, %282 : vector<16x32xf32>
    %284 = arith.truncf %283 : vector<16x32xf32> to vector<16x32xbf16>
    %c0_88 = arith.constant 0 : index
    %c0_89 = arith.constant 0 : index
    %285 = vector.load %arg15[%c0_88, %c0_89] : memref<32x64xbf16, #tpu.memory_space<vmem>>, vector<32x64xbf16>
    %cst_90 = arith.constant dense<0.000000e+00> : vector<16x64xf32>
    %286 = tpu.matmul %284, %285, %cst_90 {dimension_numbers = #tpu.dot_dimension_numbers<[1], [0], [0], [1], [0, 0, 1, 1], [], []>} : vector<16x32xbf16>, vector<32x64xbf16>, vector<16x64xf32> -> vector<16x64xf32>
    %c0_91 = arith.constant 0 : index
    %c0_92 = arith.constant 0 : index
    %287 = vector.load %arg16[%c0_91, %c0_92] : memref<1x64xf32, #tpu.memory_space<vmem>>, vector<1x64xf32>
    %288 = vector.broadcast %287 : vector<1x64xf32> to vector<16x64xf32>
    %289 = arith.addf %286, %288 : vector<16x64xf32>
    %cst_93 = arith.constant 0.000000e+00 : f32
    %290 = vector.broadcast %cst_93 : f32 to vector<16x64xf32>
    %291 = arith.maximumf %289, %290 : vector<16x64xf32>
    %292 = arith.truncf %291 : vector<16x64xf32> to vector<16x64xbf16>
    %c0_94 = arith.constant 0 : index
    %c0_95 = arith.constant 0 : index
    %293 = vector.load %arg17[%c0_94, %c0_95] : memref<64x32xbf16, #tpu.memory_space<vmem>>, vector<64x32xbf16>
    %cst_96 = arith.constant dense<0.000000e+00> : vector<16x32xf32>
    %294 = tpu.matmul %292, %293, %cst_96 {dimension_numbers = #tpu.dot_dimension_numbers<[1], [0], [0], [1], [0, 0, 1, 1], [], []>} : vector<16x64xbf16>, vector<64x32xbf16>, vector<16x32xf32> -> vector<16x32xf32>
    %c0_97 = arith.constant 0 : index
    %c0_98 = arith.constant 0 : index
    %295 = vector.load %arg18[%c0_97, %c0_98] : memref<1x32xf32, #tpu.memory_space<vmem>>, vector<1x32xf32>
    %296 = vector.broadcast %295 : vector<1x32xf32> to vector<16x32xf32>
    %297 = arith.addf %294, %296 : vector<16x32xf32>
    %298 = arith.addf %297, %283 : vector<16x32xf32>
    %c0_99 = arith.constant 0 : index
    %c0_100 = arith.constant 0 : index
    %299 = vector.load %arg13[%c0_99, %c0_100] : memref<1x32xf32, #tpu.memory_space<vmem>>, vector<1x32xf32>
    %c0_101 = arith.constant 0 : index
    %c0_102 = arith.constant 0 : index
    %300 = vector.load %arg14[%c0_101, %c0_102] : memref<1x32xf32, #tpu.memory_space<vmem>>, vector<1x32xf32>
    %cst_103 = arith.constant dense<0.000000e+00> : vector<16xf32>
    %301 = vector.multi_reduction <add>, %298, %cst_103 [1] : vector<16x32xf32> to vector<16xf32>
    %302 = vector.shape_cast %301 : vector<16xf32> to vector<16x1xf32>
    %cst_104 = arith.constant 3.200000e+01 : f32
    %303 = vector.broadcast %cst_104 : f32 to vector<16x1xf32>
    %304 = arith.divf %302, %303 : vector<16x1xf32>
    %305 = vector.broadcast %304 : vector<16x1xf32> to vector<16x32xf32>
    %306 = arith.subf %298, %305 : vector<16x32xf32>
    %307 = arith.mulf %306, %306 : vector<16x32xf32>
    %cst_105 = arith.constant dense<0.000000e+00> : vector<16xf32>
    %308 = vector.multi_reduction <add>, %307, %cst_105 [1] : vector<16x32xf32> to vector<16xf32>
    %309 = vector.shape_cast %308 : vector<16xf32> to vector<16x1xf32>
    %cst_106 = arith.constant 3.200000e+01 : f32
    %310 = vector.broadcast %cst_106 : f32 to vector<16x1xf32>
    %311 = arith.divf %309, %310 : vector<16x1xf32>
    %312 = vector.broadcast %304 : vector<16x1xf32> to vector<16x32xf32>
    %313 = arith.subf %298, %312 : vector<16x32xf32>
    %cst_107 = arith.constant 9.99999974E-6 : f32
    %314 = vector.broadcast %cst_107 : f32 to vector<16x1xf32>
    %315 = arith.addf %311, %314 : vector<16x1xf32>
    %316 = math.rsqrt %315 : vector<16x1xf32>
    %317 = vector.broadcast %316 : vector<16x1xf32> to vector<16x32xf32>
    %318 = arith.mulf %313, %317 : vector<16x32xf32>
    %319 = vector.broadcast %299 : vector<1x32xf32> to vector<16x32xf32>
    %320 = arith.mulf %318, %319 : vector<16x32xf32>
    %321 = vector.broadcast %300 : vector<1x32xf32> to vector<16x32xf32>
    %322 = arith.addf %320, %321 : vector<16x32xf32>
    %323 = vector.shape_cast %322 : vector<16x32xf32> to vector<2x8x32xf32>
    %c0_108 = arith.constant 0 : index
    %c0_109 = arith.constant 0 : index
    %c0_110 = arith.constant 0 : index
    %324 = vector.load %arg19[%c0_108, %c0_109, %c0_110] : memref<2x8x32xf32, #tpu.memory_space<vmem>>, vector<2x8x32xf32>
    tpu.vector_store %arg19[%c0_108, %c0_109, %c0_110], %323 {strides = array<i32>} : memref<2x8x32xf32, #tpu.memory_space<vmem>>, vector<2x8x32xf32>,
    return
  }
  func.func @transform_0(%arg0: i32) -> (i32, i32, i32) {
    %c0_i32 = arith.constant 0 : i32
    %c0_i32_0 = arith.constant 0 : i32
    %c0_i32_1 = arith.constant 0 : i32
    return %arg0, %c0_i32, %c0_i32_0 : i32, i32, i32
  }
  func.func @transform_1(%arg0: i32) -> (i32, i32, i32) {
    %c0_i32 = arith.constant 0 : i32
    %c0_i32_0 = arith.constant 0 : i32
    %c0_i32_1 = arith.constant 0 : i32
    return %arg0, %c0_i32, %c0_i32_0 : i32, i32, i32
  }
  func.func @transform_2(%arg0: i32) -> (i32, i32, i32) {
    %c0_i32 = arith.constant 0 : i32
    %c0_i32_0 = arith.constant 0 : i32
    %c0_i32_1 = arith.constant 0 : i32
    return %arg0, %c0_i32, %c0_i32_0 : i32, i32, i32
  }
  func.func @transform_3(%arg0: i32) -> (i32, i32) {
    %c0_i32 = arith.constant 0 : i32
    %c0_i32_0 = arith.constant 0 : i32
    %c0_i32_1 = arith.constant 0 : i32
    return %c0_i32, %c0_i32_0 : i32, i32
  }
  func.func @transform_4(%arg0: i32) -> (i32, i32) {
    %c0_i32 = arith.constant 0 : i32
    %c0_i32_0 = arith.constant 0 : i32
    %c0_i32_1 = arith.constant 0 : i32
    return %c0_i32, %c0_i32_0 : i32, i32
  }
  func.func @transform_5(%arg0: i32) -> (i32, i32) {
    %c0_i32 = arith.constant 0 : i32
    %c0_i32_0 = arith.constant 0 : i32
    %c0_i32_1 = arith.constant 0 : i32
    return %c0_i32, %c0_i32_0 : i32, i32
  }
  func.func @transform_6(%arg0: i32) -> (i32, i32) {
    %c0_i32 = arith.constant 0 : i32
    %c0_i32_0 = arith.constant 0 : i32
    %c0_i32_1 = arith.constant 0 : i32
    return %c0_i32, %c0_i32_0 : i32, i32
  }
  func.func @transform_7(%arg0: i32) -> (i32, i32) {
    %c0_i32 = arith.constant 0 : i32
    %c0_i32_0 = arith.constant 0 : i32
    %c0_i32_1 = arith.constant 0 : i32
    return %c0_i32, %c0_i32_0 : i32, i32
  }
  func.func @transform_8(%arg0: i32) -> (i32, i32) {
    %c0_i32 = arith.constant 0 : i32
    %c0_i32_0 = arith.constant 0 : i32
    %c0_i32_1 = arith.constant 0 : i32
    return %c0_i32, %c0_i32_0 : i32, i32
  }
  func.func @transform_9(%arg0: i32) -> (i32, i32) {
    %c0_i32 = arith.constant 0 : i32
    %c0_i32_0 = arith.constant 0 : i32
    %c0_i32_1 = arith.constant 0 : i32
    return %c0_i32, %c0_i32_0 : i32, i32
  }
  func.func @transform_10(%arg0: i32) -> (i32, i32) {
    %c0_i32 = arith.constant 0 : i32
    %c0_i32_0 = arith.constant 0 : i32
    %c0_i32_1 = arith.constant 0 : i32
    return %c0_i32, %c0_i32_0 : i32, i32
  }
  func.func @transform_11(%arg0: i32) -> (i32, i32) {
    %c0_i32 = arith.constant 0 : i32
    %c0_i32_0 = arith.constant 0 : i32
    %c0_i32_1 = arith.constant 0 : i32
    return %c0_i32, %c0_i32_0 : i32, i32
  }
  func.func @transform_12(%arg0: i32) -> (i32, i32) {
    %c0_i32 = arith.constant 0 : i32
    %c0_i32_0 = arith.constant 0 : i32
    %c0_i32_1 = arith.constant 0 : i32
    return %c0_i32, %c0_i32_0 : i32, i32
  }
  func.func @transform_13(%arg0: i32) -> (i32, i32) {
    %c0_i32 = arith.constant 0 : i32
    %c0_i32_0 = arith.constant 0 : i32
    %c0_i32_1 = arith.constant 0 : i32
    return %c0_i32, %c0_i32_0 : i32, i32
  }
  func.func @transform_14(%arg0: i32) -> (i32, i32) {
    %c0_i32 = arith.constant 0 : i32
    %c0_i32_0 = arith.constant 0 : i32
    %c0_i32_1 = arith.constant 0 : i32
    return %c0_i32, %c0_i32_0 : i32, i32
  }
  func.func @transform_15(%arg0: i32) -> (i32, i32) {
    %c0_i32 = arith.constant 0 : i32
    %c0_i32_0 = arith.constant 0 : i32
    %c0_i32_1 = arith.constant 0 : i32
    return %c0_i32, %c0_i32_0 : i32, i32
  }
  func.func @transform_16(%arg0: i32) -> (i32, i32) {
    %c0_i32 = arith.constant 0 : i32
    %c0_i32_0 = arith.constant 0 : i32
    %c0_i32_1 = arith.constant 0 : i32
    return %c0_i32, %c0_i32_0 : i32, i32
  }
  func.func @transform_17(%arg0: i32) -> (i32, i32) {
    %c0_i32 = arith.constant 0 : i32
    %c0_i32_0 = arith.constant 0 : i32
    %c0_i32_1 = arith.constant 0 : i32
    return %c0_i32, %c0_i32_0 : i32, i32
  }
  func.func @transform_18(%arg0: i32) -> (i32, i32, i32) {
    %c0_i32 = arith.constant 0 : i32
    %c0_i32_0 = arith.constant 0 : i32
    %c0_i32_1 = arith.constant 0 : i32
    return %arg0, %c0_i32, %c0_i32_0 : i32, i32, i32
  }
}

</mosaic_0001>

<llo_original>
// kernel: tpu_custom_call.1
$region0: #{tpu_custom_call.1}
  #allocation0 [shape = 'u32[]', space=smem, size = 0x4, offset = 0x4, fixed_abs, tag = 'smem constant byte address 0x4 - core index']
  #allocation1 [shape = 'u32[144,128]{1,0:T(1,128)}', space=vmem, size = 0x12000, scoped, tag = 'internal scratch']
  %s0 = inlined_call_operand.vmem [shape: f32[2,8,32], index: 0, kind: input, shape index: {}]
  %s1 = inlined_call_operand.vmem [shape: f32[2,8,32], index: 1, kind: input, shape index: {}]
  %s2 = inlined_call_operand.vmem [shape: s32[2,1,1], index: 2, kind: input, shape index: {}]
  %s3 = inlined_call_operand.vmem [shape: bf16[32,96], index: 3, kind: input, shape index: {}]
  %s4 = inlined_call_operand.hbm [shape: bf16[32,32], index: 4, kind: input, shape index: {}]
  %s5 = inlined_call_operand.hbm [shape: bf16[32,32], index: 5, kind: input, shape index: {}]
  %s6 = inlined_call_operand.hbm [shape: bf16[32,64], index: 6, kind: input, shape index: {}]
  %s7 = inlined_call_operand.hbm [shape: bf16[32,32], index: 7, kind: input, shape index: {}]
  %s8 = inlined_call_operand.vmem [shape: f32[1,32], index: 8, kind: input, shape index: {}]
  %s9 = inlined_call_operand.vmem [shape: f32[1,32], index: 9, kind: input, shape index: {}]
  %s10 = inlined_call_operand.vmem [shape: f32[1,32], index: 10, kind: input, shape index: {}]
  %s11 = inlined_call_operand.vmem [shape: f32[1,32], index: 11, kind: input, shape index: {}]
  %s12 = inlined_call_operand.vmem [shape: f32[1,32], index: 12, kind: input, shape index: {}]
  %s13 = inlined_call_operand.vmem [shape: f32[1,32], index: 13, kind: input, shape index: {}]
  %s14 = inlined_call_operand.vmem [shape: bf16[32,64], index: 14, kind: input, shape index: {}]
  %s15 = inlined_call_operand.vmem [shape: f32[1,64], index: 15, kind: input, shape index: {}]
  %s16 = inlined_call_operand.vmem [shape: bf16[64,32], index: 16, kind: input, shape index: {}]
  %s17 = inlined_call_operand.vmem [shape: f32[1,32], index: 17, kind: input, shape index: {}]
  %s18 = inlined_call_operand.hbm [shape: f32[2,8,32], index: 18, kind: output, shape index: {}]
  %s19 = sld [smem:[#allocation0]]
  $region98: #{tpu_custom_call.1} parent=0
    _
  %s21 = ssub.s32 1, %s19
  %s22 = scalar_select 0, %s21, %s19
  $region1: #{tpu_custom_call.1} parent=0
    #allocation2 [shape = 'u8[8192]{0}', space=vmem, size = 0x2000, scoped, tag = 'input window, operand 4, single buffered']
    #allocation3 [shape = 's32[1]{0}', space=sflag, size = 0x4, scoped, tag = 'scoped memory for tpu_custom_call.1']
    #allocation4 [shape = 's32[1]{0}', space=sflag, size = 0x4, scoped, tag = 'scoped memory for tpu_custom_call.1']
    #allocation5 [shape = 'u8[8192]{0}', space=vmem, size = 0x2000, scoped, tag = 'input window, operand 5, single buffered']
    #allocation6 [shape = 's32[1]{0}', space=sflag, size = 0x4, scoped, tag = 'scoped memory for tpu_custom_call.1']
    #allocation7 [shape = 'u8[8192]{0}', space=vmem, size = 0x2000, scoped, tag = 'input window, operand 6, single buffered']
    #allocation8 [shape = 'u8[8192]{0}', space=vmem, size = 0x2000, scoped, tag = 'input window, operand 7, single buffered']
    #allocation9 [shape = 's32[1]{0}', space=sflag, size = 0x4, scoped, tag = 'scoped memory for tpu_custom_call.1']
    #allocation10 [shape = 'u8[8192]{0}', space=vmem, size = 0x2000, scoped, tag = 'output window, operand 0, single buffered']
    %23 = vsyncpa [#allocation3], 0
    %24 = vsyncpa [#allocation6], 0
    %25 = vsyncpa [#allocation9], 0
    %26 = vsyncpa [#allocation4], 0
    // Predicated region
    $region2: #{tpu_custom_call.1} parent=1 // pred_check
      _
    $region3: #{tpu_custom_call.1} parent=1 // pred_check_branch
      %28 = sbr.rel (0) target = $region5
    $region4: #{tpu_custom_call.1} parent=1 // pred_region
      _
    $region5: #{tpu_custom_call.1} parent=1 // pred_fallthru
      _
    // Predicated region
    $region6: #{tpu_custom_call.1} parent=1 // pred_check
      _
    $region7: #{tpu_custom_call.1} parent=1 // pred_check_branch
      %30 = sbr.rel (0) target = $region9
    $region8: #{tpu_custom_call.1} parent=1 // pred_region
      _
    $region9: #{tpu_custom_call.1} parent=1 // pred_fallthru
      _
    // Predicated region
    $region10: #{tpu_custom_call.1} parent=1 // pred_check
      _
    $region11: #{tpu_custom_call.1} parent=1 // pred_check_branch
      %32 = sbr.rel (0) target = $region13
    $region12: #{tpu_custom_call.1} parent=1 // pred_region
      _
    $region13: #{tpu_custom_call.1} parent=1 // pred_fallthru
      _
    // Predicated region
    $region14: #{tpu_custom_call.1} parent=1 // pred_check
      _
    $region15: #{tpu_custom_call.1} parent=1 // pred_check_branch
      %34 = sbr.rel (0) target = $region17
    $region16: #{tpu_custom_call.1} parent=1 // pred_region
      _
    $region17: #{tpu_custom_call.1} parent=1 // pred_fallthru
      _
    // Predicated region
    $region18: #{tpu_custom_call.1} parent=1 // pred_check
      _
    $region19: #{tpu_custom_call.1} parent=1 // pred_check_branch
      %36 = sbr.rel (0) target = $region21
    $region20: #{tpu_custom_call.1} parent=1 // pred_region
      %s38 = ssub.s32 256, 256
      %39 = vsyncadd [#allocation3], %s38
      %s40 = sshll.u32 [#allocation2], 4
      %s41 = int_to_ptr.vmem [resolvable:$true] %s40
      %46 = dma.hbm_to_vmem [thread:$0]  %s4, 256, %s41, [#allocation3], 64, 64, 4
    $region21: #{tpu_custom_call.1} parent=1 // pred_fallthru
      _
    // Predicated region
    $region22: #{tpu_custom_call.1} parent=1 // pred_check
      _
    $region23: #{tpu_custom_call.1} parent=1 // pred_check_branch
      %48 = sbr.rel (0) target = $region25
    $region24: #{tpu_custom_call.1} parent=1 // pred_region
      %s50 = ssub.s32 256, 256
      %51 = vsyncadd [#allocation6], %s50
      %s52 = sshll.u32 [#allocation5], 4
      %s53 = int_to_ptr.vmem [resolvable:$true] %s52
      %58 = dma.hbm_to_vmem [thread:$0]  %s5, 256, %s53, [#allocation6], 64, 64, 4
    $region25: #{tpu_custom_call.1} parent=1 // pred_fallthru
      _
    // Predicated region
    $region26: #{tpu_custom_call.1} parent=1 // pred_check
      _
    $region27: #{tpu_custom_call.1} parent=1 // pred_check_branch
      %60 = sbr.rel (0) target = $region29
    $region28: #{tpu_custom_call.1} parent=1 // pred_region
      %s62 = ssub.s32 256, 256
      %63 = vsyncadd [#allocation6], %s62
      %s64 = sshll.u32 [#allocation7], 4
      %s65 = int_to_ptr.vmem [resolvable:$true] %s64
      %70 = dma.hbm_to_vmem [thread:$0]  %s6, 256, %s65, [#allocation6], 64, 64, 4
    $region29: #{tpu_custom_call.1} parent=1 // pred_fallthru
      _
    // Predicated region
    $region30: #{tpu_custom_call.1} parent=1 // pred_check
      _
    $region31: #{tpu_custom_call.1} parent=1 // pred_check_branch
      %72 = sbr.rel (0) target = $region33
    $region32: #{tpu_custom_call.1} parent=1 // pred_region
      %s74 = ssub.s32 256, 256
      %75 = vsyncadd [#allocation9], %s74
      %s76 = sshll.u32 [#allocation8], 4
      %s77 = int_to_ptr.vmem [resolvable:$true] %s76
      %82 = dma.hbm_to_vmem [thread:$0]  %s7, 256, %s77, [#allocation9], 64, 64, 4
    $region33: #{tpu_custom_call.1} parent=1 // pred_fallthru
      _
    // Predicated region
    $region34: #{tpu_custom_call.1} parent=1 // pred_check
      _
    $region35: #{tpu_custom_call.1} parent=1 // pred_check_branch
      %84 = sbr.rel (0) target = $region37
    $region36: #{tpu_custom_call.1} parent=1 // pred_region
      _
    $region37: #{tpu_custom_call.1} parent=1 // pred_fallthru
      _
    // Predicated region
    $region38: #{tpu_custom_call.1} parent=1 // pred_check
      _
    $region39: #{tpu_custom_call.1} parent=1 // pred_check_branch
      %86 = sbr.rel (0) target = $region41
    $region40: #{tpu_custom_call.1} parent=1 // pred_region
      _
    $region41: #{tpu_custom_call.1} parent=1 // pred_fallthru
      _
    // Predicated region
    $region42: #{tpu_custom_call.1} parent=1 // pred_check
      _
    $region43: #{tpu_custom_call.1} parent=1 // pred_check_branch
      %88 = sbr.rel (0) target = $region45
    $region44: #{tpu_custom_call.1} parent=1 // pred_region
      _
    $region45: #{tpu_custom_call.1} parent=1 // pred_fallthru
      _
    // Predicated region
    $region46: #{tpu_custom_call.1} parent=1 // pred_check
      _
    $region47: #{tpu_custom_call.1} parent=1 // pred_check_branch
      %90 = sbr.rel (0) target = $region49
    $region48: #{tpu_custom_call.1} parent=1 // pred_region
      _
    $region49: #{tpu_custom_call.1} parent=1 // pred_fallthru
      _
    // Predicated region
    $region50: #{tpu_custom_call.1} parent=1 // pred_check
      _
    $region51: #{tpu_custom_call.1} parent=1 // pred_check_branch
      %92 = sbr.rel (0) target = $region53
    $region52: #{tpu_custom_call.1} parent=1 // pred_region
      _
    $region53: #{tpu_custom_call.1} parent=1 // pred_fallthru
      _
    // Predicated region
    $region54: #{tpu_custom_call.1} parent=1 // pred_check
      _
    $region55: #{tpu_custom_call.1} parent=1 // pred_check_branch
      %94 = sbr.rel (0) target = $region57
    $region56: #{tpu_custom_call.1} parent=1 // pred_region
      _
    $region57: #{tpu_custom_call.1} parent=1 // pred_fallthru
      _
    // Predicated region
    $region58: #{tpu_custom_call.1} parent=1 // pred_check
      _
    $region59: #{tpu_custom_call.1} parent=1 // pred_check_branch
      %96 = sbr.rel (0) target = $region61
    $region60: #{tpu_custom_call.1} parent=1 // pred_region
      _
    $region61: #{tpu_custom_call.1} parent=1 // pred_fallthru
      _
    // Predicated region
    $region62: #{tpu_custom_call.1} parent=1 // pred_check
      _
    $region63: #{tpu_custom_call.1} parent=1 // pred_check_branch
      %98 = sbr.rel (0) target = $region65
    $region64: #{tpu_custom_call.1} parent=1 // pred_region
      _
    $region65: #{tpu_custom_call.1} parent=1 // pred_fallthru
      _
    // Predicated region
    $region66: #{tpu_custom_call.1} parent=1 // pred_check
      _
    $region67: #{tpu_custom_call.1} parent=1 // pred_check_branch
      %100 = sbr.rel (0) target = $region69
    $region68: #{tpu_custom_call.1} parent=1 // pred_region
      _
    $region69: #{tpu_custom_call.1} parent=1 // pred_fallthru
      _
    // Predicated region
    $region70: #{tpu_custom_call.1} parent=1 // pred_check
      _
    $region71: #{tpu_custom_call.1} parent=1 // pred_check_branch
      %102 = sbr.rel (0) target = $region73
    $region72: #{tpu_custom_call.1} parent=1 // pred_region
      _
    $region73: #{tpu_custom_call.1} parent=1 // pred_fallthru
      _
    // Predicated region
    $region74: #{tpu_custom_call.1} parent=1 // pred_check
      _
    $region75: #{tpu_custom_call.1} parent=1 // pred_check_branch
      %104 = sbr.rel (0) target = $region77
    $region76: #{tpu_custom_call.1} parent=1 // pred_region
      %105 = dma.done [#allocation3], 256
    $region77: #{tpu_custom_call.1} parent=1 // pred_fallthru
      _
    // Predicated region
    $region78: #{tpu_custom_call.1} parent=1 // pred_check
      _
    $region79: #{tpu_custom_call.1} parent=1 // pred_check_branch
      %107 = sbr.rel (0) target = $region81
    $region80: #{tpu_custom_call.1} parent=1 // pred_region
      %108 = dma.done [#allocation6], 256
    $region81: #{tpu_custom_call.1} parent=1 // pred_fallthru
      _
    // Predicated region
    $region82: #{tpu_custom_call.1} parent=1 // pred_check
      _
    $region83: #{tpu_custom_call.1} parent=1 // pred_check_branch
      %110 = sbr.rel (0) target = $region85
    $region84: #{tpu_custom_call.1} parent=1 // pred_region
      %111 = dma.done [#allocation6], 256
    $region85: #{tpu_custom_call.1} parent=1 // pred_fallthru
      _
    // Predicated region
    $region86: #{tpu_custom_call.1} parent=1 // pred_check
      _
    $region87: #{tpu_custom_call.1} parent=1 // pred_check_branch
      %113 = sbr.rel (0) target = $region89
    $region88: #{tpu_custom_call.1} parent=1 // pred_region
      %114 = dma.done [#allocation9], 256
    $region89: #{tpu_custom_call.1} parent=1 // pred_fallthru
      _
    %v116 = vld [vmem:[%s0] sm:$0xff]
    %v117 = vld [vmem:[%s0 + $0x8] sm:$0xff]
    %v118 = vpack.c.bf16 %v117, %v116
    %v119 = vld [vmem:[%s3] sm:$0xf]
    %v120 = vld [vmem:[%s3 + $0x4] sm:$0xf]
    %v121 = vld [vmem:[%s3 + $0x8] sm:$0xf]
    %v122 = vld [vmem:[%s3 + $0xc] sm:$0xf]
    %v127 = vunpack.c.l.b16 %v119
    %v128 = vunpack.c.l.b16 %v120
    %v129 = vunpack.c.l.b16 %v121
    %v130 = vunpack.c.l.b16 %v122
    %v131 = vpack.c.b16 %v128, %v127
    %v132 = vpack.c.b16 %v130, %v129
    %vm135 = vcmask 261120
    %v137 = vsel %vm135, %v118, 0
    %139 = vmatprep.subr.bf16.mxu0 0
    %140 = vmatpush1.bf16.msra.mxu0 %v131
    %141 = vmatprep.subr.bf16.mxu0 0
    %142 = vmatpush1.bf16.msra.mxu0 %v132
    %143 = vmatprep.subr.bf16.mxu0 0
    %144 = vmatpush1.bf16.msra.mxu0 0
    %145 = vmatprep.subr.bf16.mxu0 0
    %146 = vmatpush1.bf16.msra.mxu0 0
    %147 = vmatprep.subr.bf16.mxu0 0
    %148 = vmatpush1.bf16.msra.mxu0 0
    %149 = vmatprep.subr.bf16.mxu0 0
    %150 = vmatpush1.bf16.msra.mxu0 0
    %151 = vmatprep.subr.bf16.mxu0 0
    %152 = vmatpush1.bf16.msra.mxu0 0
    %153 = vmatprep.subr.bf16.mxu0 0
    %154 = vmatpush1.bf16.msra.mxu0 0
    %155 = vmatprep.subr.bf16.mxu0 0
    %156 = vmatpush1.bf16.msra.mxu0 0
    %157 = vmatprep.subr.bf16.mxu0 0
    %158 = vmatpush1.bf16.msra.mxu0 0
    %159 = vmatprep.subr.bf16.mxu0 0
    %160 = vmatpush1.bf16.msra.mxu0 0
    %161 = vmatprep.subr.bf16.mxu0 0
    %162 = vmatpush1.bf16.msra.mxu0 0
    %163 = vmatprep.subr.bf16.mxu0 0
    %164 = vmatpush1.bf16.msra.mxu0 0
    %165 = vmatprep.subr.bf16.mxu0 0
    %166 = vmatpush1.bf16.msra.mxu0 0
    %167 = vmatprep.subr.bf16.mxu0 0
    %168 = vmatpush1.bf16.msra.mxu0 0
    %169 = vmatprep.subr.bf16.mxu0 0
    %170 = vmatpush1.bf16.msra.mxu0 0
    %171 = vmatprep.mubr.bf16.mxu0 0
    %172 = vmatmul.mubr.bf16.gmra.mrb[0].mxu0 %v137
    %v173 = vpop.f32.mrb[0].mxu0
    %v174 = vadd.f32 0.0, %v173
    %v175 = vpop.f32.mrb[0].mxu0
    %v176 = vpop.f32.mrb[0].mxu0
    %v177 = vadd.f32 0.0, %v176
    %v178 = vpop.f32.mrb[0].mxu0
    %179 = vdwg.mxu0
    %v180 = vlaneseq
    %v181 = vshrl.u32 %v180, 7
    %v182 = vlaneseq
    %v183 = vand.u32 %v182, 127
    %vm184 = vcmp.le.s32.totalorder %v183, %v181
    %v185 = vld [vmem:[#allocation2] sm:$0xf]
    %v186 = vld [vmem:[#allocation2 + $0x4] sm:$0xf]
    %v187 = vld [vmem:[#allocation2 + $0x8] sm:$0xf]
    %v188 = vld [vmem:[#allocation2 + $0xc] sm:$0xf]
    %v189 = vpack.c.bf16 %v174, %v174
    %v190 = vpack.c.bf16 %v177, %v177
    %192 = vrot.lane.b32.xlu0 %v189, 96
    %v193 = vpop.permute.xlu0 %192
    %vm194 = vcmask 64512
    %v196 = vsel %vm194, %v189, 0
    %v199 = vsel %vm194, %v193, 0
    %201 = vmatprep.subr.bf16.mxu0 0
    %202 = vmatpush1.bf16.xpose.msra.mxu0 %v199
    %203 = vmatprep.subr.bf16.mxu0 0
    %204 = vmatpush1.bf16.xpose.msra.mxu0 0
    %205 = vmatprep.subr.bf16.mxu0 0
    %206 = vmatpush1.bf16.xpose.msra.mxu0 0
    %207 = vmatprep.subr.bf16.mxu0 0
    %208 = vmatpush1.bf16.xpose.msra.mxu0 0
    %209 = vmatprep.subr.bf16.mxu0 0
    %210 = vmatpush1.bf16.xpose.msra.mxu0 0
    %211 = vmatprep.subr.bf16.mxu0 0
    %212 = vmatpush1.bf16.xpose.msra.mxu0 0
    %213 = vmatprep.subr.bf16.mxu0 0
    %214 = vmatpush1.bf16.xpose.msra.mxu0 0
    %215 = vmatprep.subr.bf16.mxu0 0
    %216 = vmatpush1.bf16.xpose.msra.mxu0 0
    %217 = vmatprep.subr.bf16.mxu0 0
    %218 = vmatpush1.bf16.xpose.msra.mxu0 0
    %219 = vmatprep.subr.bf16.mxu0 0
    %220 = vmatpush1.bf16.xpose.msra.mxu0 0
    %221 = vmatprep.subr.bf16.mxu0 0
    %222 = vmatpush1.bf16.xpose.msra.mxu0 0
    %223 = vmatprep.subr.bf16.mxu0 0
    %224 = vmatpush1.bf16.xpose.msra.mxu0 0
    %225 = vmatprep.subr.bf16.mxu0 0
    %226 = vmatpush1.bf16.xpose.msra.mxu0 0
    %227 = vmatprep.subr.bf16.mxu0 0
    %228 = vmatpush1.bf16.xpose.msra.mxu0 0
    %229 = vmatprep.subr.bf16.mxu0 0
    %230 = vmatpush1.bf16.xpose.msra.mxu0 0
    %231 = vmatprep.subr.bf16.mxu0 0
    %232 = vmatpush1.bf16.xpose.msra.mxu0 0
    %233 = vmatprep.mubr.bf16.mxu0 0
    %234 = vmatmul.mubr.bf16.gmra.mrb[0].mxu0 %v196
    %v235 = vpop.f32.mrb[0].mxu0
    %v236 = vadd.f32 0.0, %v235
    %v237 = vpop.f32.mrb[0].mxu0
    %v238 = vpop.f32.mrb[0].mxu0
    %v239 = vpop.f32.mrb[0].mxu0
    %240 = vdwg.mxu0
    %242 = vrot.lane.b32.xlu0 %v190, 96
    %v243 = vpop.permute.xlu0 %242
    %v245 = vsel %vm194, %v190, 0
    %v248 = vsel %vm194, %v243, 0
    %250 = vmatprep.subr.bf16.mxu0 0
    %251 = vmatpush1.bf16.xpose.msra.mxu0 %v248
    %252 = vmatprep.subr.bf16.mxu0 0
    %253 = vmatpush1.bf16.xpose.msra.mxu0 0
    %254 = vmatprep.subr.bf16.mxu0 0
    %255 = vmatpush1.bf16.xpose.msra.mxu0 0
    %256 = vmatprep.subr.bf16.mxu0 0
    %257 = vmatpush1.bf16.xpose.msra.mxu0 0
    %258 = vmatprep.subr.bf16.mxu0 0
    %259 = vmatpush1.bf16.xpose.msra.mxu0 0
    %260 = vmatprep.subr.bf16.mxu0 0
    %261 = vmatpush1.bf16.xpose.msra.mxu0 0
    %262 = vmatprep.subr.bf16.mxu0 0
    %263 = vmatpush1.bf16.xpose.msra.mxu0 0
    %264 = vmatprep.subr.bf16.mxu0 0
    %265 = vmatpush1.bf16.xpose.msra.mxu0 0
    %266 = vmatprep.subr.bf16.mxu0 0
    %267 = vmatpush1.bf16.xpose.msra.mxu0 0
    %268 = vmatprep.subr.bf16.mxu0 0
    %269 = vmatpush1.bf16.xpose.msra.mxu0 0
    %270 = vmatprep.subr.bf16.mxu0 0
    %271 = vmatpush1.bf16.xpose.msra.mxu0 0
    %272 = vmatprep.subr.bf16.mxu0 0
    %273 = vmatpush1.bf16.xpose.msra.mxu0 0
    %274 = vmatprep.subr.bf16.mxu0 0
    %275 = vmatpush1.bf16.xpose.msra.mxu0 0
    %276 = vmatprep.subr.bf16.mxu0 0
    %277 = vmatpush1.bf16.xpose.msra.mxu0 0
    %278 = vmatprep.subr.bf16.mxu0 0
    %279 = vmatpush1.bf16.xpose.msra.mxu0 0
    %280 = vmatprep.subr.bf16.mxu0 0
    %281 = vmatpush1.bf16.xpose.msra.mxu0 0
    %282 = vmatprep.mubr.bf16.mxu0 0
    %283 = vmatmul.mubr.bf16.gmra.mrb[0].mxu0 %v245
    %v284 = vpop.f32.mrb[0].mxu0
    %v285 = vadd.f32 0.0, %v284
    %v286 = vpop.f32.mrb[0].mxu0
    %v287 = vpop.f32.mrb[0].mxu0
    %v288 = vpop.f32.mrb[0].mxu0
    %289 = vdwg.mxu0
    %v290 = vsel %vm184, 1, 0
    %vm291 = vcmp.eq.s32.totalorder %v290, 1
    %v292 = vsel %vm291, %v236, -1000000.0
    %v293 = vsel %vm291, %v285, -1000000.0
    %v294 = vsel %vm194, %v292, -inf
    %295 = vmax.xlane.f32.xlu0 %v294
    %v296 = vpop.xlane.xlu0 %295
    %v297 = vsel %vm194, %v293, -inf
    %298 = vmax.xlane.f32.xlu0 %v297
    %v299 = vpop.xlane.xlu0 %298
    %v300 = vsub.f32 %v292, %v296
    %v301 = vsub.f32 %v293, %v299
    %v302 = vmul.f32 %v300, 1.442695
    %v303 = vpow.pop %v302
    %v304 = vmul.f32 %v301, 1.442695
    %v305 = vpow.pop %v304
    %v306 = vsel %vm194, %v303, 0.0
    %307 = vadd.xlane.f32.xlu0 %v306
    %v308 = vpop.xlane.xlu0 %307
    %v309 = vsel %vm194, %v305, 0.0
    %310 = vadd.xlane.f32.xlu0 %v309
    %v311 = vpop.xlane.xlu0 %310
    %v312 = vrcp.pop %v308
    %v313 = vrcp.pop %v311
    %v314 = vmul.f32 %v303, %v312
    %v315 = vmul.f32 %v305, %v313
    %v316 = vpack.c.bf16 %v314, %v314
    %v317 = vpack.c.bf16 %v315, %v315
    %318 = vrot.lane.b32.xlu0 %v189, 64
    %v319 = vpop.permute.xlu0 %318
    %v321 = vsel %vm194, %v316, 0
    %vm323 = vcmask 1043456
    %v325 = vsel %vm323, %v319, 0
    %327 = vmatprep.subr.bf16.mxu0 0
    %328 = vmatpush1.bf16.msra.mxu0 %v325
    %329 = vmatprep.subr.bf16.mxu0 0
    %330 = vmatpush1.bf16.msra.mxu0 0
    %331 = vmatprep.subr.bf16.mxu0 0
    %332 = vmatpush1.bf16.msra.mxu0 0
    %333 = vmatprep.subr.bf16.mxu0 0
    %334 = vmatpush1.bf16.msra.mxu0 0
    %335 = vmatprep.subr.bf16.mxu0 0
    %336 = vmatpush1.bf16.msra.mxu0 0
    %337 = vmatprep.subr.bf16.mxu0 0
    %338 = vmatpush1.bf16.msra.mxu0 0
    %339 = vmatprep.subr.bf16.mxu0 0
    %340 = vmatpush1.bf16.msra.mxu0 0
    %341 = vmatprep.subr.bf16.mxu0 0
    %342 = vmatpush1.bf16.msra.mxu0 0
    %343 = vmatprep.subr.bf16.mxu0 0
    %344 = vmatpush1.bf16.msra.mxu0 0
    %345 = vmatprep.subr.bf16.mxu0 0
    %346 = vmatpush1.bf16.msra.mxu0 0
    %347 = vmatprep.subr.bf16.mxu0 0
    %348 = vmatpush1.bf16.msra.mxu0 0
    %349 = vmatprep.subr.bf16.mxu0 0
    %350 = vmatpush1.bf16.msra.mxu0 0
    %351 = vmatprep.subr.bf16.mxu0 0
    %352 = vmatpush1.bf16.msra.mxu0 0
    %353 = vmatprep.subr.bf16.mxu0 0
    %354 = vmatpush1.bf16.msra.mxu0 0
    %355 = vmatprep.subr.bf16.mxu0 0
    %356 = vmatpush1.bf16.msra.mxu0 0
    %357 = vmatprep.subr.bf16.mxu0 0
    %358 = vmatpush1.bf16.msra.mxu0 0
    %359 = vmatprep.mubr.bf16.mxu0 0
    %360 = vmatmul.mubr.bf16.gmra.mrb[0].mxu0 %v321
    %v361 = vpop.f32.mrb[0].mxu0
    %v362 = vadd.f32 0.0, %v361
    %v363 = vpop.f32.mrb[0].mxu0
    %v364 = vpop.f32.mrb[0].mxu0
    %v365 = vpop.f32.mrb[0].mxu0
    %366 = vdwg.mxu0
    %367 = vrot.lane.b32.xlu0 %v190, 64
    %v368 = vpop.permute.xlu0 %367
    %v370 = vsel %vm194, %v317, 0
    %v373 = vsel %vm323, %v368, 0
    %375 = vmatprep.subr.bf16.mxu0 0
    %376 = vmatpush1.bf16.msra.mxu0 %v373
    %377 = vmatprep.subr.bf16.mxu0 0
    %378 = vmatpush1.bf16.msra.mxu0 0
    %379 = vmatprep.subr.bf16.mxu0 0
    %380 = vmatpush1.bf16.msra.mxu0 0
    %381 = vmatprep.subr.bf16.mxu0 0
    %382 = vmatpush1.bf16.msra.mxu0 0
    %383 = vmatprep.subr.bf16.mxu0 0
    %384 = vmatpush1.bf16.msra.mxu0 0
    %385 = vmatprep.subr.bf16.mxu0 0
    %386 = vmatpush1.bf16.msra.mxu0 0
    %387 = vmatprep.subr.bf16.mxu0 0
    %388 = vmatpush1.bf16.msra.mxu0 0
    %389 = vmatprep.subr.bf16.mxu0 0
    %390 = vmatpush1.bf16.msra.mxu0 0
    %391 = vmatprep.subr.bf16.mxu0 0
    %392 = vmatpush1.bf16.msra.mxu0 0
    %393 = vmatprep.subr.bf16.mxu0 0
    %394 = vmatpush1.bf16.msra.mxu0 0
    %395 = vmatprep.subr.bf16.mxu0 0
    %396 = vmatpush1.bf16.msra.mxu0 0
    %397 = vmatprep.subr.bf16.mxu0 0
    %398 = vmatpush1.bf16.msra.mxu0 0
    %399 = vmatprep.subr.bf16.mxu0 0
    %400 = vmatpush1.bf16.msra.mxu0 0
    %401 = vmatprep.subr.bf16.mxu0 0
    %402 = vmatpush1.bf16.msra.mxu0 0
    %403 = vmatprep.subr.bf16.mxu0 0
    %404 = vmatpush1.bf16.msra.mxu0 0
    %405 = vmatprep.subr.bf16.mxu0 0
    %406 = vmatpush1.bf16.msra.mxu0 0
    %407 = vmatprep.mubr.bf16.mxu0 0
    %408 = vmatmul.mubr.bf16.gmra.mrb[0].mxu0 %v370
    %v409 = vpop.f32.mrb[0].mxu0
    %v410 = vadd.f32 0.0, %v409
    %v411 = vpop.f32.mrb[0].mxu0
    %v412 = vpop.f32.mrb[0].mxu0
    %v413 = vpop.f32.mrb[0].mxu0
    %414 = vdwg.mxu0
    %v415 = vpack.c.bf16 %v410, %v362
    %416 = vrot.lane.b32.xlu0 %v189, 120
    %v417 = vpop.permute.xlu0 %416
    %418 = vrot.lane.b32.xlu0 %v189, 88
    %v419 = vpop.permute.xlu0 %418
    %v421 = vsel %vm194, %v417, 0
    %v424 = vsel %vm194, %v419, 0
    %426 = vmatprep.subr.bf16.mxu0 0
    %427 = vmatpush1.bf16.xpose.msra.mxu0 %v424
    %428 = vmatprep.subr.bf16.mxu0 0
    %429 = vmatpush1.bf16.xpose.msra.mxu0 0
    %430 = vmatprep.subr.bf16.mxu0 0
    %431 = vmatpush1.bf16.xpose.msra.mxu0 0
    %432 = vmatprep.subr.bf16.mxu0 0
    %433 = vmatpush1.bf16.xpose.msra.mxu0 0
    %434 = vmatprep.subr.bf16.mxu0 0
    %435 = vmatpush1.bf16.xpose.msra.mxu0 0
    %436 = vmatprep.subr.bf16.mxu0 0
    %437 = vmatpush1.bf16.xpose.msra.mxu0 0
    %438 = vmatprep.subr.bf16.mxu0 0
    %439 = vmatpush1.bf16.xpose.msra.mxu0 0
    %440 = vmatprep.subr.bf16.mxu0 0
    %441 = vmatpush1.bf16.xpose.msra.mxu0 0
    %442 = vmatprep.subr.bf16.mxu0 0
    %443 = vmatpush1.bf16.xpose.msra.mxu0 0
    %444 = vmatprep.subr.bf16.mxu0 0
    %445 = vmatpush1.bf16.xpose.msra.mxu0 0
    %446 = vmatprep.subr.bf16.mxu0 0
    %447 = vmatpush1.bf16.xpose.msra.mxu0 0
    %448 = vmatprep.subr.bf16.mxu0 0
    %449 = vmatpush1.bf16.xpose.msra.mxu0 0
    %450 = vmatprep.subr.bf16.mxu0 0
    %451 = vmatpush1.bf16.xpose.msra.mxu0 0
    %452 = vmatprep.subr.bf16.mxu0 0
    %453 = vmatpush1.bf16.xpose.msra.mxu0 0
    %454 = vmatprep.subr.bf16.mxu0 0
    %455 = vmatpush1.bf16.xpose.msra.mxu0 0
    %456 = vmatprep.subr.bf16.mxu0 0
    %457 = vmatpush1.bf16.xpose.msra.mxu0 0
    %458 = vmatprep.mubr.bf16.mxu0 0
    %459 = vmatmul.mubr.bf16.gmra.mrb[0].mxu0 %v421
    %v460 = vpop.f32.mrb[0].mxu0
    %v461 = vadd.f32 0.0, %v460
    %v462 = vpop.f32.mrb[0].mxu0
    %v463 = vpop.f32.mrb[0].mxu0
    %v464 = vpop.f32.mrb[0].mxu0
    %465 = vdwg.mxu0
    %466 = vrot.lane.b32.xlu0 %v190, 120
    %v467 = vpop.permute.xlu0 %466
    %468 = vrot.lane.b32.xlu0 %v190, 88
    %v469 = vpop.permute.xlu0 %468
    %v471 = vsel %vm194, %v467, 0
    %v474 = vsel %vm194, %v469, 0
    %476 = vmatprep.subr.bf16.mxu0 0
    %477 = vmatpush1.bf16.xpose.msra.mxu0 %v474
    %478 = vmatprep.subr.bf16.mxu0 0
    %479 = vmatpush1.bf16.xpose.msra.mxu0 0
    %480 = vmatprep.subr.bf16.mxu0 0
    %481 = vmatpush1.bf16.xpose.msra.mxu0 0
    %482 = vmatprep.subr.bf16.mxu0 0
    %483 = vmatpush1.bf16.xpose.msra.mxu0 0
    %484 = vmatprep.subr.bf16.mxu0 0
    %485 = vmatpush1.bf16.xpose.msra.mxu0 0
    %486 = vmatprep.subr.bf16.mxu0 0
    %487 = vmatpush1.bf16.xpose.msra.mxu0 0
    %488 = vmatprep.subr.bf16.mxu0 0
    %489 = vmatpush1.bf16.xpose.msra.mxu0 0
    %490 = vmatprep.subr.bf16.mxu0 0
    %491 = vmatpush1.bf16.xpose.msra.mxu0 0
    %492 = vmatprep.subr.bf16.mxu0 0
    %493 = vmatpush1.bf16.xpose.msra.mxu0 0
    %494 = vmatprep.subr.bf16.mxu0 0
    %495 = vmatpush1.bf16.xpose.msra.mxu0 0
    %496 = vmatprep.subr.bf16.mxu0 0
    %497 = vmatpush1.bf16.xpose.msra.mxu0 0
    %498 = vmatprep.subr.bf16.mxu0 0
    %499 = vmatpush1.bf16.xpose.msra.mxu0 0
    %500 = vmatprep.subr.bf16.mxu0 0
    %501 = vmatpush1.bf16.xpose.msra.mxu0 0
    %502 = vmatprep.subr.bf16.mxu0 0
    %503 = vmatpush1.bf16.xpose.msra.mxu0 0
    %504 = vmatprep.subr.bf16.mxu0 0
    %505 = vmatpush1.bf16.xpose.msra.mxu0 0
    %506 = vmatprep.subr.bf16.mxu0 0
    %507 = vmatpush1.bf16.xpose.msra.mxu0 0
    %508 = vmatprep.mubr.bf16.mxu0 0
    %509 = vmatmul.mubr.bf16.gmra.mrb[0].mxu0 %v471
    %v510 = vpop.f32.mrb[0].mxu0
    %v511 = vadd.f32 0.0, %v510
    %v512 = vpop.f32.mrb[0].mxu0
    %v513 = vpop.f32.mrb[0].mxu0
    %v514 = vpop.f32.mrb[0].mxu0
    %515 = vdwg.mxu0
    %v516 = vsel %vm291, %v461, -1000000.0
    %v517 = vsel %vm291, %v511, -1000000.0
    %v518 = vsel %vm194, %v516, -inf
    %519 = vmax.xlane.f32.xlu0 %v518
    %v520 = vpop.xlane.xlu0 %519
    %v521 = vsel %vm194, %v517, -inf
    %522 = vmax.xlane.f32.xlu0 %v521
    %v523 = vpop.xlane.xlu0 %522
    %v524 = vsub.f32 %v516, %v520
    %v525 = vsub.f32 %v517, %v523
    %v526 = vmul.f32 %v524, 1.442695
    %v527 = vpow.pop %v526
    %v528 = vmul.f32 %v525, 1.442695
    %v529 = vpow.pop %v528
    %v530 = vsel %vm194, %v527, 0.0
    %531 = vadd.xlane.f32.xlu0 %v530
    %v532 = vpop.xlane.xlu0 %531
    %v533 = vsel %vm194, %v529, 0.0
    %534 = vadd.xlane.f32.xlu0 %v533
    %v535 = vpop.xlane.xlu0 %534
    %v536 = vrcp.pop %v532
    %v537 = vrcp.pop %v535
    %v538 = vmul.f32 %v527, %v536
    %v539 = vmul.f32 %v529, %v537
    %v540 = vpack.c.bf16 %v538, %v538
    %v541 = vpack.c.bf16 %v539, %v539
    %542 = vrot.lane.b32.xlu0 %v189, 56
    %v543 = vpop.permute.xlu0 %542
    %v545 = vsel %vm194, %v540, 0
    %v548 = vsel %vm323, %v543, 0
    %550 = vmatprep.subr.bf16.mxu0 0
    %551 = vmatpush1.bf16.msra.mxu0 %v548
    %552 = vmatprep.subr.bf16.mxu0 0
    %553 = vmatpush1.bf16.msra.mxu0 0
    %554 = vmatprep.subr.bf16.mxu0 0
    %555 = vmatpush1.bf16.msra.mxu0 0
    %556 = vmatprep.subr.bf16.mxu0 0
    %557 = vmatpush1.bf16.msra.mxu0 0
    %558 = vmatprep.subr.bf16.mxu0 0
    %559 = vmatpush1.bf16.msra.mxu0 0
    %560 = vmatprep.subr.bf16.mxu0 0
    %561 = vmatpush1.bf16.msra.mxu0 0
    %562 = vmatprep.subr.bf16.mxu0 0
    %563 = vmatpush1.bf16.msra.mxu0 0
    %564 = vmatprep.subr.bf16.mxu0 0
    %565 = vmatpush1.bf16.msra.mxu0 0
    %566 = vmatprep.subr.bf16.mxu0 0
    %567 = vmatpush1.bf16.msra.mxu0 0
    %568 = vmatprep.subr.bf16.mxu0 0
    %569 = vmatpush1.bf16.msra.mxu0 0
    %570 = vmatprep.subr.bf16.mxu0 0
    %571 = vmatpush1.bf16.msra.mxu0 0
    %572 = vmatprep.subr.bf16.mxu0 0
    %573 = vmatpush1.bf16.msra.mxu0 0
    %574 = vmatprep.subr.bf16.mxu0 0
    %575 = vmatpush1.bf16.msra.mxu0 0
    %576 = vmatprep.subr.bf16.mxu0 0
    %577 = vmatpush1.bf16.msra.mxu0 0
    %578 = vmatprep.subr.bf16.mxu0 0
    %579 = vmatpush1.bf16.msra.mxu0 0
    %580 = vmatprep.subr.bf16.mxu0 0
    %581 = vmatpush1.bf16.msra.mxu0 0
    %582 = vmatprep.mubr.bf16.mxu0 0
    %583 = vmatmul.mubr.bf16.gmra.mrb[0].mxu0 %v545
    %v584 = vpop.f32.mrb[0].mxu0
    %v585 = vadd.f32 0.0, %v584
    %v586 = vpop.f32.mrb[0].mxu0
    %v587 = vpop.f32.mrb[0].mxu0
    %v588 = vpop.f32.mrb[0].mxu0
    %589 = vdwg.mxu0
    %590 = vrot.lane.b32.xlu0 %v190, 56
    %v591 = vpop.permute.xlu0 %590
    %v593 = vsel %vm194, %v541, 0
    %v596 = vsel %vm323, %v591, 0
    %598 = vmatprep.subr.bf16.mxu0 0
    %599 = vmatpush1.bf16.msra.mxu0 %v596
    %600 = vmatprep.subr.bf16.mxu0 0
    %601 = vmatpush1.bf16.msra.mxu0 0
    %602 = vmatprep.subr.bf16.mxu0 0
    %603 = vmatpush1.bf16.msra.mxu0 0
    %604 = vmatprep.subr.bf16.mxu0 0
    %605 = vmatpush1.bf16.msra.mxu0 0
    %606 = vmatprep.subr.bf16.mxu0 0
    %607 = vmatpush1.bf16.msra.mxu0 0
    %608 = vmatprep.subr.bf16.mxu0 0
    %609 = vmatpush1.bf16.msra.mxu0 0
    %610 = vmatprep.subr.bf16.mxu0 0
    %611 = vmatpush1.bf16.msra.mxu0 0
    %612 = vmatprep.subr.bf16.mxu0 0
    %613 = vmatpush1.bf16.msra.mxu0 0
    %614 = vmatprep.subr.bf16.mxu0 0
    %615 = vmatpush1.bf16.msra.mxu0 0
    %616 = vmatprep.subr.bf16.mxu0 0
    %617 = vmatpush1.bf16.msra.mxu0 0
    %618 = vmatprep.subr.bf16.mxu0 0
    %619 = vmatpush1.bf16.msra.mxu0 0
    %620 = vmatprep.subr.bf16.mxu0 0
    %621 = vmatpush1.bf16.msra.mxu0 0
    %622 = vmatprep.subr.bf16.mxu0 0
    %623 = vmatpush1.bf16.msra.mxu0 0
    %624 = vmatprep.subr.bf16.mxu0 0
    %625 = vmatpush1.bf16.msra.mxu0 0
    %626 = vmatprep.subr.bf16.mxu0 0
    %627 = vmatpush1.bf16.msra.mxu0 0
    %628 = vmatprep.subr.bf16.mxu0 0
    %629 = vmatpush1.bf16.msra.mxu0 0
    %630 = vmatprep.mubr.bf16.mxu0 0
    %631 = vmatmul.mubr.bf16.gmra.mrb[0].mxu0 %v593
    %v632 = vpop.f32.mrb[0].mxu0
    %v633 = vadd.f32 0.0, %v632
    %v634 = vpop.f32.mrb[0].mxu0
    %v635 = vpop.f32.mrb[0].mxu0
    %v636 = vpop.f32.mrb[0].mxu0
    %637 = vdwg.mxu0
    %v638 = vpack.c.bf16 %v633, %v585
    %v640 = vsel %vm194, %v638, 0
    %v643 = vsel %vm323, %v186, 0
    %645 = vmatprep.subr.bf16.mxu0 0
    %646 = vmatpush1.bf16.msra.mxu0 %v643
    %647 = vmatprep.subr.bf16.mxu0 0
    %648 = vmatpush1.bf16.msra.mxu0 0
    %649 = vmatprep.subr.bf16.mxu0 0
    %650 = vmatpush1.bf16.msra.mxu0 0
    %651 = vmatprep.subr.bf16.mxu0 0
    %652 = vmatpush1.bf16.msra.mxu0 0
    %653 = vmatprep.subr.bf16.mxu0 0
    %654 = vmatpush1.bf16.msra.mxu0 0
    %655 = vmatprep.subr.bf16.mxu0 0
    %656 = vmatpush1.bf16.msra.mxu0 0
    %657 = vmatprep.subr.bf16.mxu0 0
    %658 = vmatpush1.bf16.msra.mxu0 0
    %659 = vmatprep.subr.bf16.mxu0 0
    %660 = vmatpush1.bf16.msra.mxu0 0
    %661 = vmatprep.subr.bf16.mxu0 0
    %662 = vmatpush1.bf16.msra.mxu0 0
    %663 = vmatprep.subr.bf16.mxu0 0
    %664 = vmatpush1.bf16.msra.mxu0 0
    %665 = vmatprep.subr.bf16.mxu0 0
    %666 = vmatpush1.bf16.msra.mxu0 0
    %667 = vmatprep.subr.bf16.mxu0 0
    %668 = vmatpush1.bf16.msra.mxu0 0
    %669 = vmatprep.subr.bf16.mxu0 0
    %670 = vmatpush1.bf16.msra.mxu0 0
    %671 = vmatprep.subr.bf16.mxu0 0
    %672 = vmatpush1.bf16.msra.mxu0 0
    %673 = vmatprep.subr.bf16.mxu0 0
    %674 = vmatpush1.bf16.msra.mxu0 0
    %675 = vmatprep.subr.bf16.mxu0 0
    %676 = vmatpush1.bf16.msra.mxu0 0
    %677 = vmatprep.mubr.bf16.mxu0 0
    %678 = vmatmul.mubr.bf16.gmra.mrb[0].mxu0 %v640
    %v679 = vpop.f32.mrb[0].mxu0
    %v680 = vadd.f32 0.0, %v679
    %v681 = vpop.f32.mrb[0].mxu0
    %v682 = vpop.f32.mrb[0].mxu0
    %v683 = vadd.f32 0.0, %v682
    %v684 = vpop.f32.mrb[0].mxu0
    %685 = vdwg.mxu0
    %v687 = vsel %vm194, %v415, 0
    %v690 = vsel %vm323, %v185, 0
    %692 = vmatprep.subr.bf16.mxu0 0
    %693 = vmatpush1.bf16.msra.mxu0 %v690
    %694 = vmatprep.subr.bf16.mxu0 0
    %695 = vmatpush1.bf16.msra.mxu0 0
    %696 = vmatprep.subr.bf16.mxu0 0
    %697 = vmatpush1.bf16.msra.mxu0 0
    %698 = vmatprep.subr.bf16.mxu0 0
    %699 = vmatpush1.bf16.msra.mxu0 0
    %700 = vmatprep.subr.bf16.mxu0 0
    %701 = vmatpush1.bf16.msra.mxu0 0
    %702 = vmatprep.subr.bf16.mxu0 0
    %703 = vmatpush1.bf16.msra.mxu0 0
    %704 = vmatprep.subr.bf16.mxu0 0
    %705 = vmatpush1.bf16.msra.mxu0 0
    %706 = vmatprep.subr.bf16.mxu0 0
    %707 = vmatpush1.bf16.msra.mxu0 0
    %708 = vmatprep.subr.bf16.mxu0 0
    %709 = vmatpush1.bf16.msra.mxu0 0
    %710 = vmatprep.subr.bf16.mxu0 0
    %711 = vmatpush1.bf16.msra.mxu0 0
    %712 = vmatprep.subr.bf16.mxu0 0
    %713 = vmatpush1.bf16.msra.mxu0 0
    %714 = vmatprep.subr.bf16.mxu0 0
    %715 = vmatpush1.bf16.msra.mxu0 0
    %716 = vmatprep.subr.bf16.mxu0 0
    %717 = vmatpush1.bf16.msra.mxu0 0
    %718 = vmatprep.subr.bf16.mxu0 0
    %719 = vmatpush1.bf16.msra.mxu0 0
    %720 = vmatprep.subr.bf16.mxu0 0
    %721 = vmatpush1.bf16.msra.mxu0 0
    %722 = vmatprep.subr.bf16.mxu0 0
    %723 = vmatpush1.bf16.msra.mxu0 0
    %724 = vmatprep.mubr.bf16.mxu0 0
    %725 = vmatmul.mubr.bf16.gmra.mrb[0].mxu0 %v687
    %v726 = vpop.f32.mrb[0].mxu0
    %v727 = vadd.f32 %v680, %v726
    %v728 = vpop.f32.mrb[0].mxu0
    %v729 = vpop.f32.mrb[0].mxu0
    %v730 = vadd.f32 %v683, %v729
    %v731 = vpop.f32.mrb[0].mxu0
    %732 = vdwg.mxu0
    %733 = vrot.lane.b32.xlu0 %v189, 112
    %v734 = vpop.permute.xlu0 %733
    %735 = vrot.lane.b32.xlu0 %v189, 80
    %v736 = vpop.permute.xlu0 %735
    %v738 = vsel %vm194, %v734, 0
    %v741 = vsel %vm194, %v736, 0
    %743 = vmatprep.subr.bf16.mxu0 0
    %744 = vmatpush1.bf16.xpose.msra.mxu0 %v741
    %745 = vmatprep.subr.bf16.mxu0 0
    %746 = vmatpush1.bf16.xpose.msra.mxu0 0
    %747 = vmatprep.subr.bf16.mxu0 0
    %748 = vmatpush1.bf16.xpose.msra.mxu0 0
    %749 = vmatprep.subr.bf16.mxu0 0
    %750 = vmatpush1.bf16.xpose.msra.mxu0 0
    %751 = vmatprep.subr.bf16.mxu0 0
    %752 = vmatpush1.bf16.xpose.msra.mxu0 0
    %753 = vmatprep.subr.bf16.mxu0 0
    %754 = vmatpush1.bf16.xpose.msra.mxu0 0
    %755 = vmatprep.subr.bf16.mxu0 0
    %756 = vmatpush1.bf16.xpose.msra.mxu0 0
    %757 = vmatprep.subr.bf16.mxu0 0
    %758 = vmatpush1.bf16.xpose.msra.mxu0 0
    %759 = vmatprep.subr.bf16.mxu0 0
    %760 = vmatpush1.bf16.xpose.msra.mxu0 0
    %761 = vmatprep.subr.bf16.mxu0 0
    %762 = vmatpush1.bf16.xpose.msra.mxu0 0
    %763 = vmatprep.subr.bf16.mxu0 0
    %764 = vmatpush1.bf16.xpose.msra.mxu0 0
    %765 = vmatprep.subr.bf16.mxu0 0
    %766 = vmatpush1.bf16.xpose.msra.mxu0 0
    %767 = vmatprep.subr.bf16.mxu0 0
    %768 = vmatpush1.bf16.xpose.msra.mxu0 0
    %769 = vmatprep.subr.bf16.mxu0 0
    %770 = vmatpush1.bf16.xpose.msra.mxu0 0
    %771 = vmatprep.subr.bf16.mxu0 0
    %772 = vmatpush1.bf16.xpose.msra.mxu0 0
    %773 = vmatprep.subr.bf16.mxu0 0
    %774 = vmatpush1.bf16.xpose.msra.mxu0 0
    %775 = vmatprep.mubr.bf16.mxu0 0
    %776 = vmatmul.mubr.bf16.gmra.mrb[0].mxu0 %v738
    %v777 = vpop.f32.mrb[0].mxu0
    %v778 = vadd.f32 0.0, %v777
    %v779 = vpop.f32.mrb[0].mxu0
    %v780 = vpop.f32.mrb[0].mxu0
    %v781 = vpop.f32.mrb[0].mxu0
    %782 = vdwg.mxu0
    %783 = vrot.lane.b32.xlu0 %v190, 112
    %v784 = vpop.permute.xlu0 %783
    %785 = vrot.lane.b32.xlu0 %v190, 80
    %v786 = vpop.permute.xlu0 %785
    %v788 = vsel %vm194, %v784, 0
    %v791 = vsel %vm194, %v786, 0
    %793 = vmatprep.subr.bf16.mxu0 0
    %794 = vmatpush1.bf16.xpose.msra.mxu0 %v791
    %795 = vmatprep.subr.bf16.mxu0 0
    %796 = vmatpush1.bf16.xpose.msra.mxu0 0
    %797 = vmatprep.subr.bf16.mxu0 0
    %798 = vmatpush1.bf16.xpose.msra.mxu0 0
    %799 = vmatprep.subr.bf16.mxu0 0
    %800 = vmatpush1.bf16.xpose.msra.mxu0 0
    %801 = vmatprep.subr.bf16.mxu0 0
    %802 = vmatpush1.bf16.xpose.msra.mxu0 0
    %803 = vmatprep.subr.bf16.mxu0 0
    %804 = vmatpush1.bf16.xpose.msra.mxu0 0
    %805 = vmatprep.subr.bf16.mxu0 0
    %806 = vmatpush1.bf16.xpose.msra.mxu0 0
    %807 = vmatprep.subr.bf16.mxu0 0
    %808 = vmatpush1.bf16.xpose.msra.mxu0 0
    %809 = vmatprep.subr.bf16.mxu0 0
    %810 = vmatpush1.bf16.xpose.msra.mxu0 0
    %811 = vmatprep.subr.bf16.mxu0 0
    %812 = vmatpush1.bf16.xpose.msra.mxu0 0
    %813 = vmatprep.subr.bf16.mxu0 0
    %814 = vmatpush1.bf16.xpose.msra.mxu0 0
    %815 = vmatprep.subr.bf16.mxu0 0
    %816 = vmatpush1.bf16.xpose.msra.mxu0 0
    %817 = vmatprep.subr.bf16.mxu0 0
    %818 = vmatpush1.bf16.xpose.msra.mxu0 0
    %819 = vmatprep.subr.bf16.mxu0 0
    %820 = vmatpush1.bf16.xpose.msra.mxu0 0
    %821 = vmatprep.subr.bf16.mxu0 0
    %822 = vmatpush1.bf16.xpose.msra.mxu0 0
    %823 = vmatprep.subr.bf16.mxu0 0
    %824 = vmatpush1.bf16.xpose.msra.mxu0 0
    %825 = vmatprep.mubr.bf16.mxu0 0
    %826 = vmatmul.mubr.bf16.gmra.mrb[0].mxu0 %v788
    %v827 = vpop.f32.mrb[0].mxu0
    %v828 = vadd.f32 0.0, %v827
    %v829 = vpop.f32.mrb[0].mxu0
    %v830 = vpop.f32.mrb[0].mxu0
    %v831 = vpop.f32.mrb[0].mxu0
    %832 = vdwg.mxu0
    %v833 = vsel %vm291, %v778, -1000000.0
    %v834 = vsel %vm291, %v828, -1000000.0
    %v835 = vsel %vm194, %v833, -inf
    %836 = vmax.xlane.f32.xlu0 %v835
    %v837 = vpop.xlane.xlu0 %836
    %v838 = vsel %vm194, %v834, -inf
    %839 = vmax.xlane.f32.xlu0 %v838
    %v840 = vpop.xlane.xlu0 %839
    %v841 = vsub.f32 %v833, %v837
    %v842 = vsub.f32 %v834, %v840
    %v843 = vmul.f32 %v841, 1.442695
    %v844 = vpow.pop %v843
    %v845 = vmul.f32 %v842, 1.442695
    %v846 = vpow.pop %v845
    %v847 = vsel %vm194, %v844, 0.0
    %848 = vadd.xlane.f32.xlu0 %v847
    %v849 = vpop.xlane.xlu0 %848
    %v850 = vsel %vm194, %v846, 0.0
    %851 = vadd.xlane.f32.xlu0 %v850
    %v852 = vpop.xlane.xlu0 %851
    %v853 = vrcp.pop %v849
    %v854 = vrcp.pop %v852
    %v855 = vmul.f32 %v844, %v853
    %v856 = vmul.f32 %v846, %v854
    %v857 = vpack.c.bf16 %v855, %v855
    %v858 = vpack.c.bf16 %v856, %v856
    %859 = vrot.lane.b32.xlu0 %v189, 48
    %v860 = vpop.permute.xlu0 %859
    %v862 = vsel %vm194, %v857, 0
    %v865 = vsel %vm323, %v860, 0
    %867 = vmatprep.subr.bf16.mxu0 0
    %868 = vmatpush1.bf16.msra.mxu0 %v865
    %869 = vmatprep.subr.bf16.mxu0 0
    %870 = vmatpush1.bf16.msra.mxu0 0
    %871 = vmatprep.subr.bf16.mxu0 0
    %872 = vmatpush1.bf16.msra.mxu0 0
    %873 = vmatprep.subr.bf16.mxu0 0
    %874 = vmatpush1.bf16.msra.mxu0 0
    %875 = vmatprep.subr.bf16.mxu0 0
    %876 = vmatpush1.bf16.msra.mxu0 0
    %877 = vmatprep.subr.bf16.mxu0 0
    %878 = vmatpush1.bf16.msra.mxu0 0
    %879 = vmatprep.subr.bf16.mxu0 0
    %880 = vmatpush1.bf16.msra.mxu0 0
    %881 = vmatprep.subr.bf16.mxu0 0
    %882 = vmatpush1.bf16.msra.mxu0 0
    %883 = vmatprep.subr.bf16.mxu0 0
    %884 = vmatpush1.bf16.msra.mxu0 0
    %885 = vmatprep.subr.bf16.mxu0 0
    %886 = vmatpush1.bf16.msra.mxu0 0
    %887 = vmatprep.subr.bf16.mxu0 0
    %888 = vmatpush1.bf16.msra.mxu0 0
    %889 = vmatprep.subr.bf16.mxu0 0
    %890 = vmatpush1.bf16.msra.mxu0 0
    %891 = vmatprep.subr.bf16.mxu0 0
    %892 = vmatpush1.bf16.msra.mxu0 0
    %893 = vmatprep.subr.bf16.mxu0 0
    %894 = vmatpush1.bf16.msra.mxu0 0
    %895 = vmatprep.subr.bf16.mxu0 0
    %896 = vmatpush1.bf16.msra.mxu0 0
    %897 = vmatprep.subr.bf16.mxu0 0
    %898 = vmatpush1.bf16.msra.mxu0 0
    %899 = vmatprep.mubr.bf16.mxu0 0
    %900 = vmatmul.mubr.bf16.gmra.mrb[0].mxu0 %v862
    %v901 = vpop.f32.mrb[0].mxu0
    %v902 = vadd.f32 0.0, %v901
    %v903 = vpop.f32.mrb[0].mxu0
    %v904 = vpop.f32.mrb[0].mxu0
    %v905 = vpop.f32.mrb[0].mxu0
    %906 = vdwg.mxu0
    %907 = vrot.lane.b32.xlu0 %v190, 48
    %v908 = vpop.permute.xlu0 %907
    %v910 = vsel %vm194, %v858, 0
    %v913 = vsel %vm323, %v908, 0
    %915 = vmatprep.subr.bf16.mxu0 0
    %916 = vmatpush1.bf16.msra.mxu0 %v913
    %917 = vmatprep.subr.bf16.mxu0 0
    %918 = vmatpush1.bf16.msra.mxu0 0
    %919 = vmatprep.subr.bf16.mxu0 0
    %920 = vmatpush1.bf16.msra.mxu0 0
    %921 = vmatprep.subr.bf16.mxu0 0
    %922 = vmatpush1.bf16.msra.mxu0 0
    %923 = vmatprep.subr.bf16.mxu0 0
    %924 = vmatpush1.bf16.msra.mxu0 0
    %925 = vmatprep.subr.bf16.mxu0 0
    %926 = vmatpush1.bf16.msra.mxu0 0
    %927 = vmatprep.subr.bf16.mxu0 0
    %928 = vmatpush1.bf16.msra.mxu0 0
    %929 = vmatprep.subr.bf16.mxu0 0
    %930 = vmatpush1.bf16.msra.mxu0 0
    %931 = vmatprep.subr.bf16.mxu0 0
    %932 = vmatpush1.bf16.msra.mxu0 0
    %933 = vmatprep.subr.bf16.mxu0 0
    %934 = vmatpush1.bf16.msra.mxu0 0
    %935 = vmatprep.subr.bf16.mxu0 0
    %936 = vmatpush1.bf16.msra.mxu0 0
    %937 = vmatprep.subr.bf16.mxu0 0
    %938 = vmatpush1.bf16.msra.mxu0 0
    %939 = vmatprep.subr.bf16.mxu0 0
    %940 = vmatpush1.bf16.msra.mxu0 0
    %941 = vmatprep.subr.bf16.mxu0 0
    %942 = vmatpush1.bf16.msra.mxu0 0
    %943 = vmatprep.subr.bf16.mxu0 0
    %944 = vmatpush1.bf16.msra.mxu0 0
    %945 = vmatprep.subr.bf16.mxu0 0
    %946 = vmatpush1.bf16.msra.mxu0 0
    %947 = vmatprep.mubr.bf16.mxu0 0
    %948 = vmatmul.mubr.bf16.gmra.mrb[0].mxu0 %v910
    %v949 = vpop.f32.mrb[0].mxu0
    %v950 = vadd.f32 0.0, %v949
    %v951 = vpop.f32.mrb[0].mxu0
    %v952 = vpop.f32.mrb[0].mxu0
    %v953 = vpop.f32.mrb[0].mxu0
    %954 = vdwg.mxu0
    %v955 = vpack.c.bf16 %v950, %v902
    %v957 = vsel %vm194, %v955, 0
    %v960 = vsel %vm323, %v187, 0
    %962 = vmatprep.subr.bf16.mxu0 0
    %963 = vmatpush1.bf16.msra.mxu0 %v960
    %964 = vmatprep.subr.bf16.mxu0 0
    %965 = vmatpush1.bf16.msra.mxu0 0
    %966 = vmatprep.subr.bf16.mxu0 0
    %967 = vmatpush1.bf16.msra.mxu0 0
    %968 = vmatprep.subr.bf16.mxu0 0
    %969 = vmatpush1.bf16.msra.mxu0 0
    %970 = vmatprep.subr.bf16.mxu0 0
    %971 = vmatpush1.bf16.msra.mxu0 0
    %972 = vmatprep.subr.bf16.mxu0 0
    %973 = vmatpush1.bf16.msra.mxu0 0
    %974 = vmatprep.subr.bf16.mxu0 0
    %975 = vmatpush1.bf16.msra.mxu0 0
    %976 = vmatprep.subr.bf16.mxu0 0
    %977 = vmatpush1.bf16.msra.mxu0 0
    %978 = vmatprep.subr.bf16.mxu0 0
    %979 = vmatpush1.bf16.msra.mxu0 0
    %980 = vmatprep.subr.bf16.mxu0 0
    %981 = vmatpush1.bf16.msra.mxu0 0
    %982 = vmatprep.subr.bf16.mxu0 0
    %983 = vmatpush1.bf16.msra.mxu0 0
    %984 = vmatprep.subr.bf16.mxu0 0
    %985 = vmatpush1.bf16.msra.mxu0 0
    %986 = vmatprep.subr.bf16.mxu0 0
    %987 = vmatpush1.bf16.msra.mxu0 0
    %988 = vmatprep.subr.bf16.mxu0 0
    %989 = vmatpush1.bf16.msra.mxu0 0
    %990 = vmatprep.subr.bf16.mxu0 0
    %991 = vmatpush1.bf16.msra.mxu0 0
    %992 = vmatprep.subr.bf16.mxu0 0
    %993 = vmatpush1.bf16.msra.mxu0 0
    %994 = vmatprep.mubr.bf16.mxu0 0
    %995 = vmatmul.mubr.bf16.gmra.mrb[0].mxu0 %v957
    %v996 = vpop.f32.mrb[0].mxu0
    %v997 = vadd.f32 0.0, %v996
    %v998 = vpop.f32.mrb[0].mxu0
    %v999 = vpop.f32.mrb[0].mxu0
    %v1000 = vadd.f32 0.0, %v999
    %v1001 = vpop.f32.mrb[0].mxu0
    %1002 = vdwg.mxu0
    %v1003 = vadd.f32 %v727, %v997
    %v1004 = vadd.f32 %v730, %v1000
    %1005 = vrot.lane.b32.xlu0 %v189, 104
    %v1006 = vpop.permute.xlu0 %1005
    %1007 = vrot.lane.b32.xlu0 %v189, 72
    %v1008 = vpop.permute.xlu0 %1007
    %v1010 = vsel %vm194, %v1006, 0
    %v1013 = vsel %vm194, %v1008, 0
    %1015 = vmatprep.subr.bf16.mxu0 0
    %1016 = vmatpush1.bf16.xpose.msra.mxu0 %v1013
    %1017 = vmatprep.subr.bf16.mxu0 0
    %1018 = vmatpush1.bf16.xpose.msra.mxu0 0
    %1019 = vmatprep.subr.bf16.mxu0 0
    %1020 = vmatpush1.bf16.xpose.msra.mxu0 0
    %1021 = vmatprep.subr.bf16.mxu0 0
    %1022 = vmatpush1.bf16.xpose.msra.mxu0 0
    %1023 = vmatprep.subr.bf16.mxu0 0
    %1024 = vmatpush1.bf16.xpose.msra.mxu0 0
    %1025 = vmatprep.subr.bf16.mxu0 0
    %1026 = vmatpush1.bf16.xpose.msra.mxu0 0
    %1027 = vmatprep.subr.bf16.mxu0 0
    %1028 = vmatpush1.bf16.xpose.msra.mxu0 0
    %1029 = vmatprep.subr.bf16.mxu0 0
    %1030 = vmatpush1.bf16.xpose.msra.mxu0 0
    %1031 = vmatprep.subr.bf16.mxu0 0
    %1032 = vmatpush1.bf16.xpose.msra.mxu0 0
    %1033 = vmatprep.subr.bf16.mxu0 0
    %1034 = vmatpush1.bf16.xpose.msra.mxu0 0
    %1035 = vmatprep.subr.bf16.mxu0 0
    %1036 = vmatpush1.bf16.xpose.msra.mxu0 0
    %1037 = vmatprep.subr.bf16.mxu0 0
    %1038 = vmatpush1.bf16.xpose.msra.mxu0 0
    %1039 = vmatprep.subr.bf16.mxu0 0
    %1040 = vmatpush1.bf16.xpose.msra.mxu0 0
    %1041 = vmatprep.subr.bf16.mxu0 0
    %1042 = vmatpush1.bf16.xpose.msra.mxu0 0
    %1043 = vmatprep.subr.bf16.mxu0 0
    %1044 = vmatpush1.bf16.xpose.msra.mxu0 0
    %1045 = vmatprep.subr.bf16.mxu0 0
    %1046 = vmatpush1.bf16.xpose.msra.mxu0 0
    %1047 = vmatprep.mubr.bf16.mxu0 0
    %1048 = vmatmul.mubr.bf16.gmra.mrb[0].mxu0 %v1010
    %v1049 = vpop.f32.mrb[0].mxu0
    %v1050 = vadd.f32 0.0, %v1049
    %v1051 = vpop.f32.mrb[0].mxu0
    %v1052 = vpop.f32.mrb[0].mxu0
    %v1053 = vpop.f32.mrb[0].mxu0
    %1054 = vdwg.mxu0
    %1055 = vrot.lane.b32.xlu0 %v190, 104
    %v1056 = vpop.permute.xlu0 %1055
    %1057 = vrot.lane.b32.xlu0 %v190, 72
    %v1058 = vpop.permute.xlu0 %1057
    %v1060 = vsel %vm194, %v1056, 0
    %v1063 = vsel %vm194, %v1058, 0
    %1065 = vmatprep.subr.bf16.mxu0 0
    %1066 = vmatpush1.bf16.xpose.msra.mxu0 %v1063
    %1067 = vmatprep.subr.bf16.mxu0 0
    %1068 = vmatpush1.bf16.xpose.msra.mxu0 0
    %1069 = vmatprep.subr.bf16.mxu0 0
    %1070 = vmatpush1.bf16.xpose.msra.mxu0 0
    %1071 = vmatprep.subr.bf16.mxu0 0
    %1072 = vmatpush1.bf16.xpose.msra.mxu0 0
    %1073 = vmatprep.subr.bf16.mxu0 0
    %1074 = vmatpush1.bf16.xpose.msra.mxu0 0
    %1075 = vmatprep.subr.bf16.mxu0 0
    %1076 = vmatpush1.bf16.xpose.msra.mxu0 0
    %1077 = vmatprep.subr.bf16.mxu0 0
    %1078 = vmatpush1.bf16.xpose.msra.mxu0 0
    %1079 = vmatprep.subr.bf16.mxu0 0
    %1080 = vmatpush1.bf16.xpose.msra.mxu0 0
    %1081 = vmatprep.subr.bf16.mxu0 0
    %1082 = vmatpush1.bf16.xpose.msra.mxu0 0
    %1083 = vmatprep.subr.bf16.mxu0 0
    %1084 = vmatpush1.bf16.xpose.msra.mxu0 0
    %1085 = vmatprep.subr.bf16.mxu0 0
    %1086 = vmatpush1.bf16.xpose.msra.mxu0 0
    %1087 = vmatprep.subr.bf16.mxu0 0
    %1088 = vmatpush1.bf16.xpose.msra.mxu0 0
    %1089 = vmatprep.subr.bf16.mxu0 0
    %1090 = vmatpush1.bf16.xpose.msra.mxu0 0
    %1091 = vmatprep.subr.bf16.mxu0 0
    %1092 = vmatpush1.bf16.xpose.msra.mxu0 0
    %1093 = vmatprep.subr.bf16.mxu0 0
    %1094 = vmatpush1.bf16.xpose.msra.mxu0 0
    %1095 = vmatprep.subr.bf16.mxu0 0
    %1096 = vmatpush1.bf16.xpose.msra.mxu0 0
    %1097 = vmatprep.mubr.bf16.mxu0 0
    %1098 = vmatmul.mubr.bf16.gmra.mrb[0].mxu0 %v1060
    %v1099 = vpop.f32.mrb[0].mxu0
    %v1100 = vadd.f32 0.0, %v1099
    %v1101 = vpop.f32.mrb[0].mxu0
    %v1102 = vpop.f32.mrb[0].mxu0
    %v1103 = vpop.f32.mrb[0].mxu0
    %1104 = vdwg.mxu0
    %v1105 = vsel %vm291, %v1050, -1000000.0
    %v1106 = vsel %vm291, %v1100, -1000000.0
    %v1107 = vsel %vm194, %v1105, -inf
    %1108 = vmax.xlane.f32.xlu0 %v1107
    %v1109 = vpop.xlane.xlu0 %1108
    %v1110 = vsel %vm194, %v1106, -inf
    %1111 = vmax.xlane.f32.xlu0 %v1110
    %v1112 = vpop.xlane.xlu0 %1111
    %v1113 = vsub.f32 %v1105, %v1109
    %v1114 = vsub.f32 %v1106, %v1112
    %v1115 = vmul.f32 %v1113, 1.442695
    %v1116 = vpow.pop %v1115
    %v1117 = vmul.f32 %v1114, 1.442695
    %v1118 = vpow.pop %v1117
    %v1119 = vsel %vm194, %v1116, 0.0
    %1120 = vadd.xlane.f32.xlu0 %v1119
    %v1121 = vpop.xlane.xlu0 %1120
    %v1122 = vsel %vm194, %v1118, 0.0
    %1123 = vadd.xlane.f32.xlu0 %v1122
    %v1124 = vpop.xlane.xlu0 %1123
    %v1125 = vrcp.pop %v1121
    %v1126 = vrcp.pop %v1124
    %v1127 = vmul.f32 %v1116, %v1125
    %v1128 = vmul.f32 %v1118, %v1126
    %v1129 = vpack.c.bf16 %v1127, %v1127
    %v1130 = vpack.c.bf16 %v1128, %v1128
    %1131 = vrot.lane.b32.xlu0 %v189, 40
    %v1132 = vpop.permute.xlu0 %1131
    %v1134 = vsel %vm194, %v1129, 0
    %v1137 = vsel %vm323, %v1132, 0
    %1139 = vmatprep.subr.bf16.mxu0 0
    %1140 = vmatpush1.bf16.msra.mxu0 %v1137
    %1141 = vmatprep.subr.bf16.mxu0 0
    %1142 = vmatpush1.bf16.msra.mxu0 0
    %1143 = vmatprep.subr.bf16.mxu0 0
    %1144 = vmatpush1.bf16.msra.mxu0 0
    %1145 = vmatprep.subr.bf16.mxu0 0
    %1146 = vmatpush1.bf16.msra.mxu0 0
    %1147 = vmatprep.subr.bf16.mxu0 0
    %1148 = vmatpush1.bf16.msra.mxu0 0
    %1149 = vmatprep.subr.bf16.mxu0 0
    %1150 = vmatpush1.bf16.msra.mxu0 0
    %1151 = vmatprep.subr.bf16.mxu0 0
    %1152 = vmatpush1.bf16.msra.mxu0 0
    %1153 = vmatprep.subr.bf16.mxu0 0
    %1154 = vmatpush1.bf16.msra.mxu0 0
    %1155 = vmatprep.subr.bf16.mxu0 0
    %1156 = vmatpush1.bf16.msra.mxu0 0
    %1157 = vmatprep.subr.bf16.mxu0 0
    %1158 = vmatpush1.bf16.msra.mxu0 0
    %1159 = vmatprep.subr.bf16.mxu0 0
    %1160 = vmatpush1.bf16.msra.mxu0 0
    %1161 = vmatprep.subr.bf16.mxu0 0
    %1162 = vmatpush1.bf16.msra.mxu0 0
    %1163 = vmatprep.subr.bf16.mxu0 0
    %1164 = vmatpush1.bf16.msra.mxu0 0
    %1165 = vmatprep.subr.bf16.mxu0 0
    %1166 = vmatpush1.bf16.msra.mxu0 0
    %1167 = vmatprep.subr.bf16.mxu0 0
    %1168 = vmatpush1.bf16.msra.mxu0 0
    %1169 = vmatprep.subr.bf16.mxu0 0
    %1170 = vmatpush1.bf16.msra.mxu0 0
    %1171 = vmatprep.mubr.bf16.mxu0 0
    %1172 = vmatmul.mubr.bf16.gmra.mrb[0].mxu0 %v1134
    %v1173 = vpop.f32.mrb[0].mxu0
    %v1174 = vadd.f32 0.0, %v1173
    %v1175 = vpop.f32.mrb[0].mxu0
    %v1176 = vpop.f32.mrb[0].mxu0
    %v1177 = vpop.f32.mrb[0].mxu0
    %1178 = vdwg.mxu0
    %1179 = vrot.lane.b32.xlu0 %v190, 40
    %v1180 = vpop.permute.xlu0 %1179
    %v1182 = vsel %vm194, %v1130, 0
    %v1185 = vsel %vm323, %v1180, 0
    %1187 = vmatprep.subr.bf16.mxu0 0
    %1188 = vmatpush1.bf16.msra.mxu0 %v1185
    %1189 = vmatprep.subr.bf16.mxu0 0
    %1190 = vmatpush1.bf16.msra.mxu0 0
    %1191 = vmatprep.subr.bf16.mxu0 0
    %1192 = vmatpush1.bf16.msra.mxu0 0
    %1193 = vmatprep.subr.bf16.mxu0 0
    %1194 = vmatpush1.bf16.msra.mxu0 0
    %1195 = vmatprep.subr.bf16.mxu0 0
    %1196 = vmatpush1.bf16.msra.mxu0 0
    %1197 = vmatprep.subr.bf16.mxu0 0
    %1198 = vmatpush1.bf16.msra.mxu0 0
    %1199 = vmatprep.subr.bf16.mxu0 0
    %1200 = vmatpush1.bf16.msra.mxu0 0
    %1201 = vmatprep.subr.bf16.mxu0 0
    %1202 = vmatpush1.bf16.msra.mxu0 0
    %1203 = vmatprep.subr.bf16.mxu0 0
    %1204 = vmatpush1.bf16.msra.mxu0 0
    %1205 = vmatprep.subr.bf16.mxu0 0
    %1206 = vmatpush1.bf16.msra.mxu0 0
    %1207 = vmatprep.subr.bf16.mxu0 0
    %1208 = vmatpush1.bf16.msra.mxu0 0
    %1209 = vmatprep.subr.bf16.mxu0 0
    %1210 = vmatpush1.bf16.msra.mxu0 0
    %1211 = vmatprep.subr.bf16.mxu0 0
    %1212 = vmatpush1.bf16.msra.mxu0 0
    %1213 = vmatprep.subr.bf16.mxu0 0
    %1214 = vmatpush1.bf16.msra.mxu0 0
    %1215 = vmatprep.subr.bf16.mxu0 0
    %1216 = vmatpush1.bf16.msra.mxu0 0
    %1217 = vmatprep.subr.bf16.mxu0 0
    %1218 = vmatpush1.bf16.msra.mxu0 0
    %1219 = vmatprep.mubr.bf16.mxu0 0
    %1220 = vmatmul.mubr.bf16.gmra.mrb[0].mxu0 %v1182
    %v1221 = vpop.f32.mrb[0].mxu0
    %v1222 = vadd.f32 0.0, %v1221
    %v1223 = vpop.f32.mrb[0].mxu0
    %v1224 = vpop.f32.mrb[0].mxu0
    %v1225 = vpop.f32.mrb[0].mxu0
    %1226 = vdwg.mxu0
    %v1227 = vpack.c.bf16 %v1222, %v1174
    %v1229 = vsel %vm194, %v1227, 0
    %v1232 = vsel %vm323, %v188, 0
    %1234 = vmatprep.subr.bf16.mxu0 0
    %1235 = vmatpush1.bf16.msra.mxu0 %v1232
    %1236 = vmatprep.subr.bf16.mxu0 0
    %1237 = vmatpush1.bf16.msra.mxu0 0
    %1238 = vmatprep.subr.bf16.mxu0 0
    %1239 = vmatpush1.bf16.msra.mxu0 0
    %1240 = vmatprep.subr.bf16.mxu0 0
    %1241 = vmatpush1.bf16.msra.mxu0 0
    %1242 = vmatprep.subr.bf16.mxu0 0
    %1243 = vmatpush1.bf16.msra.mxu0 0
    %1244 = vmatprep.subr.bf16.mxu0 0
    %1245 = vmatpush1.bf16.msra.mxu0 0
    %1246 = vmatprep.subr.bf16.mxu0 0
    %1247 = vmatpush1.bf16.msra.mxu0 0
    %1248 = vmatprep.subr.bf16.mxu0 0
    %1249 = vmatpush1.bf16.msra.mxu0 0
    %1250 = vmatprep.subr.bf16.mxu0 0
    %1251 = vmatpush1.bf16.msra.mxu0 0
    %1252 = vmatprep.subr.bf16.mxu0 0
    %1253 = vmatpush1.bf16.msra.mxu0 0
    %1254 = vmatprep.subr.bf16.mxu0 0
    %1255 = vmatpush1.bf16.msra.mxu0 0
    %1256 = vmatprep.subr.bf16.mxu0 0
    %1257 = vmatpush1.bf16.msra.mxu0 0
    %1258 = vmatprep.subr.bf16.mxu0 0
    %1259 = vmatpush1.bf16.msra.mxu0 0
    %1260 = vmatprep.subr.bf16.mxu0 0
    %1261 = vmatpush1.bf16.msra.mxu0 0
    %1262 = vmatprep.subr.bf16.mxu0 0
    %1263 = vmatpush1.bf16.msra.mxu0 0
    %1264 = vmatprep.subr.bf16.mxu0 0
    %1265 = vmatpush1.bf16.msra.mxu0 0
    %1266 = vmatprep.mubr.bf16.mxu0 0
    %1267 = vmatmul.mubr.bf16.gmra.mrb[0].mxu0 %v1229
    %v1268 = vpop.f32.mrb[0].mxu0
    %v1269 = vadd.f32 0.0, %v1268
    %v1270 = vpop.f32.mrb[0].mxu0
    %v1271 = vpop.f32.mrb[0].mxu0
    %v1272 = vadd.f32 0.0, %v1271
    %v1273 = vpop.f32.mrb[0].mxu0
    %1274 = vdwg.mxu0
    %v1275 = vadd.f32 %v1003, %v1269
    %v1276 = vadd.f32 %v1004, %v1272
    %v1277 = vadd.f32 %v1275, %v116
    %v1278 = vadd.f32 %v1276, %v117
    %v1279 = vld [vmem:[%s8] sm:$0x1]
    %v1280 = vld [vmem:[%s9] sm:$0x1]
    %v1281 = vsel %vm135, %v1277, 0.0
    %1282 = vadd.xlane.f32.xlu0 %v1281
    %v1283 = vpop.xlane.xlu0 %1282
    %v1284 = vsel %vm135, %v1278, 0.0
    %1285 = vadd.xlane.f32.xlu0 %v1284
    %v1286 = vpop.xlane.xlu0 %1285
    %v1287 = vrcp.pop 32.0
    %v1288 = vmul.f32 %v1283, %v1287
    %v1289 = vmul.f32 %v1286, %v1287
    %v1290 = vsub.f32 %v1277, %v1288
    %v1291 = vsub.f32 %v1278, %v1289
    %v1292 = vmul.f32 %v1290, %v1290
    %v1293 = vmul.f32 %v1291, %v1291
    %v1294 = vsel %vm135, %v1292, 0.0
    %1295 = vadd.xlane.f32.xlu0 %v1294
    %v1296 = vpop.xlane.xlu0 %1295
    %v1297 = vsel %vm135, %v1293, 0.0
    %1298 = vadd.xlane.f32.xlu0 %v1297
    %v1299 = vpop.xlane.xlu0 %1298
    %v1300 = vmul.f32 %v1296, %v1287
    %v1301 = vmul.f32 %v1299, %v1287
    %v1302 = vadd.f32 %v1300, 1e-05
    %v1303 = vadd.f32 %v1301, 1e-05
    %v1304 = vrsqrt.pop %v1302
    %v1305 = vrsqrt.pop %v1303
    %v1306 = vmul.f32 %v1290, %v1304
    %v1307 = vmul.f32 %v1291, %v1305
    %v1309 = vlaneseq
    %v1310 = vshrl.u32 %v1309, 7
    %v1311 = vsub.s32 0, %v1310
    %v1312 = vrot.slane %v1279, %v1311
    %v1314 = vmul.f32 %v1306, %v1312
    %v1315 = vmul.f32 %v1307, %v1312
    %v1317 = vlaneseq
    %v1318 = vshrl.u32 %v1317, 7
    %v1319 = vsub.s32 0, %v1318
    %v1320 = vrot.slane %v1280, %v1319
    %v1322 = vadd.f32 %v1314, %v1320
    %v1323 = vadd.f32 %v1315, %v1320
    %v1324 = vpack.c.bf16 %v1323, %v1322
    %v1325 = vld [vmem:[#allocation5] sm:$0xf]
    %v1326 = vld [vmem:[#allocation5 + $0x4] sm:$0xf]
    %v1327 = vld [vmem:[#allocation5 + $0x8] sm:$0xf]
    %v1328 = vld [vmem:[#allocation5 + $0xc] sm:$0xf]
    %v1333 = vunpack.c.l.b16 %v1325
    %v1334 = vunpack.c.l.b16 %v1326
    %v1335 = vunpack.c.l.b16 %v1327
    %v1336 = vunpack.c.l.b16 %v1328
    %v1337 = vpack.c.b16 %v1334, %v1333
    %v1338 = vpack.c.b16 %v1336, %v1335
    %v1342 = vsel %vm135, %v1324, 0
    %1344 = vmatprep.subr.bf16.mxu0 0
    %1345 = vmatpush1.bf16.msra.mxu0 %v1337
    %1346 = vmatprep.subr.bf16.mxu0 0
    %1347 = vmatpush1.bf16.msra.mxu0 %v1338
    %1348 = vmatprep.subr.bf16.mxu0 0
    %1349 = vmatpush1.bf16.msra.mxu0 0
    %1350 = vmatprep.subr.bf16.mxu0 0
    %1351 = vmatpush1.bf16.msra.mxu0 0
    %1352 = vmatprep.subr.bf16.mxu0 0
    %1353 = vmatpush1.bf16.msra.mxu0 0
    %1354 = vmatprep.subr.bf16.mxu0 0
    %1355 = vmatpush1.bf16.msra.mxu0 0
    %1356 = vmatprep.subr.bf16.mxu0 0
    %1357 = vmatpush1.bf16.msra.mxu0 0
    %1358 = vmatprep.subr.bf16.mxu0 0
    %1359 = vmatpush1.bf16.msra.mxu0 0
    %1360 = vmatprep.subr.bf16.mxu0 0
    %1361 = vmatpush1.bf16.msra.mxu0 0
    %1362 = vmatprep.subr.bf16.mxu0 0
    %1363 = vmatpush1.bf16.msra.mxu0 0
    %1364 = vmatprep.subr.bf16.mxu0 0
    %1365 = vmatpush1.bf16.msra.mxu0 0
    %1366 = vmatprep.subr.bf16.mxu0 0
    %1367 = vmatpush1.bf16.msra.mxu0 0
    %1368 = vmatprep.subr.bf16.mxu0 0
    %1369 = vmatpush1.bf16.msra.mxu0 0
    %1370 = vmatprep.subr.bf16.mxu0 0
    %1371 = vmatpush1.bf16.msra.mxu0 0
    %1372 = vmatprep.subr.bf16.mxu0 0
    %1373 = vmatpush1.bf16.msra.mxu0 0
    %1374 = vmatprep.subr.bf16.mxu0 0
    %1375 = vmatpush1.bf16.msra.mxu0 0
    %1376 = vmatprep.mubr.bf16.mxu0 0
    %1377 = vmatmul.mubr.bf16.gmra.mrb[0].mxu0 %v1342
    %v1378 = vpop.f32.mrb[0].mxu0
    %v1379 = vadd.f32 0.0, %v1378
    %v1380 = vpop.f32.mrb[0].mxu0
    %v1381 = vpop.f32.mrb[0].mxu0
    %v1382 = vadd.f32 0.0, %v1381
    %v1383 = vpop.f32.mrb[0].mxu0
    %1384 = vdwg.mxu0
    %v1385 = vld [vmem:[%s1] sm:$0xff]
    %v1386 = vld [vmem:[%s1 + $0x8] sm:$0xff]
    %v1387 = vpack.c.bf16 %v1386, %v1385
    %v1388 = vld [vmem:[#allocation7] sm:$0xf]
    %v1389 = vld [vmem:[#allocation7 + $0x4] sm:$0xf]
    %v1390 = vld [vmem:[#allocation7 + $0x8] sm:$0xf]
    %v1391 = vld [vmem:[#allocation7 + $0xc] sm:$0xf]
    %v1396 = vunpack.c.l.b16 %v1388
    %v1397 = vunpack.c.l.b16 %v1389
    %v1398 = vunpack.c.l.b16 %v1390
    %v1399 = vunpack.c.l.b16 %v1391
    %v1400 = vpack.c.b16 %v1397, %v1396
    %v1401 = vpack.c.b16 %v1399, %v1398
    %v1405 = vsel %vm135, %v1387, 0
    %1407 = vmatprep.subr.bf16.mxu0 0
    %1408 = vmatpush1.bf16.msra.mxu0 %v1400
    %1409 = vmatprep.subr.bf16.mxu0 0
    %1410 = vmatpush1.bf16.msra.mxu0 %v1401
    %1411 = vmatprep.subr.bf16.mxu0 0
    %1412 = vmatpush1.bf16.msra.mxu0 0
    %1413 = vmatprep.subr.bf16.mxu0 0
    %1414 = vmatpush1.bf16.msra.mxu0 0
    %1415 = vmatprep.subr.bf16.mxu0 0
    %1416 = vmatpush1.bf16.msra.mxu0 0
    %1417 = vmatprep.subr.bf16.mxu0 0
    %1418 = vmatpush1.bf16.msra.mxu0 0
    %1419 = vmatprep.subr.bf16.mxu0 0
    %1420 = vmatpush1.bf16.msra.mxu0 0
    %1421 = vmatprep.subr.bf16.mxu0 0
    %1422 = vmatpush1.bf16.msra.mxu0 0
    %1423 = vmatprep.subr.bf16.mxu0 0
    %1424 = vmatpush1.bf16.msra.mxu0 0
    %1425 = vmatprep.subr.bf16.mxu0 0
    %1426 = vmatpush1.bf16.msra.mxu0 0
    %1427 = vmatprep.subr.bf16.mxu0 0
    %1428 = vmatpush1.bf16.msra.mxu0 0
    %1429 = vmatprep.subr.bf16.mxu0 0
    %1430 = vmatpush1.bf16.msra.mxu0 0
    %1431 = vmatprep.subr.bf16.mxu0 0
    %1432 = vmatpush1.bf16.msra.mxu0 0
    %1433 = vmatprep.subr.bf16.mxu0 0
    %1434 = vmatpush1.bf16.msra.mxu0 0
    %1435 = vmatprep.subr.bf16.mxu0 0
    %1436 = vmatpush1.bf16.msra.mxu0 0
    %1437 = vmatprep.subr.bf16.mxu0 0
    %1438 = vmatpush1.bf16.msra.mxu0 0
    %1439 = vmatprep.mubr.bf16.mxu0 0
    %1440 = vmatmul.mubr.bf16.gmra.mrb[0].mxu0 %v1405
    %v1441 = vpop.f32.mrb[0].mxu0
    %v1442 = vadd.f32 0.0, %v1441
    %v1443 = vpop.f32.mrb[0].mxu0
    %v1444 = vpop.f32.mrb[0].mxu0
    %v1445 = vadd.f32 0.0, %v1444
    %v1446 = vpop.f32.mrb[0].mxu0
    %1447 = vdwg.mxu0
    %v1448 = vld [vmem:[%s2] sm:$0x1]
    %v1449 = vld [vmem:[%s2 + $0x1] sm:$0x1]
    %v1450 = vlaneseq
    %v1451 = vshrl.u32 %v1450, 7
    %v1452 = vsub.s32 0, %v1451
    %v1453 = vrot.slane %v1448, %v1452
    %v1454 = vlaneseq
    %v1455 = vshrl.u32 %v1454, 7
    %v1456 = vsub.s32 0, %v1455
    %v1457 = vrot.slane %v1449, %v1456
    %1458 = vset.pattern.permute.xlu0 0
    %1459 = vperm.xlu0 %1458, %v1453
    %v1460 = vpop.permute.xlu0 %1459
    %1461 = vset.pattern.permute.xlu0 0
    %1462 = vperm.xlu0 %1461, %v1457
    %v1463 = vpop.permute.xlu0 %1462
    %vm1464 = vcmp.lt.s32.totalorder %v183, %v1460
    %vm1465 = vcmp.lt.s32.totalorder %v183, %v1463
    %v1466 = vld [vmem:[#allocation8] sm:$0xf]
    %v1467 = vld [vmem:[#allocation8 + $0x4] sm:$0xf]
    %v1468 = vld [vmem:[#allocation8 + $0x8] sm:$0xf]
    %v1469 = vld [vmem:[#allocation8 + $0xc] sm:$0xf]
    %v1470 = vpack.c.bf16 %v1379, %v1379
    %v1471 = vpack.c.bf16 %v1382, %v1382
    %v1472 = vpack.c.bf16 %v1442, %v1442
    %v1473 = vpack.c.bf16 %v1445, %v1445
    %v1475 = vsel %vm194, %v1470, 0
    %v1478 = vsel %vm194, %v1472, 0
    %1480 = vmatprep.subr.bf16.mxu0 0
    %1481 = vmatpush1.bf16.xpose.msra.mxu0 %v1478
    %1482 = vmatprep.subr.bf16.mxu0 0
    %1483 = vmatpush1.bf16.xpose.msra.mxu0 0
    %1484 = vmatprep.subr.bf16.mxu0 0
    %1485 = vmatpush1.bf16.xpose.msra.mxu0 0
    %1486 = vmatprep.subr.bf16.mxu0 0
    %1487 = vmatpush1.bf16.xpose.msra.mxu0 0
    %1488 = vmatprep.subr.bf16.mxu0 0
    %1489 = vmatpush1.bf16.xpose.msra.mxu0 0
    %1490 = vmatprep.subr.bf16.mxu0 0
    %1491 = vmatpush1.bf16.xpose.msra.mxu0 0
    %1492 = vmatprep.subr.bf16.mxu0 0
    %1493 = vmatpush1.bf16.xpose.msra.mxu0 0
    %1494 = vmatprep.subr.bf16.mxu0 0
    %1495 = vmatpush1.bf16.xpose.msra.mxu0 0
    %1496 = vmatprep.subr.bf16.mxu0 0
    %1497 = vmatpush1.bf16.xpose.msra.mxu0 0
    %1498 = vmatprep.subr.bf16.mxu0 0
    %1499 = vmatpush1.bf16.xpose.msra.mxu0 0
    %1500 = vmatprep.subr.bf16.mxu0 0
    %1501 = vmatpush1.bf16.xpose.msra.mxu0 0
    %1502 = vmatprep.subr.bf16.mxu0 0
    %1503 = vmatpush1.bf16.xpose.msra.mxu0 0
    %1504 = vmatprep.subr.bf16.mxu0 0
    %1505 = vmatpush1.bf16.xpose.msra.mxu0 0
    %1506 = vmatprep.subr.bf16.mxu0 0
    %1507 = vmatpush1.bf16.xpose.msra.mxu0 0
    %1508 = vmatprep.subr.bf16.mxu0 0
    %1509 = vmatpush1.bf16.xpose.msra.mxu0 0
    %1510 = vmatprep.subr.bf16.mxu0 0
    %1511 = vmatpush1.bf16.xpose.msra.mxu0 0
    %1512 = vmatprep.mubr.bf16.mxu0 0
    %1513 = vmatmul.mubr.bf16.gmra.mrb[0].mxu0 %v1475
    %v1514 = vpop.f32.mrb[0].mxu0
    %v1515 = vadd.f32 0.0, %v1514
    %v1516 = vpop.f32.mrb[0].mxu0
    %v1517 = vpop.f32.mrb[0].mxu0
    %v1518 = vpop.f32.mrb[0].mxu0
    %1519 = vdwg.mxu0
    %v1521 = vsel %vm194, %v1471, 0
    %v1524 = vsel %vm194, %v1473, 0
    %1526 = vmatprep.subr.bf16.mxu0 0
    %1527 = vmatpush1.bf16.xpose.msra.mxu0 %v1524
    %1528 = vmatprep.subr.bf16.mxu0 0
    %1529 = vmatpush1.bf16.xpose.msra.mxu0 0
    %1530 = vmatprep.subr.bf16.mxu0 0
    %1531 = vmatpush1.bf16.xpose.msra.mxu0 0
    %1532 = vmatprep.subr.bf16.mxu0 0
    %1533 = vmatpush1.bf16.xpose.msra.mxu0 0
    %1534 = vmatprep.subr.bf16.mxu0 0
    %1535 = vmatpush1.bf16.xpose.msra.mxu0 0
    %1536 = vmatprep.subr.bf16.mxu0 0
    %1537 = vmatpush1.bf16.xpose.msra.mxu0 0
    %1538 = vmatprep.subr.bf16.mxu0 0
    %1539 = vmatpush1.bf16.xpose.msra.mxu0 0
    %1540 = vmatprep.subr.bf16.mxu0 0
    %1541 = vmatpush1.bf16.xpose.msra.mxu0 0
    %1542 = vmatprep.subr.bf16.mxu0 0
    %1543 = vmatpush1.bf16.xpose.msra.mxu0 0
    %1544 = vmatprep.subr.bf16.mxu0 0
    %1545 = vmatpush1.bf16.xpose.msra.mxu0 0
    %1546 = vmatprep.subr.bf16.mxu0 0
    %1547 = vmatpush1.bf16.xpose.msra.mxu0 0
    %1548 = vmatprep.subr.bf16.mxu0 0
    %1549 = vmatpush1.bf16.xpose.msra.mxu0 0
    %1550 = vmatprep.subr.bf16.mxu0 0
    %1551 = vmatpush1.bf16.xpose.msra.mxu0 0
    %1552 = vmatprep.subr.bf16.mxu0 0
    %1553 = vmatpush1.bf16.xpose.msra.mxu0 0
    %1554 = vmatprep.subr.bf16.mxu0 0
    %1555 = vmatpush1.bf16.xpose.msra.mxu0 0
    %1556 = vmatprep.subr.bf16.mxu0 0
    %1557 = vmatpush1.bf16.xpose.msra.mxu0 0
    %1558 = vmatprep.mubr.bf16.mxu0 0
    %1559 = vmatmul.mubr.bf16.gmra.mrb[0].mxu0 %v1521
    %v1560 = vpop.f32.mrb[0].mxu0
    %v1561 = vadd.f32 0.0, %v1560
    %v1562 = vpop.f32.mrb[0].mxu0
    %v1563 = vpop.f32.mrb[0].mxu0
    %v1564 = vpop.f32.mrb[0].mxu0
    %1565 = vdwg.mxu0
    %v1566 = vsel %vm1464, %v1515, -1000000.0
    %v1567 = vsel %vm1465, %v1561, -1000000.0
    %v1568 = vsel %vm194, %v1566, -inf
    %1569 = vmax.xlane.f32.xlu0 %v1568
    %v1570 = vpop.xlane.xlu0 %1569
    %v1571 = vsel %vm194, %v1567, -inf
    %1572 = vmax.xlane.f32.xlu0 %v1571
    %v1573 = vpop.xlane.xlu0 %1572
    %v1574 = vsub.f32 %v1566, %v1570
    %v1575 = vsub.f32 %v1567, %v1573
    %v1576 = vmul.f32 %v1574, 1.442695
    %v1577 = vpow.pop %v1576
    %v1578 = vmul.f32 %v1575, 1.442695
    %v1579 = vpow.pop %v1578
    %v1580 = vsel %vm194, %v1577, 0.0
    %1581 = vadd.xlane.f32.xlu0 %v1580
    %v1582 = vpop.xlane.xlu0 %1581
    %v1583 = vsel %vm194, %v1579, 0.0
    %1584 = vadd.xlane.f32.xlu0 %v1583
    %v1585 = vpop.xlane.xlu0 %1584
    %v1586 = vrcp.pop %v1582
    %v1587 = vrcp.pop %v1585
    %v1588 = vmul.f32 %v1577, %v1586
    %v1589 = vmul.f32 %v1579, %v1587
    %v1590 = vpack.c.bf16 %v1588, %v1588
    %v1591 = vpack.c.bf16 %v1589, %v1589
    %1593 = vrot.lane.b32.xlu0 %v1472, 96
    %v1594 = vpop.permute.xlu0 %1593
    %v1596 = vsel %vm194, %v1590, 0
    %v1599 = vsel %vm323, %v1594, 0
    %1601 = vmatprep.subr.bf16.mxu0 0
    %1602 = vmatpush1.bf16.msra.mxu0 %v1599
    %1603 = vmatprep.subr.bf16.mxu0 0
    %1604 = vmatpush1.bf16.msra.mxu0 0
    %1605 = vmatprep.subr.bf16.mxu0 0
    %1606 = vmatpush1.bf16.msra.mxu0 0
    %1607 = vmatprep.subr.bf16.mxu0 0
    %1608 = vmatpush1.bf16.msra.mxu0 0
    %1609 = vmatprep.subr.bf16.mxu0 0
    %1610 = vmatpush1.bf16.msra.mxu0 0
    %1611 = vmatprep.subr.bf16.mxu0 0
    %1612 = vmatpush1.bf16.msra.mxu0 0
    %1613 = vmatprep.subr.bf16.mxu0 0
    %1614 = vmatpush1.bf16.msra.mxu0 0
    %1615 = vmatprep.subr.bf16.mxu0 0
    %1616 = vmatpush1.bf16.msra.mxu0 0
    %1617 = vmatprep.subr.bf16.mxu0 0
    %1618 = vmatpush1.bf16.msra.mxu0 0
    %1619 = vmatprep.subr.bf16.mxu0 0
    %1620 = vmatpush1.bf16.msra.mxu0 0
    %1621 = vmatprep.subr.bf16.mxu0 0
    %1622 = vmatpush1.bf16.msra.mxu0 0
    %1623 = vmatprep.subr.bf16.mxu0 0
    %1624 = vmatpush1.bf16.msra.mxu0 0
    %1625 = vmatprep.subr.bf16.mxu0 0
    %1626 = vmatpush1.bf16.msra.mxu0 0
    %1627 = vmatprep.subr.bf16.mxu0 0
    %1628 = vmatpush1.bf16.msra.mxu0 0
    %1629 = vmatprep.subr.bf16.mxu0 0
    %1630 = vmatpush1.bf16.msra.mxu0 0
    %1631 = vmatprep.subr.bf16.mxu0 0
    %1632 = vmatpush1.bf16.msra.mxu0 0
    %1633 = vmatprep.mubr.bf16.mxu0 0
    %1634 = vmatmul.mubr.bf16.gmra.mrb[0].mxu0 %v1596
    %v1635 = vpop.f32.mrb[0].mxu0
    %v1636 = vadd.f32 0.0, %v1635
    %v1637 = vpop.f32.mrb[0].mxu0
    %v1638 = vpop.f32.mrb[0].mxu0
    %v1639 = vpop.f32.mrb[0].mxu0
    %1640 = vdwg.mxu0
    %1642 = vrot.lane.b32.xlu0 %v1473, 96
    %v1643 = vpop.permute.xlu0 %1642
    %v1645 = vsel %vm194, %v1591, 0
    %v1648 = vsel %vm323, %v1643, 0
    %1650 = vmatprep.subr.bf16.mxu0 0
    %1651 = vmatpush1.bf16.msra.mxu0 %v1648
    %1652 = vmatprep.subr.bf16.mxu0 0
    %1653 = vmatpush1.bf16.msra.mxu0 0
    %1654 = vmatprep.subr.bf16.mxu0 0
    %1655 = vmatpush1.bf16.msra.mxu0 0
    %1656 = vmatprep.subr.bf16.mxu0 0
    %1657 = vmatpush1.bf16.msra.mxu0 0
    %1658 = vmatprep.subr.bf16.mxu0 0
    %1659 = vmatpush1.bf16.msra.mxu0 0
    %1660 = vmatprep.subr.bf16.mxu0 0
    %1661 = vmatpush1.bf16.msra.mxu0 0
    %1662 = vmatprep.subr.bf16.mxu0 0
    %1663 = vmatpush1.bf16.msra.mxu0 0
    %1664 = vmatprep.subr.bf16.mxu0 0
    %1665 = vmatpush1.bf16.msra.mxu0 0
    %1666 = vmatprep.subr.bf16.mxu0 0
    %1667 = vmatpush1.bf16.msra.mxu0 0
    %1668 = vmatprep.subr.bf16.mxu0 0
    %1669 = vmatpush1.bf16.msra.mxu0 0
    %1670 = vmatprep.subr.bf16.mxu0 0
    %1671 = vmatpush1.bf16.msra.mxu0 0
    %1672 = vmatprep.subr.bf16.mxu0 0
    %1673 = vmatpush1.bf16.msra.mxu0 0
    %1674 = vmatprep.subr.bf16.mxu0 0
    %1675 = vmatpush1.bf16.msra.mxu0 0
    %1676 = vmatprep.subr.bf16.mxu0 0
    %1677 = vmatpush1.bf16.msra.mxu0 0
    %1678 = vmatprep.subr.bf16.mxu0 0
    %1679 = vmatpush1.bf16.msra.mxu0 0
    %1680 = vmatprep.subr.bf16.mxu0 0
    %1681 = vmatpush1.bf16.msra.mxu0 0
    %1682 = vmatprep.mubr.bf16.mxu0 0
    %1683 = vmatmul.mubr.bf16.gmra.mrb[0].mxu0 %v1645
    %v1684 = vpop.f32.mrb[0].mxu0
    %v1685 = vadd.f32 0.0, %v1684
    %v1686 = vpop.f32.mrb[0].mxu0
    %v1687 = vpop.f32.mrb[0].mxu0
    %v1688 = vpop.f32.mrb[0].mxu0
    %1689 = vdwg.mxu0
    %v1690 = vpack.c.bf16 %v1685, %v1636
    %1692 = vrot.lane.b32.xlu0 %v1470, 120
    %v1693 = vpop.permute.xlu0 %1692
    %1694 = vrot.lane.b32.xlu0 %v1472, 120
    %v1695 = vpop.permute.xlu0 %1694
    %v1697 = vsel %vm194, %v1693, 0
    %v1700 = vsel %vm194, %v1695, 0
    %1702 = vmatprep.subr.bf16.mxu0 0
    %1703 = vmatpush1.bf16.xpose.msra.mxu0 %v1700
    %1704 = vmatprep.subr.bf16.mxu0 0
    %1705 = vmatpush1.bf16.xpose.msra.mxu0 0
    %1706 = vmatprep.subr.bf16.mxu0 0
    %1707 = vmatpush1.bf16.xpose.msra.mxu0 0
    %1708 = vmatprep.subr.bf16.mxu0 0
    %1709 = vmatpush1.bf16.xpose.msra.mxu0 0
    %1710 = vmatprep.subr.bf16.mxu0 0
    %1711 = vmatpush1.bf16.xpose.msra.mxu0 0
    %1712 = vmatprep.subr.bf16.mxu0 0
    %1713 = vmatpush1.bf16.xpose.msra.mxu0 0
    %1714 = vmatprep.subr.bf16.mxu0 0
    %1715 = vmatpush1.bf16.xpose.msra.mxu0 0
    %1716 = vmatprep.subr.bf16.mxu0 0
    %1717 = vmatpush1.bf16.xpose.msra.mxu0 0
    %1718 = vmatprep.subr.bf16.mxu0 0
    %1719 = vmatpush1.bf16.xpose.msra.mxu0 0
    %1720 = vmatprep.subr.bf16.mxu0 0
    %1721 = vmatpush1.bf16.xpose.msra.mxu0 0
    %1722 = vmatprep.subr.bf16.mxu0 0
    %1723 = vmatpush1.bf16.xpose.msra.mxu0 0
    %1724 = vmatprep.subr.bf16.mxu0 0
    %1725 = vmatpush1.bf16.xpose.msra.mxu0 0
    %1726 = vmatprep.subr.bf16.mxu0 0
    %1727 = vmatpush1.bf16.xpose.msra.mxu0 0
    %1728 = vmatprep.subr.bf16.mxu0 0
    %1729 = vmatpush1.bf16.xpose.msra.mxu0 0
    %1730 = vmatprep.subr.bf16.mxu0 0
    %1731 = vmatpush1.bf16.xpose.msra.mxu0 0
    %1732 = vmatprep.subr.bf16.mxu0 0
    %1733 = vmatpush1.bf16.xpose.msra.mxu0 0
    %1734 = vmatprep.mubr.bf16.mxu0 0
    %1735 = vmatmul.mubr.bf16.gmra.mrb[0].mxu0 %v1697
    %v1736 = vpop.f32.mrb[0].mxu0
    %v1737 = vadd.f32 0.0, %v1736
    %v1738 = vpop.f32.mrb[0].mxu0
    %v1739 = vpop.f32.mrb[0].mxu0
    %v1740 = vpop.f32.mrb[0].mxu0
    %1741 = vdwg.mxu0
    %1743 = vrot.lane.b32.xlu0 %v1471, 120
    %v1744 = vpop.permute.xlu0 %1743
    %1745 = vrot.lane.b32.xlu0 %v1473, 120
    %v1746 = vpop.permute.xlu0 %1745
    %v1748 = vsel %vm194, %v1744, 0
    %v1751 = vsel %vm194, %v1746, 0
    %1753 = vmatprep.subr.bf16.mxu0 0
    %1754 = vmatpush1.bf16.xpose.msra.mxu0 %v1751
    %1755 = vmatprep.subr.bf16.mxu0 0
    %1756 = vmatpush1.bf16.xpose.msra.mxu0 0
    %1757 = vmatprep.subr.bf16.mxu0 0
    %1758 = vmatpush1.bf16.xpose.msra.mxu0 0
    %1759 = vmatprep.subr.bf16.mxu0 0
    %1760 = vmatpush1.bf16.xpose.msra.mxu0 0
    %1761 = vmatprep.subr.bf16.mxu0 0
    %1762 = vmatpush1.bf16.xpose.msra.mxu0 0
    %1763 = vmatprep.subr.bf16.mxu0 0
    %1764 = vmatpush1.bf16.xpose.msra.mxu0 0
    %1765 = vmatprep.subr.bf16.mxu0 0
    %1766 = vmatpush1.bf16.xpose.msra.mxu0 0
    %1767 = vmatprep.subr.bf16.mxu0 0
    %1768 = vmatpush1.bf16.xpose.msra.mxu0 0
    %1769 = vmatprep.subr.bf16.mxu0 0
    %1770 = vmatpush1.bf16.xpose.msra.mxu0 0
    %1771 = vmatprep.subr.bf16.mxu0 0
    %1772 = vmatpush1.bf16.xpose.msra.mxu0 0
    %1773 = vmatprep.subr.bf16.mxu0 0
    %1774 = vmatpush1.bf16.xpose.msra.mxu0 0
    %1775 = vmatprep.subr.bf16.mxu0 0
    %1776 = vmatpush1.bf16.xpose.msra.mxu0 0
    %1777 = vmatprep.subr.bf16.mxu0 0
    %1778 = vmatpush1.bf16.xpose.msra.mxu0 0
    %1779 = vmatprep.subr.bf16.mxu0 0
    %1780 = vmatpush1.bf16.xpose.msra.mxu0 0
    %1781 = vmatprep.subr.bf16.mxu0 0
    %1782 = vmatpush1.bf16.xpose.msra.mxu0 0
    %1783 = vmatprep.subr.bf16.mxu0 0
    %1784 = vmatpush1.bf16.xpose.msra.mxu0 0
    %1785 = vmatprep.mubr.bf16.mxu0 0
    %1786 = vmatmul.mubr.bf16.gmra.mrb[0].mxu0 %v1748
    %v1787 = vpop.f32.mrb[0].mxu0
    %v1788 = vadd.f32 0.0, %v1787
    %v1789 = vpop.f32.mrb[0].mxu0
    %v1790 = vpop.f32.mrb[0].mxu0
    %v1791 = vpop.f32.mrb[0].mxu0
    %1792 = vdwg.mxu0
    %v1793 = vsel %vm1464, %v1737, -1000000.0
    %v1794 = vsel %vm1465, %v1788, -1000000.0
    %v1795 = vsel %vm194, %v1793, -inf
    %1796 = vmax.xlane.f32.xlu0 %v1795
    %v1797 = vpop.xlane.xlu0 %1796
    %v1798 = vsel %vm194, %v1794, -inf
    %1799 = vmax.xlane.f32.xlu0 %v1798
    %v1800 = vpop.xlane.xlu0 %1799
    %v1801 = vsub.f32 %v1793, %v1797
    %v1802 = vsub.f32 %v1794, %v1800
    %v1803 = vmul.f32 %v1801, 1.442695
    %v1804 = vpow.pop %v1803
    %v1805 = vmul.f32 %v1802, 1.442695
    %v1806 = vpow.pop %v1805
    %v1807 = vsel %vm194, %v1804, 0.0
    %1808 = vadd.xlane.f32.xlu0 %v1807
    %v1809 = vpop.xlane.xlu0 %1808
    %v1810 = vsel %vm194, %v1806, 0.0
    %1811 = vadd.xlane.f32.xlu0 %v1810
    %v1812 = vpop.xlane.xlu0 %1811
    %v1813 = vrcp.pop %v1809
    %v1814 = vrcp.pop %v1812
    %v1815 = vmul.f32 %v1804, %v1813
    %v1816 = vmul.f32 %v1806, %v1814
    %v1817 = vpack.c.bf16 %v1815, %v1815
    %v1818 = vpack.c.bf16 %v1816, %v1816
    %1819 = vrot.lane.b32.xlu0 %v1472, 88
    %v1820 = vpop.permute.xlu0 %1819
    %v1822 = vsel %vm194, %v1817, 0
    %v1825 = vsel %vm323, %v1820, 0
    %1827 = vmatprep.subr.bf16.mxu0 0
    %1828 = vmatpush1.bf16.msra.mxu0 %v1825
    %1829 = vmatprep.subr.bf16.mxu0 0
    %1830 = vmatpush1.bf16.msra.mxu0 0
    %1831 = vmatprep.subr.bf16.mxu0 0
    %1832 = vmatpush1.bf16.msra.mxu0 0
    %1833 = vmatprep.subr.bf16.mxu0 0
    %1834 = vmatpush1.bf16.msra.mxu0 0
    %1835 = vmatprep.subr.bf16.mxu0 0
    %1836 = vmatpush1.bf16.msra.mxu0 0
    %1837 = vmatprep.subr.bf16.mxu0 0
    %1838 = vmatpush1.bf16.msra.mxu0 0
    %1839 = vmatprep.subr.bf16.mxu0 0
    %1840 = vmatpush1.bf16.msra.mxu0 0
    %1841 = vmatprep.subr.bf16.mxu0 0
    %1842 = vmatpush1.bf16.msra.mxu0 0
    %1843 = vmatprep.subr.bf16.mxu0 0
    %1844 = vmatpush1.bf16.msra.mxu0 0
    %1845 = vmatprep.subr.bf16.mxu0 0
    %1846 = vmatpush1.bf16.msra.mxu0 0
    %1847 = vmatprep.subr.bf16.mxu0 0
    %1848 = vmatpush1.bf16.msra.mxu0 0
    %1849 = vmatprep.subr.bf16.mxu0 0
    %1850 = vmatpush1.bf16.msra.mxu0 0
    %1851 = vmatprep.subr.bf16.mxu0 0
    %1852 = vmatpush1.bf16.msra.mxu0 0
    %1853 = vmatprep.subr.bf16.mxu0 0
    %1854 = vmatpush1.bf16.msra.mxu0 0
    %1855 = vmatprep.subr.bf16.mxu0 0
    %1856 = vmatpush1.bf16.msra.mxu0 0
    %1857 = vmatprep.subr.bf16.mxu0 0
    %1858 = vmatpush1.bf16.msra.mxu0 0
    %1859 = vmatprep.mubr.bf16.mxu0 0
    %1860 = vmatmul.mubr.bf16.gmra.mrb[0].mxu0 %v1822
    %v1861 = vpop.f32.mrb[0].mxu0
    %v1862 = vadd.f32 0.0, %v1861
    %v1863 = vpop.f32.mrb[0].mxu0
    %v1864 = vpop.f32.mrb[0].mxu0
    %v1865 = vpop.f32.mrb[0].mxu0
    %1866 = vdwg.mxu0
    %1867 = vrot.lane.b32.xlu0 %v1473, 88
    %v1868 = vpop.permute.xlu0 %1867
    %v1870 = vsel %vm194, %v1818, 0
    %v1873 = vsel %vm323, %v1868, 0
    %1875 = vmatprep.subr.bf16.mxu0 0
    %1876 = vmatpush1.bf16.msra.mxu0 %v1873
    %1877 = vmatprep.subr.bf16.mxu0 0
    %1878 = vmatpush1.bf16.msra.mxu0 0
    %1879 = vmatprep.subr.bf16.mxu0 0
    %1880 = vmatpush1.bf16.msra.mxu0 0
    %1881 = vmatprep.subr.bf16.mxu0 0
    %1882 = vmatpush1.bf16.msra.mxu0 0
    %1883 = vmatprep.subr.bf16.mxu0 0
    %1884 = vmatpush1.bf16.msra.mxu0 0
    %1885 = vmatprep.subr.bf16.mxu0 0
    %1886 = vmatpush1.bf16.msra.mxu0 0
    %1887 = vmatprep.subr.bf16.mxu0 0
    %1888 = vmatpush1.bf16.msra.mxu0 0
    %1889 = vmatprep.subr.bf16.mxu0 0
    %1890 = vmatpush1.bf16.msra.mxu0 0
    %1891 = vmatprep.subr.bf16.mxu0 0
    %1892 = vmatpush1.bf16.msra.mxu0 0
    %1893 = vmatprep.subr.bf16.mxu0 0
    %1894 = vmatpush1.bf16.msra.mxu0 0
    %1895 = vmatprep.subr.bf16.mxu0 0
    %1896 = vmatpush1.bf16.msra.mxu0 0
    %1897 = vmatprep.subr.bf16.mxu0 0
    %1898 = vmatpush1.bf16.msra.mxu0 0
    %1899 = vmatprep.subr.bf16.mxu0 0
    %1900 = vmatpush1.bf16.msra.mxu0 0
    %1901 = vmatprep.subr.bf16.mxu0 0
    %1902 = vmatpush1.bf16.msra.mxu0 0
    %1903 = vmatprep.subr.bf16.mxu0 0
    %1904 = vmatpush1.bf16.msra.mxu0 0
    %1905 = vmatprep.subr.bf16.mxu0 0
    %1906 = vmatpush1.bf16.msra.mxu0 0
    %1907 = vmatprep.mubr.bf16.mxu0 0
    %1908 = vmatmul.mubr.bf16.gmra.mrb[0].mxu0 %v1870
    %v1909 = vpop.f32.mrb[0].mxu0
    %v1910 = vadd.f32 0.0, %v1909
    %v1911 = vpop.f32.mrb[0].mxu0
    %v1912 = vpop.f32.mrb[0].mxu0
    %v1913 = vpop.f32.mrb[0].mxu0
    %1914 = vdwg.mxu0
    %v1915 = vpack.c.bf16 %v1910, %v1862
    %v1917 = vsel %vm194, %v1915, 0
    %v1920 = vsel %vm323, %v1467, 0
    %1922 = vmatprep.subr.bf16.mxu0 0
    %1923 = vmatpush1.bf16.msra.mxu0 %v1920
    %1924 = vmatprep.subr.bf16.mxu0 0
    %1925 = vmatpush1.bf16.msra.mxu0 0
    %1926 = vmatprep.subr.bf16.mxu0 0
    %1927 = vmatpush1.bf16.msra.mxu0 0
    %1928 = vmatprep.subr.bf16.mxu0 0
    %1929 = vmatpush1.bf16.msra.mxu0 0
    %1930 = vmatprep.subr.bf16.mxu0 0
    %1931 = vmatpush1.bf16.msra.mxu0 0
    %1932 = vmatprep.subr.bf16.mxu0 0
    %1933 = vmatpush1.bf16.msra.mxu0 0
    %1934 = vmatprep.subr.bf16.mxu0 0
    %1935 = vmatpush1.bf16.msra.mxu0 0
    %1936 = vmatprep.subr.bf16.mxu0 0
    %1937 = vmatpush1.bf16.msra.mxu0 0
    %1938 = vmatprep.subr.bf16.mxu0 0
    %1939 = vmatpush1.bf16.msra.mxu0 0
    %1940 = vmatprep.subr.bf16.mxu0 0
    %1941 = vmatpush1.bf16.msra.mxu0 0
    %1942 = vmatprep.subr.bf16.mxu0 0
    %1943 = vmatpush1.bf16.msra.mxu0 0
    %1944 = vmatprep.subr.bf16.mxu0 0
    %1945 = vmatpush1.bf16.msra.mxu0 0
    %1946 = vmatprep.subr.bf16.mxu0 0
    %1947 = vmatpush1.bf16.msra.mxu0 0
    %1948 = vmatprep.subr.bf16.mxu0 0
    %1949 = vmatpush1.bf16.msra.mxu0 0
    %1950 = vmatprep.subr.bf16.mxu0 0
    %1951 = vmatpush1.bf16.msra.mxu0 0
    %1952 = vmatprep.subr.bf16.mxu0 0
    %1953 = vmatpush1.bf16.msra.mxu0 0
    %1954 = vmatprep.mubr.bf16.mxu0 0
    %1955 = vmatmul.mubr.bf16.gmra.mrb[0].mxu0 %v1917
    %v1956 = vpop.f32.mrb[0].mxu0
    %v1957 = vadd.f32 0.0, %v1956
    %v1958 = vpop.f32.mrb[0].mxu0
    %v1959 = vpop.f32.mrb[0].mxu0
    %v1960 = vadd.f32 0.0, %v1959
    %v1961 = vpop.f32.mrb[0].mxu0
    %1962 = vdwg.mxu0
    %v1964 = vsel %vm194, %v1690, 0
    %v1967 = vsel %vm323, %v1466, 0
    %1969 = vmatprep.subr.bf16.mxu0 0
    %1970 = vmatpush1.bf16.msra.mxu0 %v1967
    %1971 = vmatprep.subr.bf16.mxu0 0
    %1972 = vmatpush1.bf16.msra.mxu0 0
    %1973 = vmatprep.subr.bf16.mxu0 0
    %1974 = vmatpush1.bf16.msra.mxu0 0
    %1975 = vmatprep.subr.bf16.mxu0 0
    %1976 = vmatpush1.bf16.msra.mxu0 0
    %1977 = vmatprep.subr.bf16.mxu0 0
    %1978 = vmatpush1.bf16.msra.mxu0 0
    %1979 = vmatprep.subr.bf16.mxu0 0
    %1980 = vmatpush1.bf16.msra.mxu0 0
    %1981 = vmatprep.subr.bf16.mxu0 0
    %1982 = vmatpush1.bf16.msra.mxu0 0
    %1983 = vmatprep.subr.bf16.mxu0 0
    %1984 = vmatpush1.bf16.msra.mxu0 0
    %1985 = vmatprep.subr.bf16.mxu0 0
    %1986 = vmatpush1.bf16.msra.mxu0 0
    %1987 = vmatprep.subr.bf16.mxu0 0
    %1988 = vmatpush1.bf16.msra.mxu0 0
    %1989 = vmatprep.subr.bf16.mxu0 0
    %1990 = vmatpush1.bf16.msra.mxu0 0
    %1991 = vmatprep.subr.bf16.mxu0 0
    %1992 = vmatpush1.bf16.msra.mxu0 0
    %1993 = vmatprep.subr.bf16.mxu0 0
    %1994 = vmatpush1.bf16.msra.mxu0 0
    %1995 = vmatprep.subr.bf16.mxu0 0
    %1996 = vmatpush1.bf16.msra.mxu0 0
    %1997 = vmatprep.subr.bf16.mxu0 0
    %1998 = vmatpush1.bf16.msra.mxu0 0
    %1999 = vmatprep.subr.bf16.mxu0 0
    %2000 = vmatpush1.bf16.msra.mxu0 0
    %2001 = vmatprep.mubr.bf16.mxu0 0
    %2002 = vmatmul.mubr.bf16.gmra.mrb[0].mxu0 %v1964
    %v2003 = vpop.f32.mrb[0].mxu0
    %v2004 = vadd.f32 %v1957, %v2003
    %v2005 = vpop.f32.mrb[0].mxu0
    %v2006 = vpop.f32.mrb[0].mxu0
    %v2007 = vadd.f32 %v1960, %v2006
    %v2008 = vpop.f32.mrb[0].mxu0
    %2009 = vdwg.mxu0
    %2010 = vrot.lane.b32.xlu0 %v1470, 112
    %v2011 = vpop.permute.xlu0 %2010
    %2012 = vrot.lane.b32.xlu0 %v1472, 112
    %v2013 = vpop.permute.xlu0 %2012
    %v2015 = vsel %vm194, %v2011, 0
    %v2018 = vsel %vm194, %v2013, 0
    %2020 = vmatprep.subr.bf16.mxu0 0
    %2021 = vmatpush1.bf16.xpose.msra.mxu0 %v2018
    %2022 = vmatprep.subr.bf16.mxu0 0
    %2023 = vmatpush1.bf16.xpose.msra.mxu0 0
    %2024 = vmatprep.subr.bf16.mxu0 0
    %2025 = vmatpush1.bf16.xpose.msra.mxu0 0
    %2026 = vmatprep.subr.bf16.mxu0 0
    %2027 = vmatpush1.bf16.xpose.msra.mxu0 0
    %2028 = vmatprep.subr.bf16.mxu0 0
    %2029 = vmatpush1.bf16.xpose.msra.mxu0 0
    %2030 = vmatprep.subr.bf16.mxu0 0
    %2031 = vmatpush1.bf16.xpose.msra.mxu0 0
    %2032 = vmatprep.subr.bf16.mxu0 0
    %2033 = vmatpush1.bf16.xpose.msra.mxu0 0
    %2034 = vmatprep.subr.bf16.mxu0 0
    %2035 = vmatpush1.bf16.xpose.msra.mxu0 0
    %2036 = vmatprep.subr.bf16.mxu0 0
    %2037 = vmatpush1.bf16.xpose.msra.mxu0 0
    %2038 = vmatprep.subr.bf16.mxu0 0
    %2039 = vmatpush1.bf16.xpose.msra.mxu0 0
    %2040 = vmatprep.subr.bf16.mxu0 0
    %2041 = vmatpush1.bf16.xpose.msra.mxu0 0
    %2042 = vmatprep.subr.bf16.mxu0 0
    %2043 = vmatpush1.bf16.xpose.msra.mxu0 0
    %2044 = vmatprep.subr.bf16.mxu0 0
    %2045 = vmatpush1.bf16.xpose.msra.mxu0 0
    %2046 = vmatprep.subr.bf16.mxu0 0
    %2047 = vmatpush1.bf16.xpose.msra.mxu0 0
    %2048 = vmatprep.subr.bf16.mxu0 0
    %2049 = vmatpush1.bf16.xpose.msra.mxu0 0
    %2050 = vmatprep.subr.bf16.mxu0 0
    %2051 = vmatpush1.bf16.xpose.msra.mxu0 0
    %2052 = vmatprep.mubr.bf16.mxu0 0
    %2053 = vmatmul.mubr.bf16.gmra.mrb[0].mxu0 %v2015
    %v2054 = vpop.f32.mrb[0].mxu0
    %v2055 = vadd.f32 0.0, %v2054
    %v2056 = vpop.f32.mrb[0].mxu0
    %v2057 = vpop.f32.mrb[0].mxu0
    %v2058 = vpop.f32.mrb[0].mxu0
    %2059 = vdwg.mxu0
    %2060 = vrot.lane.b32.xlu0 %v1471, 112
    %v2061 = vpop.permute.xlu0 %2060
    %2062 = vrot.lane.b32.xlu0 %v1473, 112
    %v2063 = vpop.permute.xlu0 %2062
    %v2065 = vsel %vm194, %v2061, 0
    %v2068 = vsel %vm194, %v2063, 0
    %2070 = vmatprep.subr.bf16.mxu0 0
    %2071 = vmatpush1.bf16.xpose.msra.mxu0 %v2068
    %2072 = vmatprep.subr.bf16.mxu0 0
    %2073 = vmatpush1.bf16.xpose.msra.mxu0 0
    %2074 = vmatprep.subr.bf16.mxu0 0
    %2075 = vmatpush1.bf16.xpose.msra.mxu0 0
    %2076 = vmatprep.subr.bf16.mxu0 0
    %2077 = vmatpush1.bf16.xpose.msra.mxu0 0
    %2078 = vmatprep.subr.bf16.mxu0 0
    %2079 = vmatpush1.bf16.xpose.msra.mxu0 0
    %2080 = vmatprep.subr.bf16.mxu0 0
    %2081 = vmatpush1.bf16.xpose.msra.mxu0 0
    %2082 = vmatprep.subr.bf16.mxu0 0
    %2083 = vmatpush1.bf16.xpose.msra.mxu0 0
    %2084 = vmatprep.subr.bf16.mxu0 0
    %2085 = vmatpush1.bf16.xpose.msra.mxu0 0
    %2086 = vmatprep.subr.bf16.mxu0 0
    %2087 = vmatpush1.bf16.xpose.msra.mxu0 0
    %2088 = vmatprep.subr.bf16.mxu0 0
    %2089 = vmatpush1.bf16.xpose.msra.mxu0 0
    %2090 = vmatprep.subr.bf16.mxu0 0
    %2091 = vmatpush1.bf16.xpose.msra.mxu0 0
    %2092 = vmatprep.subr.bf16.mxu0 0
    %2093 = vmatpush1.bf16.xpose.msra.mxu0 0
    %2094 = vmatprep.subr.bf16.mxu0 0
    %2095 = vmatpush1.bf16.xpose.msra.mxu0 0
    %2096 = vmatprep.subr.bf16.mxu0 0
    %2097 = vmatpush1.bf16.xpose.msra.mxu0 0
    %2098 = vmatprep.subr.bf16.mxu0 0
    %2099 = vmatpush1.bf16.xpose.msra.mxu0 0
    %2100 = vmatprep.subr.bf16.mxu0 0
    %2101 = vmatpush1.bf16.xpose.msra.mxu0 0
    %2102 = vmatprep.mubr.bf16.mxu0 0
    %2103 = vmatmul.mubr.bf16.gmra.mrb[0].mxu0 %v2065
    %v2104 = vpop.f32.mrb[0].mxu0
    %v2105 = vadd.f32 0.0, %v2104
    %v2106 = vpop.f32.mrb[0].mxu0
    %v2107 = vpop.f32.mrb[0].mxu0
    %v2108 = vpop.f32.mrb[0].mxu0
    %2109 = vdwg.mxu0
    %v2110 = vsel %vm1464, %v2055, -1000000.0
    %v2111 = vsel %vm1465, %v2105, -1000000.0
    %v2112 = vsel %vm194, %v2110, -inf
    %2113 = vmax.xlane.f32.xlu0 %v2112
    %v2114 = vpop.xlane.xlu0 %2113
    %v2115 = vsel %vm194, %v2111, -inf
    %2116 = vmax.xlane.f32.xlu0 %v2115
    %v2117 = vpop.xlane.xlu0 %2116
    %v2118 = vsub.f32 %v2110, %v2114
    %v2119 = vsub.f32 %v2111, %v2117
    %v2120 = vmul.f32 %v2118, 1.442695
    %v2121 = vpow.pop %v2120
    %v2122 = vmul.f32 %v2119, 1.442695
    %v2123 = vpow.pop %v2122
    %v2124 = vsel %vm194, %v2121, 0.0
    %2125 = vadd.xlane.f32.xlu0 %v2124
    %v2126 = vpop.xlane.xlu0 %2125
    %v2127 = vsel %vm194, %v2123, 0.0
    %2128 = vadd.xlane.f32.xlu0 %v2127
    %v2129 = vpop.xlane.xlu0 %2128
    %v2130 = vrcp.pop %v2126
    %v2131 = vrcp.pop %v2129
    %v2132 = vmul.f32 %v2121, %v2130
    %v2133 = vmul.f32 %v2123, %v2131
    %v2134 = vpack.c.bf16 %v2132, %v2132
    %v2135 = vpack.c.bf16 %v2133, %v2133
    %2136 = vrot.lane.b32.xlu0 %v1472, 80
    %v2137 = vpop.permute.xlu0 %2136
    %v2139 = vsel %vm194, %v2134, 0
    %v2142 = vsel %vm323, %v2137, 0
    %2144 = vmatprep.subr.bf16.mxu0 0
    %2145 = vmatpush1.bf16.msra.mxu0 %v2142
    %2146 = vmatprep.subr.bf16.mxu0 0
    %2147 = vmatpush1.bf16.msra.mxu0 0
    %2148 = vmatprep.subr.bf16.mxu0 0
    %2149 = vmatpush1.bf16.msra.mxu0 0
    %2150 = vmatprep.subr.bf16.mxu0 0
    %2151 = vmatpush1.bf16.msra.mxu0 0
    %2152 = vmatprep.subr.bf16.mxu0 0
    %2153 = vmatpush1.bf16.msra.mxu0 0
    %2154 = vmatprep.subr.bf16.mxu0 0
    %2155 = vmatpush1.bf16.msra.mxu0 0
    %2156 = vmatprep.subr.bf16.mxu0 0
    %2157 = vmatpush1.bf16.msra.mxu0 0
    %2158 = vmatprep.subr.bf16.mxu0 0
    %2159 = vmatpush1.bf16.msra.mxu0 0
    %2160 = vmatprep.subr.bf16.mxu0 0
    %2161 = vmatpush1.bf16.msra.mxu0 0
    %2162 = vmatprep.subr.bf16.mxu0 0
    %2163 = vmatpush1.bf16.msra.mxu0 0
    %2164 = vmatprep.subr.bf16.mxu0 0
    %2165 = vmatpush1.bf16.msra.mxu0 0
    %2166 = vmatprep.subr.bf16.mxu0 0
    %2167 = vmatpush1.bf16.msra.mxu0 0
    %2168 = vmatprep.subr.bf16.mxu0 0
    %2169 = vmatpush1.bf16.msra.mxu0 0
    %2170 = vmatprep.subr.bf16.mxu0 0
    %2171 = vmatpush1.bf16.msra.mxu0 0
    %2172 = vmatprep.subr.bf16.mxu0 0
    %2173 = vmatpush1.bf16.msra.mxu0 0
    %2174 = vmatprep.subr.bf16.mxu0 0
    %2175 = vmatpush1.bf16.msra.mxu0 0
    %2176 = vmatprep.mubr.bf16.mxu0 0
    %2177 = vmatmul.mubr.bf16.gmra.mrb[0].mxu0 %v2139
    %v2178 = vpop.f32.mrb[0].mxu0
    %v2179 = vadd.f32 0.0, %v2178
    %v2180 = vpop.f32.mrb[0].mxu0
    %v2181 = vpop.f32.mrb[0].mxu0
    %v2182 = vpop.f32.mrb[0].mxu0
    %2183 = vdwg.mxu0
    %2184 = vrot.lane.b32.xlu0 %v1473, 80
    %v2185 = vpop.permute.xlu0 %2184
    %v2187 = vsel %vm194, %v2135, 0
    %v2190 = vsel %vm323, %v2185, 0
    %2192 = vmatprep.subr.bf16.mxu0 0
    %2193 = vmatpush1.bf16.msra.mxu0 %v2190
    %2194 = vmatprep.subr.bf16.mxu0 0
    %2195 = vmatpush1.bf16.msra.mxu0 0
    %2196 = vmatprep.subr.bf16.mxu0 0
    %2197 = vmatpush1.bf16.msra.mxu0 0
    %2198 = vmatprep.subr.bf16.mxu0 0
    %2199 = vmatpush1.bf16.msra.mxu0 0
    %2200 = vmatprep.subr.bf16.mxu0 0
    %2201 = vmatpush1.bf16.msra.mxu0 0
    %2202 = vmatprep.subr.bf16.mxu0 0
    %2203 = vmatpush1.bf16.msra.mxu0 0
    %2204 = vmatprep.subr.bf16.mxu0 0
    %2205 = vmatpush1.bf16.msra.mxu0 0
    %2206 = vmatprep.subr.bf16.mxu0 0
    %2207 = vmatpush1.bf16.msra.mxu0 0
    %2208 = vmatprep.subr.bf16.mxu0 0
    %2209 = vmatpush1.bf16.msra.mxu0 0
    %2210 = vmatprep.subr.bf16.mxu0 0
    %2211 = vmatpush1.bf16.msra.mxu0 0
    %2212 = vmatprep.subr.bf16.mxu0 0
    %2213 = vmatpush1.bf16.msra.mxu0 0
    %2214 = vmatprep.subr.bf16.mxu0 0
    %2215 = vmatpush1.bf16.msra.mxu0 0
    %2216 = vmatprep.subr.bf16.mxu0 0
    %2217 = vmatpush1.bf16.msra.mxu0 0
    %2218 = vmatprep.subr.bf16.mxu0 0
    %2219 = vmatpush1.bf16.msra.mxu0 0
    %2220 = vmatprep.subr.bf16.mxu0 0
    %2221 = vmatpush1.bf16.msra.mxu0 0
    %2222 = vmatprep.subr.bf16.mxu0 0
    %2223 = vmatpush1.bf16.msra.mxu0 0
    %2224 = vmatprep.mubr.bf16.mxu0 0
    %2225 = vmatmul.mubr.bf16.gmra.mrb[0].mxu0 %v2187
    %v2226 = vpop.f32.mrb[0].mxu0
    %v2227 = vadd.f32 0.0, %v2226
    %v2228 = vpop.f32.mrb[0].mxu0
    %v2229 = vpop.f32.mrb[0].mxu0
    %v2230 = vpop.f32.mrb[0].mxu0
    %2231 = vdwg.mxu0
    %v2232 = vpack.c.bf16 %v2227, %v2179
    %v2234 = vsel %vm194, %v2232, 0
    %v2237 = vsel %vm323, %v1468, 0
    %2239 = vmatprep.subr.bf16.mxu0 0
    %2240 = vmatpush1.bf16.msra.mxu0 %v2237
    %2241 = vmatprep.subr.bf16.mxu0 0
    %2242 = vmatpush1.bf16.msra.mxu0 0
    %2243 = vmatprep.subr.bf16.mxu0 0
    %2244 = vmatpush1.bf16.msra.mxu0 0
    %2245 = vmatprep.subr.bf16.mxu0 0
    %2246 = vmatpush1.bf16.msra.mxu0 0
    %2247 = vmatprep.subr.bf16.mxu0 0
    %2248 = vmatpush1.bf16.msra.mxu0 0
    %2249 = vmatprep.subr.bf16.mxu0 0
    %2250 = vmatpush1.bf16.msra.mxu0 0
    %2251 = vmatprep.subr.bf16.mxu0 0
    %2252 = vmatpush1.bf16.msra.mxu0 0
    %2253 = vmatprep.subr.bf16.mxu0 0
    %2254 = vmatpush1.bf16.msra.mxu0 0
    %2255 = vmatprep.subr.bf16.mxu0 0
    %2256 = vmatpush1.bf16.msra.mxu0 0
    %2257 = vmatprep.subr.bf16.mxu0 0
    %2258 = vmatpush1.bf16.msra.mxu0 0
    %2259 = vmatprep.subr.bf16.mxu0 0
    %2260 = vmatpush1.bf16.msra.mxu0 0
    %2261 = vmatprep.subr.bf16.mxu0 0
    %2262 = vmatpush1.bf16.msra.mxu0 0
    %2263 = vmatprep.subr.bf16.mxu0 0
    %2264 = vmatpush1.bf16.msra.mxu0 0
    %2265 = vmatprep.subr.bf16.mxu0 0
    %2266 = vmatpush1.bf16.msra.mxu0 0
    %2267 = vmatprep.subr.bf16.mxu0 0
    %2268 = vmatpush1.bf16.msra.mxu0 0
    %2269 = vmatprep.subr.bf16.mxu0 0
    %2270 = vmatpush1.bf16.msra.mxu0 0
    %2271 = vmatprep.mubr.bf16.mxu0 0
    %2272 = vmatmul.mubr.bf16.gmra.mrb[0].mxu0 %v2234
    %v2273 = vpop.f32.mrb[0].mxu0
    %v2274 = vadd.f32 0.0, %v2273
    %v2275 = vpop.f32.mrb[0].mxu0
    %v2276 = vpop.f32.mrb[0].mxu0
    %v2277 = vadd.f32 0.0, %v2276
    %v2278 = vpop.f32.mrb[0].mxu0
    %2279 = vdwg.mxu0
    %v2280 = vadd.f32 %v2004, %v2274
    %v2281 = vadd.f32 %v2007, %v2277
    %2282 = vrot.lane.b32.xlu0 %v1470, 104
    %v2283 = vpop.permute.xlu0 %2282
    %2284 = vrot.lane.b32.xlu0 %v1472, 104
    %v2285 = vpop.permute.xlu0 %2284
    %v2287 = vsel %vm194, %v2283, 0
    %v2290 = vsel %vm194, %v2285, 0
    %2292 = vmatprep.subr.bf16.mxu0 0
    %2293 = vmatpush1.bf16.xpose.msra.mxu0 %v2290
    %2294 = vmatprep.subr.bf16.mxu0 0
    %2295 = vmatpush1.bf16.xpose.msra.mxu0 0
    %2296 = vmatprep.subr.bf16.mxu0 0
    %2297 = vmatpush1.bf16.xpose.msra.mxu0 0
    %2298 = vmatprep.subr.bf16.mxu0 0
    %2299 = vmatpush1.bf16.xpose.msra.mxu0 0
    %2300 = vmatprep.subr.bf16.mxu0 0
    %2301 = vmatpush1.bf16.xpose.msra.mxu0 0
    %2302 = vmatprep.subr.bf16.mxu0 0
    %2303 = vmatpush1.bf16.xpose.msra.mxu0 0
    %2304 = vmatprep.subr.bf16.mxu0 0
    %2305 = vmatpush1.bf16.xpose.msra.mxu0 0
    %2306 = vmatprep.subr.bf16.mxu0 0
    %2307 = vmatpush1.bf16.xpose.msra.mxu0 0
    %2308 = vmatprep.subr.bf16.mxu0 0
    %2309 = vmatpush1.bf16.xpose.msra.mxu0 0
    %2310 = vmatprep.subr.bf16.mxu0 0
    %2311 = vmatpush1.bf16.xpose.msra.mxu0 0
    %2312 = vmatprep.subr.bf16.mxu0 0
    %2313 = vmatpush1.bf16.xpose.msra.mxu0 0
    %2314 = vmatprep.subr.bf16.mxu0 0
    %2315 = vmatpush1.bf16.xpose.msra.mxu0 0
    %2316 = vmatprep.subr.bf16.mxu0 0
    %2317 = vmatpush1.bf16.xpose.msra.mxu0 0
    %2318 = vmatprep.subr.bf16.mxu0 0
    %2319 = vmatpush1.bf16.xpose.msra.mxu0 0
    %2320 = vmatprep.subr.bf16.mxu0 0
    %2321 = vmatpush1.bf16.xpose.msra.mxu0 0
    %2322 = vmatprep.subr.bf16.mxu0 0
    %2323 = vmatpush1.bf16.xpose.msra.mxu0 0
    %2324 = vmatprep.mubr.bf16.mxu0 0
    %2325 = vmatmul.mubr.bf16.gmra.mrb[0].mxu0 %v2287
    %v2326 = vpop.f32.mrb[0].mxu0
    %v2327 = vadd.f32 0.0, %v2326
    %v2328 = vpop.f32.mrb[0].mxu0
    %v2329 = vpop.f32.mrb[0].mxu0
    %v2330 = vpop.f32.mrb[0].mxu0
    %2331 = vdwg.mxu0
    %2332 = vrot.lane.b32.xlu0 %v1471, 104
    %v2333 = vpop.permute.xlu0 %2332
    %2334 = vrot.lane.b32.xlu0 %v1473, 104
    %v2335 = vpop.permute.xlu0 %2334
    %v2337 = vsel %vm194, %v2333, 0
    %v2340 = vsel %vm194, %v2335, 0
    %2342 = vmatprep.subr.bf16.mxu0 0
    %2343 = vmatpush1.bf16.xpose.msra.mxu0 %v2340
    %2344 = vmatprep.subr.bf16.mxu0 0
    %2345 = vmatpush1.bf16.xpose.msra.mxu0 0
    %2346 = vmatprep.subr.bf16.mxu0 0
    %2347 = vmatpush1.bf16.xpose.msra.mxu0 0
    %2348 = vmatprep.subr.bf16.mxu0 0
    %2349 = vmatpush1.bf16.xpose.msra.mxu0 0
    %2350 = vmatprep.subr.bf16.mxu0 0
    %2351 = vmatpush1.bf16.xpose.msra.mxu0 0
    %2352 = vmatprep.subr.bf16.mxu0 0
    %2353 = vmatpush1.bf16.xpose.msra.mxu0 0
    %2354 = vmatprep.subr.bf16.mxu0 0
    %2355 = vmatpush1.bf16.xpose.msra.mxu0 0
    %2356 = vmatprep.subr.bf16.mxu0 0
    %2357 = vmatpush1.bf16.xpose.msra.mxu0 0
    %2358 = vmatprep.subr.bf16.mxu0 0
    %2359 = vmatpush1.bf16.xpose.msra.mxu0 0
    %2360 = vmatprep.subr.bf16.mxu0 0
    %2361 = vmatpush1.bf16.xpose.msra.mxu0 0
    %2362 = vmatprep.subr.bf16.mxu0 0
    %2363 = vmatpush1.bf16.xpose.msra.mxu0 0
    %2364 = vmatprep.subr.bf16.mxu0 0
    %2365 = vmatpush1.bf16.xpose.msra.mxu0 0
    %2366 = vmatprep.subr.bf16.mxu0 0
    %2367 = vmatpush1.bf16.xpose.msra.mxu0 0
    %2368 = vmatprep.subr.bf16.mxu0 0
    %2369 = vmatpush1.bf16.xpose.msra.mxu0 0
    %2370 = vmatprep.subr.bf16.mxu0 0
    %2371 = vmatpush1.bf16.xpose.msra.mxu0 0
    %2372 = vmatprep.subr.bf16.mxu0 0
    %2373 = vmatpush1.bf16.xpose.msra.mxu0 0
    %2374 = vmatprep.mubr.bf16.mxu0 0
    %2375 = vmatmul.mubr.bf16.gmra.mrb[0].mxu0 %v2337
    %v2376 = vpop.f32.mrb[0].mxu0
    %v2377 = vadd.f32 0.0, %v2376
    %v2378 = vpop.f32.mrb[0].mxu0
    %v2379 = vpop.f32.mrb[0].mxu0
    %v2380 = vpop.f32.mrb[0].mxu0
    %2381 = vdwg.mxu0
    %v2382 = vsel %vm1464, %v2327, -1000000.0
    %v2383 = vsel %vm1465, %v2377, -1000000.0
    %v2384 = vsel %vm194, %v2382, -inf
    %2385 = vmax.xlane.f32.xlu0 %v2384
    %v2386 = vpop.xlane.xlu0 %2385
    %v2387 = vsel %vm194, %v2383, -inf
    %2388 = vmax.xlane.f32.xlu0 %v2387
    %v2389 = vpop.xlane.xlu0 %2388
    %v2390 = vsub.f32 %v2382, %v2386
    %v2391 = vsub.f32 %v2383, %v2389
    %v2392 = vmul.f32 %v2390, 1.442695
    %v2393 = vpow.pop %v2392
    %v2394 = vmul.f32 %v2391, 1.442695
    %v2395 = vpow.pop %v2394
    %v2396 = vsel %vm194, %v2393, 0.0
    %2397 = vadd.xlane.f32.xlu0 %v2396
    %v2398 = vpop.xlane.xlu0 %2397
    %v2399 = vsel %vm194, %v2395, 0.0
    %2400 = vadd.xlane.f32.xlu0 %v2399
    %v2401 = vpop.xlane.xlu0 %2400
    %v2402 = vrcp.pop %v2398
    %v2403 = vrcp.pop %v2401
    %v2404 = vmul.f32 %v2393, %v2402
    %v2405 = vmul.f32 %v2395, %v2403
    %v2406 = vpack.c.bf16 %v2404, %v2404
    %v2407 = vpack.c.bf16 %v2405, %v2405
    %2408 = vrot.lane.b32.xlu0 %v1472, 72
    %v2409 = vpop.permute.xlu0 %2408
    %v2411 = vsel %vm194, %v2406, 0
    %v2414 = vsel %vm323, %v2409, 0
    %2416 = vmatprep.subr.bf16.mxu0 0
    %2417 = vmatpush1.bf16.msra.mxu0 %v2414
    %2418 = vmatprep.subr.bf16.mxu0 0
    %2419 = vmatpush1.bf16.msra.mxu0 0
    %2420 = vmatprep.subr.bf16.mxu0 0
    %2421 = vmatpush1.bf16.msra.mxu0 0
    %2422 = vmatprep.subr.bf16.mxu0 0
    %2423 = vmatpush1.bf16.msra.mxu0 0
    %2424 = vmatprep.subr.bf16.mxu0 0
    %2425 = vmatpush1.bf16.msra.mxu0 0
    %2426 = vmatprep.subr.bf16.mxu0 0
    %2427 = vmatpush1.bf16.msra.mxu0 0
    %2428 = vmatprep.subr.bf16.mxu0 0
    %2429 = vmatpush1.bf16.msra.mxu0 0
    %2430 = vmatprep.subr.bf16.mxu0 0
    %2431 = vmatpush1.bf16.msra.mxu0 0
    %2432 = vmatprep.subr.bf16.mxu0 0
    %2433 = vmatpush1.bf16.msra.mxu0 0
    %2434 = vmatprep.subr.bf16.mxu0 0
    %2435 = vmatpush1.bf16.msra.mxu0 0
    %2436 = vmatprep.subr.bf16.mxu0 0
    %2437 = vmatpush1.bf16.msra.mxu0 0
    %2438 = vmatprep.subr.bf16.mxu0 0
    %2439 = vmatpush1.bf16.msra.mxu0 0
    %2440 = vmatprep.subr.bf16.mxu0 0
    %2441 = vmatpush1.bf16.msra.mxu0 0
    %2442 = vmatprep.subr.bf16.mxu0 0
    %2443 = vmatpush1.bf16.msra.mxu0 0
    %2444 = vmatprep.subr.bf16.mxu0 0
    %2445 = vmatpush1.bf16.msra.mxu0 0
    %2446 = vmatprep.subr.bf16.mxu0 0
    %2447 = vmatpush1.bf16.msra.mxu0 0
    %2448 = vmatprep.mubr.bf16.mxu0 0
    %2449 = vmatmul.mubr.bf16.gmra.mrb[0].mxu0 %v2411
    %v2450 = vpop.f32.mrb[0].mxu0
    %v2451 = vadd.f32 0.0, %v2450
    %v2452 = vpop.f32.mrb[0].mxu0
    %v2453 = vpop.f32.mrb[0].mxu0
    %v2454 = vpop.f32.mrb[0].mxu0
    %2455 = vdwg.mxu0
    %2456 = vrot.lane.b32.xlu0 %v1473, 72
    %v2457 = vpop.permute.xlu0 %2456
    %v2459 = vsel %vm194, %v2407, 0
    %v2462 = vsel %vm323, %v2457, 0
    %2464 = vmatprep.subr.bf16.mxu0 0
    %2465 = vmatpush1.bf16.msra.mxu0 %v2462
    %2466 = vmatprep.subr.bf16.mxu0 0
    %2467 = vmatpush1.bf16.msra.mxu0 0
    %2468 = vmatprep.subr.bf16.mxu0 0
    %2469 = vmatpush1.bf16.msra.mxu0 0
    %2470 = vmatprep.subr.bf16.mxu0 0
    %2471 = vmatpush1.bf16.msra.mxu0 0
    %2472 = vmatprep.subr.bf16.mxu0 0
    %2473 = vmatpush1.bf16.msra.mxu0 0
    %2474 = vmatprep.subr.bf16.mxu0 0
    %2475 = vmatpush1.bf16.msra.mxu0 0
    %2476 = vmatprep.subr.bf16.mxu0 0
    %2477 = vmatpush1.bf16.msra.mxu0 0
    %2478 = vmatprep.subr.bf16.mxu0 0
    %2479 = vmatpush1.bf16.msra.mxu0 0
    %2480 = vmatprep.subr.bf16.mxu0 0
    %2481 = vmatpush1.bf16.msra.mxu0 0
    %2482 = vmatprep.subr.bf16.mxu0 0
    %2483 = vmatpush1.bf16.msra.mxu0 0
    %2484 = vmatprep.subr.bf16.mxu0 0
    %2485 = vmatpush1.bf16.msra.mxu0 0
    %2486 = vmatprep.subr.bf16.mxu0 0
    %2487 = vmatpush1.bf16.msra.mxu0 0
    %2488 = vmatprep.subr.bf16.mxu0 0
    %2489 = vmatpush1.bf16.msra.mxu0 0
    %2490 = vmatprep.subr.bf16.mxu0 0
    %2491 = vmatpush1.bf16.msra.mxu0 0
    %2492 = vmatprep.subr.bf16.mxu0 0
    %2493 = vmatpush1.bf16.msra.mxu0 0
    %2494 = vmatprep.subr.bf16.mxu0 0
    %2495 = vmatpush1.bf16.msra.mxu0 0
    %2496 = vmatprep.mubr.bf16.mxu0 0
    %2497 = vmatmul.mubr.bf16.gmra.mrb[0].mxu0 %v2459
    %v2498 = vpop.f32.mrb[0].mxu0
    %v2499 = vadd.f32 0.0, %v2498
    %v2500 = vpop.f32.mrb[0].mxu0
    %v2501 = vpop.f32.mrb[0].mxu0
    %v2502 = vpop.f32.mrb[0].mxu0
    %2503 = vdwg.mxu0
    %v2504 = vpack.c.bf16 %v2499, %v2451
    %v2506 = vsel %vm194, %v2504, 0
    %v2509 = vsel %vm323, %v1469, 0
    %2511 = vmatprep.subr.bf16.mxu0 0
    %2512 = vmatpush1.bf16.msra.mxu0 %v2509
    %2513 = vmatprep.subr.bf16.mxu0 0
    %2514 = vmatpush1.bf16.msra.mxu0 0
    %2515 = vmatprep.subr.bf16.mxu0 0
    %2516 = vmatpush1.bf16.msra.mxu0 0
    %2517 = vmatprep.subr.bf16.mxu0 0
    %2518 = vmatpush1.bf16.msra.mxu0 0
    %2519 = vmatprep.subr.bf16.mxu0 0
    %2520 = vmatpush1.bf16.msra.mxu0 0
    %2521 = vmatprep.subr.bf16.mxu0 0
    %2522 = vmatpush1.bf16.msra.mxu0 0
    %2523 = vmatprep.subr.bf16.mxu0 0
    %2524 = vmatpush1.bf16.msra.mxu0 0
    %2525 = vmatprep.subr.bf16.mxu0 0
    %2526 = vmatpush1.bf16.msra.mxu0 0
    %2527 = vmatprep.subr.bf16.mxu0 0
    %2528 = vmatpush1.bf16.msra.mxu0 0
    %2529 = vmatprep.subr.bf16.mxu0 0
    %2530 = vmatpush1.bf16.msra.mxu0 0
    %2531 = vmatprep.subr.bf16.mxu0 0
    %2532 = vmatpush1.bf16.msra.mxu0 0
    %2533 = vmatprep.subr.bf16.mxu0 0
    %2534 = vmatpush1.bf16.msra.mxu0 0
    %2535 = vmatprep.subr.bf16.mxu0 0
    %2536 = vmatpush1.bf16.msra.mxu0 0
    %2537 = vmatprep.subr.bf16.mxu0 0
    %2538 = vmatpush1.bf16.msra.mxu0 0
    %2539 = vmatprep.subr.bf16.mxu0 0
    %2540 = vmatpush1.bf16.msra.mxu0 0
    %2541 = vmatprep.subr.bf16.mxu0 0
    %2542 = vmatpush1.bf16.msra.mxu0 0
    %2543 = vmatprep.mubr.bf16.mxu0 0
    %2544 = vmatmul.mubr.bf16.gmra.mrb[0].mxu0 %v2506
    %v2545 = vpop.f32.mrb[0].mxu0
    %v2546 = vadd.f32 0.0, %v2545
    %v2547 = vpop.f32.mrb[0].mxu0
    %v2548 = vpop.f32.mrb[0].mxu0
    %v2549 = vadd.f32 0.0, %v2548
    %v2550 = vpop.f32.mrb[0].mxu0
    %2551 = vdwg.mxu0
    %v2552 = vadd.f32 %v2280, %v2546
    %v2553 = vadd.f32 %v2281, %v2549
    %v2554 = vadd.f32 %v2552, %v1322
    %v2555 = vadd.f32 %v2553, %v1323
    %v2556 = vld [vmem:[%s10] sm:$0x1]
    %v2557 = vld [vmem:[%s11] sm:$0x1]
    %v2558 = vsel %vm135, %v2554, 0.0
    %2559 = vadd.xlane.f32.xlu0 %v2558
    %v2560 = vpop.xlane.xlu0 %2559
    %v2561 = vsel %vm135, %v2555, 0.0
    %2562 = vadd.xlane.f32.xlu0 %v2561
    %v2563 = vpop.xlane.xlu0 %2562
    %v2564 = vmul.f32 %v2560, %v1287
    %v2565 = vmul.f32 %v2563, %v1287
    %v2566 = vsub.f32 %v2554, %v2564
    %v2567 = vsub.f32 %v2555, %v2565
    %v2568 = vmul.f32 %v2566, %v2566
    %v2569 = vmul.f32 %v2567, %v2567
    %v2570 = vsel %vm135, %v2568, 0.0
    %2571 = vadd.xlane.f32.xlu0 %v2570
    %v2572 = vpop.xlane.xlu0 %2571
    %v2573 = vsel %vm135, %v2569, 0.0
    %2574 = vadd.xlane.f32.xlu0 %v2573
    %v2575 = vpop.xlane.xlu0 %2574
    %v2576 = vmul.f32 %v2572, %v1287
    %v2577 = vmul.f32 %v2575, %v1287
    %v2578 = vadd.f32 %v2576, 1e-05
    %v2579 = vadd.f32 %v2577, 1e-05
    %v2580 = vrsqrt.pop %v2578
    %v2581 = vrsqrt.pop %v2579
    %v2582 = vmul.f32 %v2566, %v2580
    %v2583 = vmul.f32 %v2567, %v2581
    %v2585 = vlaneseq
    %v2586 = vshrl.u32 %v2585, 7
    %v2587 = vsub.s32 0, %v2586
    %v2588 = vrot.slane %v2556, %v2587
    %v2590 = vmul.f32 %v2582, %v2588
    %v2591 = vmul.f32 %v2583, %v2588
    %v2593 = vlaneseq
    %v2594 = vshrl.u32 %v2593, 7
    %v2595 = vsub.s32 0, %v2594
    %v2596 = vrot.slane %v2557, %v2595
    %v2598 = vadd.f32 %v2590, %v2596
    %v2599 = vadd.f32 %v2591, %v2596
    %v2600 = vpack.c.bf16 %v2599, %v2598
    %v2601 = vld [vmem:[%s14] sm:$0xf]
    %v2602 = vld [vmem:[%s14 + $0x4] sm:$0xf]
    %v2603 = vld [vmem:[%s14 + $0x8] sm:$0xf]
    %v2604 = vld [vmem:[%s14 + $0xc] sm:$0xf]
    %v2605 = vld [vmem:[%s15] sm:$0x1]
    %v2607 = vlaneseq
    %v2608 = vshrl.u32 %v2607, 7
    %v2609 = vsub.s32 0, %v2608
    %v2610 = vrot.slane %v2605, %v2609
    %v2616 = vunpack.c.l.b16 %v2601
    %v2617 = vunpack.c.l.b16 %v2602
    %v2618 = vunpack.c.l.b16 %v2603
    %v2619 = vunpack.c.l.b16 %v2604
    %v2620 = vpack.c.b16 %v2617, %v2616
    %v2621 = vpack.c.b16 %v2619, %v2618
    %v2625 = vsel %vm135, %v2600, 0
    %2627 = vmatprep.subr.bf16.mxu0 0
    %2628 = vmatpush1.bf16.msra.mxu0 %v2620
    %2629 = vmatprep.subr.bf16.mxu0 0
    %2630 = vmatpush1.bf16.msra.mxu0 %v2621
    %2631 = vmatprep.subr.bf16.mxu0 0
    %2632 = vmatpush1.bf16.msra.mxu0 0
    %2633 = vmatprep.subr.bf16.mxu0 0
    %2634 = vmatpush1.bf16.msra.mxu0 0
    %2635 = vmatprep.subr.bf16.mxu0 0
    %2636 = vmatpush1.bf16.msra.mxu0 0
    %2637 = vmatprep.subr.bf16.mxu0 0
    %2638 = vmatpush1.bf16.msra.mxu0 0
    %2639 = vmatprep.subr.bf16.mxu0 0
    %2640 = vmatpush1.bf16.msra.mxu0 0
    %2641 = vmatprep.subr.bf16.mxu0 0
    %2642 = vmatpush1.bf16.msra.mxu0 0
    %2643 = vmatprep.subr.bf16.mxu0 0
    %2644 = vmatpush1.bf16.msra.mxu0 0
    %2645 = vmatprep.subr.bf16.mxu0 0
    %2646 = vmatpush1.bf16.msra.mxu0 0
    %2647 = vmatprep.subr.bf16.mxu0 0
    %2648 = vmatpush1.bf16.msra.mxu0 0
    %2649 = vmatprep.subr.bf16.mxu0 0
    %2650 = vmatpush1.bf16.msra.mxu0 0
    %2651 = vmatprep.subr.bf16.mxu0 0
    %2652 = vmatpush1.bf16.msra.mxu0 0
    %2653 = vmatprep.subr.bf16.mxu0 0
    %2654 = vmatpush1.bf16.msra.mxu0 0
    %2655 = vmatprep.subr.bf16.mxu0 0
    %2656 = vmatpush1.bf16.msra.mxu0 0
    %2657 = vmatprep.subr.bf16.mxu0 0
    %2658 = vmatpush1.bf16.msra.mxu0 0
    %2659 = vmatprep.mubr.bf16.mxu0 0
    %2660 = vmatmul.mubr.bf16.gmra.mrb[0].mxu0 %v2625
    %v2661 = vpop.f32.mrb[0].mxu0
    %v2662 = vadd.f32 %v2610, %v2661
    %v2663 = vpop.f32.mrb[0].mxu0
    %v2664 = vpop.f32.mrb[0].mxu0
    %v2665 = vadd.f32 %v2610, %v2664
    %v2666 = vpop.f32.mrb[0].mxu0
    %2667 = vdwg.mxu0
    %v2668 = vmax.f32 %v2662, 0.0
    %v2669 = vmax.f32 %v2665, 0.0
    %v2670 = vpack.c.bf16 %v2669, %v2668
    %v2671 = vld [vmem:[%s16] sm:$0xf]
    %v2672 = vld [vmem:[%s16 + $0x4] sm:$0xf]
    %v2673 = vld [vmem:[%s16 + $0x8] sm:$0xf]
    %v2674 = vld [vmem:[%s16 + $0xc] sm:$0xf]
    %v2675 = vld [vmem:[%s16 + $0x10] sm:$0xf]
    %v2676 = vld [vmem:[%s16 + $0x14] sm:$0xf]
    %v2677 = vld [vmem:[%s16 + $0x18] sm:$0xf]
    %v2678 = vld [vmem:[%s16 + $0x1c] sm:$0xf]
    %v2679 = vld [vmem:[%s17] sm:$0x1]
    %v2681 = vlaneseq
    %v2682 = vshrl.u32 %v2681, 7
    %v2683 = vsub.s32 0, %v2682
    %v2684 = vrot.slane %v2679, %v2683
    %v2694 = vunpack.c.l.b16 %v2671
    %v2695 = vunpack.c.l.b16 %v2672
    %v2696 = vunpack.c.l.b16 %v2673
    %v2697 = vunpack.c.l.b16 %v2674
    %v2698 = vunpack.c.l.b16 %v2675
    %v2699 = vunpack.c.l.b16 %v2676
    %v2700 = vunpack.c.l.b16 %v2677
    %v2701 = vunpack.c.l.b16 %v2678
    %v2702 = vpack.c.b16 %v2695, %v2694
    %v2703 = vpack.c.b16 %v2697, %v2696
    %v2704 = vpack.c.b16 %v2699, %v2698
    %v2705 = vpack.c.b16 %v2701, %v2700
    %vm2710 = vcmask 523264
    %v2712 = vsel %vm2710, %v2670, 0
    %2714 = vmatprep.subr.bf16.mxu0 0
    %2715 = vmatpush1.bf16.msra.mxu0 %v2702
    %2716 = vmatprep.subr.bf16.mxu0 0
    %2717 = vmatpush1.bf16.msra.mxu0 %v2703
    %2718 = vmatprep.subr.bf16.mxu0 0
    %2719 = vmatpush1.bf16.msra.mxu0 %v2704
    %2720 = vmatprep.subr.bf16.mxu0 0
    %2721 = vmatpush1.bf16.msra.mxu0 %v2705
    %2722 = vmatprep.subr.bf16.mxu0 0
    %2723 = vmatpush1.bf16.msra.mxu0 0
    %2724 = vmatprep.subr.bf16.mxu0 0
    %2725 = vmatpush1.bf16.msra.mxu0 0
    %2726 = vmatprep.subr.bf16.mxu0 0
    %2727 = vmatpush1.bf16.msra.mxu0 0
    %2728 = vmatprep.subr.bf16.mxu0 0
    %2729 = vmatpush1.bf16.msra.mxu0 0
    %2730 = vmatprep.subr.bf16.mxu0 0
    %2731 = vmatpush1.bf16.msra.mxu0 0
    %2732 = vmatprep.subr.bf16.mxu0 0
    %2733 = vmatpush1.bf16.msra.mxu0 0
    %2734 = vmatprep.subr.bf16.mxu0 0
    %2735 = vmatpush1.bf16.msra.mxu0 0
    %2736 = vmatprep.subr.bf16.mxu0 0
    %2737 = vmatpush1.bf16.msra.mxu0 0
    %2738 = vmatprep.subr.bf16.mxu0 0
    %2739 = vmatpush1.bf16.msra.mxu0 0
    %2740 = vmatprep.subr.bf16.mxu0 0
    %2741 = vmatpush1.bf16.msra.mxu0 0
    %2742 = vmatprep.subr.bf16.mxu0 0
    %2743 = vmatpush1.bf16.msra.mxu0 0
    %2744 = vmatprep.subr.bf16.mxu0 0
    %2745 = vmatpush1.bf16.msra.mxu0 0
    %2746 = vmatprep.mubr.bf16.mxu0 0
    %2747 = vmatmul.mubr.bf16.gmra.mrb[0].mxu0 %v2712
    %v2748 = vpop.f32.mrb[0].mxu0
    %v2749 = vadd.f32 %v2684, %v2748
    %v2750 = vpop.f32.mrb[0].mxu0
    %v2751 = vpop.f32.mrb[0].mxu0
    %v2752 = vadd.f32 %v2684, %v2751
    %v2753 = vpop.f32.mrb[0].mxu0
    %2754 = vdwg.mxu0
    %v2755 = vadd.f32 %v2749, %v2598
    %v2756 = vadd.f32 %v2752, %v2599
    %v2757 = vld [vmem:[%s12] sm:$0x1]
    %v2758 = vld [vmem:[%s13] sm:$0x1]
    %v2759 = vsel %vm135, %v2755, 0.0
    %2760 = vadd.xlane.f32.xlu0 %v2759
    %v2761 = vpop.xlane.xlu0 %2760
    %v2762 = vsel %vm135, %v2756, 0.0
    %2763 = vadd.xlane.f32.xlu0 %v2762
    %v2764 = vpop.xlane.xlu0 %2763
    %v2765 = vmul.f32 %v2761, %v1287
    %v2766 = vmul.f32 %v2764, %v1287
    %v2767 = vsub.f32 %v2755, %v2765
    %v2768 = vsub.f32 %v2756, %v2766
    %v2769 = vmul.f32 %v2767, %v2767
    %v2770 = vmul.f32 %v2768, %v2768
    %v2771 = vsel %vm135, %v2769, 0.0
    %2772 = vadd.xlane.f32.xlu0 %v2771
    %v2773 = vpop.xlane.xlu0 %2772
    %v2774 = vsel %vm135, %v2770, 0.0
    %2775 = vadd.xlane.f32.xlu0 %v2774
    %v2776 = vpop.xlane.xlu0 %2775
    %v2777 = vmul.f32 %v2773, %v1287
    %v2778 = vmul.f32 %v2776, %v1287
    %v2779 = vadd.f32 %v2777, 1e-05
    %v2780 = vadd.f32 %v2778, 1e-05
    %v2781 = vrsqrt.pop %v2779
    %v2782 = vrsqrt.pop %v2780
    %v2783 = vmul.f32 %v2767, %v2781
    %v2784 = vmul.f32 %v2768, %v2782
    %v2786 = vlaneseq
    %v2787 = vshrl.u32 %v2786, 7
    %v2788 = vsub.s32 0, %v2787
    %v2789 = vrot.slane %v2757, %v2788
    %v2791 = vmul.f32 %v2783, %v2789
    %v2792 = vmul.f32 %v2784, %v2789
    %v2794 = vlaneseq
    %v2795 = vshrl.u32 %v2794, 7
    %v2796 = vsub.s32 0, %v2795
    %v2797 = vrot.slane %v2758, %v2796
    %v2799 = vadd.f32 %v2791, %v2797
    %v2800 = vadd.f32 %v2792, %v2797
    %2801 = vst.msk [vmem:[#allocation10] sm:$0xff] %vm135, %v2799
    %2802 = vst.msk [vmem:[#allocation10 + $0x8] sm:$0xff] %vm135, %v2800
    // Predicated region
    $region90: #{tpu_custom_call.1} parent=1 // pred_check
      _
    $region91: #{tpu_custom_call.1} parent=1 // pred_check_branch
      %2804 = sbr.rel (0) target = $region93
    $region92: #{tpu_custom_call.1} parent=1 // pred_region
      %s2806 = ssub.s32 256, 256
      %2807 = vsyncadd [#allocation4], %s2806
      %s2808 = sshll.u32 [#allocation10], 4
      %s2809 = int_to_ptr.vmem [resolvable:$true] %s2808
      %2814 = dma.vmem_to_hbm [thread:$0]  %s2809, 256, %s18, [#allocation4], 128, 128, 8
    $region93: #{tpu_custom_call.1} parent=1 // pred_fallthru
      _
    // Predicated region
    $region94: #{tpu_custom_call.1} parent=1 // pred_check
      _
    $region95: #{tpu_custom_call.1} parent=1 // pred_check_branch
      %2816 = sbr.rel (0) target = $region97
    $region96: #{tpu_custom_call.1} parent=1 // pred_region
      %2817 = dma.done [#allocation4], 256
    $region97: #{tpu_custom_call.1} parent=1 // pred_fallthru
      _
    %2818 = vsyncpa [#allocation3], 1
    %2819 = vsyncpa [#allocation6], 1
    %2820 = vsyncpa [#allocation9], 1
    %2821 = vsyncpa [#allocation4], 1

</llo_original>
